<compile_context>
chip_gen: v7x
topology: tpu7x:2x2x1
jax: 0.10.0
libtpu: 0.0.40
codegen_flags: <defaults>
</compile_context>

<pallas_src>
import functools

import jax
import jax.numpy as jnp
from jax import lax
from jax.experimental import pallas as pl
from jax.experimental.pallas import tpu as pltpu


# ----------------------------------------------------------------------------
# Fused GRUNet kernel: all GRU layers + MLP head in one pallas_call.
# ----------------------------------------------------------------------------
def grunet_fused_kernel(num_layers, T, B, H, *refs):
    # refs layout:
    #   [x_flat,
    #    (wih_t, whh_t, b_comb, b_hn) * num_layers,
    #    w1, b1, w2, b2, w3, b3,
    #    out,
    #    gi_scratch, seq_scratch]
    idx = 0
    x_ref = refs[idx]; idx += 1
    gru_refs = []
    for _ in range(num_layers):
        gru_refs.append(refs[idx:idx + 4])
        idx += 4
    w1_ref, b1_ref, w2_ref, b2_ref, w3_ref, b3_ref = refs[idx:idx + 6]
    idx += 6
    out_ref = refs[idx]; idx += 1
    gi_scratch, seq_scratch = refs[idx], refs[idx + 1]

    h_last = jnp.zeros((B, H), jnp.float32)
    for layer, (wih_ref, whh_ref, b_ref, bhn_ref) in enumerate(gru_refs):
        is_last = layer == num_layers - 1

        # ---- Hoisted input projection: one big MXU matmul for all timesteps ----
        # (r/z gate biases already include b_hh; n-gate bias is b_ih only).
        layer_in = x_ref[...] if layer == 0 else seq_scratch[...]       # (T*B, in)
        gi_scratch[...] = (
            jnp.dot(layer_in, wih_ref[...], preferred_element_type=jnp.float32)
            + b_ref[...])

        whh = whh_ref[...]   # (H, 3H), resident in vregs/VMEM for the whole loop
        bhn = bhn_ref[...]   # (1, H)

        # ---- Recurrence: only the hidden projection stays on the serial path ----
        def step(t, h, whh=whh, bhn=bhn, is_last=is_last):
            row = t * B
            gi = gi_scratch[pl.ds(row, B), :]                           # (B, 3H)
            gh = jnp.dot(h, whh, preferred_element_type=jnp.float32)    # (B, 3H)
            r = jax.nn.sigmoid(gi[:, :H] + gh[:, :H])
            z = jax.nn.sigmoid(gi[:, H:2 * H] + gh[:, H:2 * H])
            n = jnp.tanh(gi[:, 2 * H:] + r * (gh[:, 2 * H:] + bhn))
            h_new = (1.0 - z) * n + z * h
            if not is_last:
                # Stage the hidden sequence in VMEM for the next layer's hoisted
                # input projection -- never round-trips through HBM.
                seq_scratch[pl.ds(row, B), :] = h_new
            return h_new

        h_last = lax.fori_loop(0, T, step, jnp.zeros((B, H), jnp.float32),
                               unroll=True)

    # ---- Fused MLP head: fc1 -> relu -> fc2 -> relu -> fc3 ----
    y = jnp.dot(h_last, w1_ref[...], preferred_element_type=jnp.float32) + b1_ref[...]
    y = jnp.maximum(y, 0.0)
    y = jnp.dot(y, w2_ref[...], preferred_element_type=jnp.float32) + b2_ref[...]
    y = jnp.maximum(y, 0.0)
    y = jnp.dot(y, w3_ref[...], preferred_element_type=jnp.float32) + b3_ref[...]
    out_ref[...] = y.astype(out_ref.dtype)


# ----------------------------------------------------------------------------
# Host wrapper: layout prep (transpose/flatten, bias pre-sum) + one pallas_call.
# ----------------------------------------------------------------------------
def gru_net_forward(x_btf, params):
    """Forward matching PyTorch GRUNet: GRU (batch_first) -> h[-1] -> MLP head."""
    B, T, F = x_btf.shape
    H = params["gru"][0]["whh_t"].shape[0]
    num_layers = len(params["gru"])
    C = params["fc3_w"].shape[1]

    # Time-major, flattened to (T*B, F): the hoisted input projection is one matmul.
    x_flat = jnp.transpose(x_btf, (1, 0, 2)).reshape(T * B, F)

    inputs = [x_flat]
    for layer in params["gru"]:
        bih, bhh = layer["bih"], layer["bhh"]
        # Pre-sum biases for the r/z gates; n-gate keeps b_hh separate because it
        # sits inside r * (W_hn h + b_hn).
        b_comb = jnp.concatenate(
            [bih[:, :2 * H] + bhh[:, :2 * H], bih[:, 2 * H:]], axis=1)
        b_hn = bhh[:, 2 * H:]
        inputs += [layer["wih_t"], layer["whh_t"], b_comb, b_hn]
    inputs += [params["fc1_w"], params["fc1_b"],
               params["fc2_w"], params["fc2_b"],
               params["fc3_w"], params["fc3_b"]]

    vmem = pl.BlockSpec(memory_space=pltpu.MemorySpace.VMEM)
    kernel = functools.partial(grunet_fused_kernel, num_layers, T, B, H)
    return pl.pallas_call(
        kernel,
        out_shape=jax.ShapeDtypeStruct((B, C), jnp.float32),
        in_specs=[vmem] * len(inputs),
        out_specs=vmem,
        scratch_shapes=[
            pltpu.VMEM((T * B, 3 * H), jnp.float32),   # gi slab for current layer
            pltpu.VMEM((T * B, H), jnp.float32),       # inter-layer hidden sequence
        ],
        compiler_params=pltpu.CompilerParams(vmem_limit_bytes=32 * 1024 * 1024),
    )(*inputs)


# ----------------------------------------------------------------------------
# Pure-JAX reference (for correctness check).
# ----------------------------------------------------------------------------
def gru_net_reference(x_btf, params):
    B = x_btf.shape[0]
    seq = x_btf
    for layer in params["gru"]:
        H = layer["whh_t"].shape[0]
        h = jnp.zeros((B, H), jnp.float32)

        def step(h, x_t, layer=layer, H=H):
            gi = x_t @ layer["wih_t"] + layer["bih"]
            gh = h @ layer["whh_t"] + layer["bhh"]
            r = jax.nn.sigmoid(gi[:, :H] + gh[:, :H])
            z = jax.nn.sigmoid(gi[:, H:2 * H] + gh[:, H:2 * H])
            n = jnp.tanh(gi[:, 2 * H:] + r * gh[:, 2 * H:])
            h_new = (1.0 - z) * n + z * h
            return h_new, h_new

        _, outs = jax.lax.scan(step, h, jnp.transpose(seq, (1, 0, 2)))
        seq = jnp.transpose(outs, (1, 0, 2))
    h_last = seq[:, -1, :]
    x = jnp.maximum(h_last @ params["fc1_w"] + params["fc1_b"], 0.0)
    x = jnp.maximum(x @ params["fc2_w"] + params["fc2_b"], 0.0)
    return x @ params["fc3_w"] + params["fc3_b"]


# ----------------------------------------------------------------------------
# Deterministic parameter init (matches PyTorch shapes / init ranges).
# ----------------------------------------------------------------------------
def init_params(key, input_features, hidden_dim, num_layers, num_classes):
    params = {"gru": []}
    k_gru = 1.0 / jnp.sqrt(hidden_dim)
    keys = jax.random.split(key, 4 * num_layers + 6)
    idx = 0
    for layer in range(num_layers):
        in_dim = input_features if layer == 0 else hidden_dim
        wih = jax.random.uniform(keys[idx], (3 * hidden_dim, in_dim),
                                 minval=-k_gru, maxval=k_gru); idx += 1
        whh = jax.random.uniform(keys[idx], (3 * hidden_dim, hidden_dim),
                                 minval=-k_gru, maxval=k_gru); idx += 1
        bih = jax.random.uniform(keys[idx], (3 * hidden_dim,),
                                 minval=-k_gru, maxval=k_gru); idx += 1
        bhh = jax.random.uniform(keys[idx], (3 * hidden_dim,),
                                 minval=-k_gru, maxval=k_gru); idx += 1
        params["gru"].append({
            "wih_t": wih.T.astype(jnp.float32),              # (in, 3H)
            "whh_t": whh.T.astype(jnp.float32),              # (H, 3H)
            "bih": bih.reshape(1, -1).astype(jnp.float32),   # (1, 3H)
            "bhh": bhh.reshape(1, -1).astype(jnp.float32),   # (1, 3H)
        })

    def linear(key_w, key_b, fan_in, fan_out):
        k = 1.0 / jnp.sqrt(fan_in)
        w = jax.random.uniform(key_w, (fan_out, fan_in), minval=-k, maxval=k)
        b = jax.random.uniform(key_b, (fan_out,), minval=-k, maxval=k)
        return w.T.astype(jnp.float32), b.reshape(1, -1).astype(jnp.float32)

    params["fc1_w"], params["fc1_b"] = linear(keys[idx], keys[idx + 1], hidden_dim, 64); idx += 2
    params["fc2_w"], params["fc2_b"] = linear(keys[idx], keys[idx + 1], 64, 32); idx += 2
    params["fc3_w"], params["fc3_b"] = linear(keys[idx], keys[idx + 1], 32, num_classes); idx += 2
    return params


if __name__ == "__main__":
    # Small shapes consistent with the module's forward.
    B, T = 2, 8
    input_features, hidden_dim, num_layers, num_classes = 16, 32, 2, 4

    key = jax.random.PRNGKey(0)
    k_x, k_p = jax.random.split(key)
    x = jax.random.normal(k_x, (B, T, input_features), dtype=jnp.float32)
    params = init_params(k_p, input_features, hidden_dim, num_layers, num_classes)

    fwd = jax.jit(gru_net_forward)
    out = jax.block_until_ready(fwd(x, params))

    ref = gru_net_reference(x, params)
    assert out.shape == (B, num_classes)
    assert jnp.allclose(out, ref, atol=1e-4, rtol=1e-4), (out, ref)

    # TODO(synk): for production sizes, pad H / gate widths to 128 lanes and store
    # weights in bf16; at these toy shapes that adds complexity without benefit.
    print("KERNEL_OK")
</pallas_src>

<mosaic_0001>
module attributes {stable_mosaic.version = 11 : i64} {
  func.func @grunet_fused_kernel(%arg0: memref<16x16xf32, #tpu.memory_space<vmem>>, %arg1: memref<16x96xf32, #tpu.memory_space<vmem>>, %arg2: memref<32x96xf32, #tpu.memory_space<vmem>>, %arg3: memref<1x96xf32, #tpu.memory_space<vmem>>, %arg4: memref<1x32xf32, #tpu.memory_space<vmem>>, %arg5: memref<32x96xf32, #tpu.memory_space<vmem>>, %arg6: memref<32x96xf32, #tpu.memory_space<vmem>>, %arg7: memref<1x96xf32, #tpu.memory_space<vmem>>, %arg8: memref<1x32xf32, #tpu.memory_space<vmem>>, %arg9: memref<32x64xf32, #tpu.memory_space<vmem>>, %arg10: memref<1x64xf32, #tpu.memory_space<vmem>>, %arg11: memref<64x32xf32, #tpu.memory_space<vmem>>, %arg12: memref<1x32xf32, #tpu.memory_space<vmem>>, %arg13: memref<32x4xf32, #tpu.memory_space<vmem>>, %arg14: memref<1x4xf32, #tpu.memory_space<vmem>>, %arg15: memref<2x4xf32, #tpu.memory_space<vmem>>, %arg16: memref<16x96xf32, #tpu.memory_space<vmem>>, %arg17: memref<16x32xf32, #tpu.memory_space<vmem>>) attributes {dimension_semantics = [], scalar_prefetch = 0 : i64, scratch_operands = 2 : i64, tpu.core_type = #tpu.core_type<tc>} {
    %c0 = arith.constant 0 : index
    %c0_0 = arith.constant 0 : index
    %0 = vector.load %arg0[%c0, %c0_0] : memref<16x16xf32, #tpu.memory_space<vmem>>, vector<16x16xf32>
    %c0_1 = arith.constant 0 : index
    %c0_2 = arith.constant 0 : index
    %1 = vector.load %arg1[%c0_1, %c0_2] : memref<16x96xf32, #tpu.memory_space<vmem>>, vector<16x96xf32>
    %cst = arith.constant dense<0.000000e+00> : vector<16x96xf32>
    %2 = tpu.matmul %0, %1, %cst {dimension_numbers = #tpu.dot_dimension_numbers<[1], [0], [0], [1], [0, 0, 1, 1], [], []>} : vector<16x16xf32>, vector<16x96xf32>, vector<16x96xf32> -> vector<16x96xf32>
    %c0_3 = arith.constant 0 : index
    %c0_4 = arith.constant 0 : index
    %3 = vector.load %arg3[%c0_3, %c0_4] : memref<1x96xf32, #tpu.memory_space<vmem>>, vector<1x96xf32>
    %4 = vector.broadcast %3 : vector<1x96xf32> to vector<16x96xf32>
    %5 = arith.addf %2, %4 : vector<16x96xf32>
    %c0_5 = arith.constant 0 : index
    %c0_6 = arith.constant 0 : index
    %6 = vector.load %arg16[%c0_5, %c0_6] : memref<16x96xf32, #tpu.memory_space<vmem>>, vector<16x96xf32>
    tpu.vector_store %arg16[%c0_5, %c0_6], %5 {strides = array<i32>} : memref<16x96xf32, #tpu.memory_space<vmem>>, vector<16x96xf32>,
    %c0_7 = arith.constant 0 : index
    %c0_8 = arith.constant 0 : index
    %7 = vector.load %arg2[%c0_7, %c0_8] : memref<32x96xf32, #tpu.memory_space<vmem>>, vector<32x96xf32>
    %c0_9 = arith.constant 0 : index
    %c0_10 = arith.constant 0 : index
    %8 = vector.load %arg4[%c0_9, %c0_10] : memref<1x32xf32, #tpu.memory_space<vmem>>, vector<1x32xf32>
    %cst_11 = arith.constant 0.000000e+00 : f32
    %9 = vector.broadcast %cst_11 : f32 to vector<2x32xf32>
    %c0_i32 = arith.constant 0 : i32
    %c2_i32 = arith.constant 2 : i32
    %10 = arith.muli %c0_i32, %c2_i32 : i32
    %11 = arith.index_cast %10 : i32 to index
    %c0_12 = arith.constant 0 : index
    %12 = vector.load %arg16[%11, %c0_12] : memref<16x96xf32, #tpu.memory_space<vmem>>, vector<2x96xf32>
    %cst_13 = arith.constant dense<0.000000e+00> : vector<2x96xf32>
    %13 = tpu.matmul %9, %7, %cst_13 {dimension_numbers = #tpu.dot_dimension_numbers<[1], [0], [0], [1], [0, 0, 1, 1], [], []>} : vector<2x32xf32>, vector<32x96xf32>, vector<2x96xf32> -> vector<2x96xf32>
    %14 = vector.extract_strided_slice %12 {offsets = [0, 0], sizes = [2, 32], strides = [1, 1]} : vector<2x96xf32> to vector<2x32xf32>
    %15 = vector.extract_strided_slice %13 {offsets = [0, 0], sizes = [2, 32], strides = [1, 1]} : vector<2x96xf32> to vector<2x32xf32>
    %16 = arith.addf %14, %15 : vector<2x32xf32>
    %17 = arith.negf %16 : vector<2x32xf32>
    %18 = math.exp %17 : vector<2x32xf32>
    %cst_14 = arith.constant 1.000000e+00 : f32
    %19 = vector.broadcast %cst_14 : f32 to vector<2x32xf32>
    %20 = arith.addf %19, %18 : vector<2x32xf32>
    %21 = arith.divf %19, %20 : vector<2x32xf32>
    %22 = vector.extract_strided_slice %12 {offsets = [0, 32], sizes = [2, 32], strides = [1, 1]} : vector<2x96xf32> to vector<2x32xf32>
    %23 = vector.extract_strided_slice %13 {offsets = [0, 32], sizes = [2, 32], strides = [1, 1]} : vector<2x96xf32> to vector<2x32xf32>
    %24 = arith.addf %22, %23 : vector<2x32xf32>
    %25 = arith.negf %24 : vector<2x32xf32>
    %26 = math.exp %25 : vector<2x32xf32>
    %cst_15 = arith.constant 1.000000e+00 : f32
    %27 = vector.broadcast %cst_15 : f32 to vector<2x32xf32>
    %28 = arith.addf %27, %26 : vector<2x32xf32>
    %29 = arith.divf %27, %28 : vector<2x32xf32>
    %30 = vector.extract_strided_slice %12 {offsets = [0, 64], sizes = [2, 32], strides = [1, 1]} : vector<2x96xf32> to vector<2x32xf32>
    %31 = vector.extract_strided_slice %13 {offsets = [0, 64], sizes = [2, 32], strides = [1, 1]} : vector<2x96xf32> to vector<2x32xf32>
    %32 = vector.broadcast %8 : vector<1x32xf32> to vector<2x32xf32>
    %33 = arith.addf %31, %32 : vector<2x32xf32>
    %34 = arith.mulf %21, %33 : vector<2x32xf32>
    %35 = arith.addf %30, %34 : vector<2x32xf32>
    %36 = math.tanh %35 : vector<2x32xf32>
    %cst_16 = arith.constant 1.000000e+00 : f32
    %37 = vector.broadcast %cst_16 : f32 to vector<2x32xf32>
    %38 = arith.subf %37, %29 : vector<2x32xf32>
    %39 = arith.mulf %38, %36 : vector<2x32xf32>
    %40 = arith.mulf %29, %9 : vector<2x32xf32>
    %41 = arith.addf %39, %40 : vector<2x32xf32>
    %42 = arith.index_cast %10 : i32 to index
    %c0_17 = arith.constant 0 : index
    %43 = vector.load %arg17[%42, %c0_17] : memref<16x32xf32, #tpu.memory_space<vmem>>, vector<2x32xf32>
    tpu.vector_store %arg17[%42, %c0_17], %41 {strides = array<i32>} : memref<16x32xf32, #tpu.memory_space<vmem>>, vector<2x32xf32>,
    %c1_i32 = arith.constant 1 : i32
    %c2_i32_18 = arith.constant 2 : i32
    %44 = arith.muli %c1_i32, %c2_i32_18 : i32
    %45 = arith.index_cast %44 : i32 to index
    %c0_19 = arith.constant 0 : index
    %46 = vector.load %arg16[%45, %c0_19] : memref<16x96xf32, #tpu.memory_space<vmem>>, vector<2x96xf32>
    %cst_20 = arith.constant dense<0.000000e+00> : vector<2x96xf32>
    %47 = tpu.matmul %41, %7, %cst_20 {dimension_numbers = #tpu.dot_dimension_numbers<[1], [0], [0], [1], [0, 0, 1, 1], [], []>} : vector<2x32xf32>, vector<32x96xf32>, vector<2x96xf32> -> vector<2x96xf32>
    %48 = vector.extract_strided_slice %46 {offsets = [0, 0], sizes = [2, 32], strides = [1, 1]} : vector<2x96xf32> to vector<2x32xf32>
    %49 = vector.extract_strided_slice %47 {offsets = [0, 0], sizes = [2, 32], strides = [1, 1]} : vector<2x96xf32> to vector<2x32xf32>
    %50 = arith.addf %48, %49 : vector<2x32xf32>
    %51 = arith.negf %50 : vector<2x32xf32>
    %52 = math.exp %51 : vector<2x32xf32>
    %cst_21 = arith.constant 1.000000e+00 : f32
    %53 = vector.broadcast %cst_21 : f32 to vector<2x32xf32>
    %54 = arith.addf %53, %52 : vector<2x32xf32>
    %55 = arith.divf %53, %54 : vector<2x32xf32>
    %56 = vector.extract_strided_slice %46 {offsets = [0, 32], sizes = [2, 32], strides = [1, 1]} : vector<2x96xf32> to vector<2x32xf32>
    %57 = vector.extract_strided_slice %47 {offsets = [0, 32], sizes = [2, 32], strides = [1, 1]} : vector<2x96xf32> to vector<2x32xf32>
    %58 = arith.addf %56, %57 : vector<2x32xf32>
    %59 = arith.negf %58 : vector<2x32xf32>
    %60 = math.exp %59 : vector<2x32xf32>
    %cst_22 = arith.constant 1.000000e+00 : f32
    %61 = vector.broadcast %cst_22 : f32 to vector<2x32xf32>
    %62 = arith.addf %61, %60 : vector<2x32xf32>
    %63 = arith.divf %61, %62 : vector<2x32xf32>
    %64 = vector.extract_strided_slice %46 {offsets = [0, 64], sizes = [2, 32], strides = [1, 1]} : vector<2x96xf32> to vector<2x32xf32>
    %65 = vector.extract_strided_slice %47 {offsets = [0, 64], sizes = [2, 32], strides = [1, 1]} : vector<2x96xf32> to vector<2x32xf32>
    %66 = vector.broadcast %8 : vector<1x32xf32> to vector<2x32xf32>
    %67 = arith.addf %65, %66 : vector<2x32xf32>
    %68 = arith.mulf %55, %67 : vector<2x32xf32>
    %69 = arith.addf %64, %68 : vector<2x32xf32>
    %70 = math.tanh %69 : vector<2x32xf32>
    %cst_23 = arith.constant 1.000000e+00 : f32
    %71 = vector.broadcast %cst_23 : f32 to vector<2x32xf32>
    %72 = arith.subf %71, %63 : vector<2x32xf32>
    %73 = arith.mulf %72, %70 : vector<2x32xf32>
    %74 = arith.mulf %63, %41 : vector<2x32xf32>
    %75 = arith.addf %73, %74 : vector<2x32xf32>
    %76 = arith.index_cast %44 : i32 to index
    %c0_24 = arith.constant 0 : index
    %77 = vector.load %arg17[%76, %c0_24] : memref<16x32xf32, #tpu.memory_space<vmem>>, vector<2x32xf32>
    tpu.vector_store %arg17[%76, %c0_24], %75 {strides = array<i32>} : memref<16x32xf32, #tpu.memory_space<vmem>>, vector<2x32xf32>,
    %c2_i32_25 = arith.constant 2 : i32
    %c2_i32_26 = arith.constant 2 : i32
    %78 = arith.muli %c2_i32_25, %c2_i32_26 : i32
    %79 = arith.index_cast %78 : i32 to index
    %c0_27 = arith.constant 0 : index
    %80 = vector.load %arg16[%79, %c0_27] : memref<16x96xf32, #tpu.memory_space<vmem>>, vector<2x96xf32>
    %cst_28 = arith.constant dense<0.000000e+00> : vector<2x96xf32>
    %81 = tpu.matmul %75, %7, %cst_28 {dimension_numbers = #tpu.dot_dimension_numbers<[1], [0], [0], [1], [0, 0, 1, 1], [], []>} : vector<2x32xf32>, vector<32x96xf32>, vector<2x96xf32> -> vector<2x96xf32>
    %82 = vector.extract_strided_slice %80 {offsets = [0, 0], sizes = [2, 32], strides = [1, 1]} : vector<2x96xf32> to vector<2x32xf32>
    %83 = vector.extract_strided_slice %81 {offsets = [0, 0], sizes = [2, 32], strides = [1, 1]} : vector<2x96xf32> to vector<2x32xf32>
    %84 = arith.addf %82, %83 : vector<2x32xf32>
    %85 = arith.negf %84 : vector<2x32xf32>
    %86 = math.exp %85 : vector<2x32xf32>
    %cst_29 = arith.constant 1.000000e+00 : f32
    %87 = vector.broadcast %cst_29 : f32 to vector<2x32xf32>
    %88 = arith.addf %87, %86 : vector<2x32xf32>
    %89 = arith.divf %87, %88 : vector<2x32xf32>
    %90 = vector.extract_strided_slice %80 {offsets = [0, 32], sizes = [2, 32], strides = [1, 1]} : vector<2x96xf32> to vector<2x32xf32>
    %91 = vector.extract_strided_slice %81 {offsets = [0, 32], sizes = [2, 32], strides = [1, 1]} : vector<2x96xf32> to vector<2x32xf32>
    %92 = arith.addf %90, %91 : vector<2x32xf32>
    %93 = arith.negf %92 : vector<2x32xf32>
    %94 = math.exp %93 : vector<2x32xf32>
    %cst_30 = arith.constant 1.000000e+00 : f32
    %95 = vector.broadcast %cst_30 : f32 to vector<2x32xf32>
    %96 = arith.addf %95, %94 : vector<2x32xf32>
    %97 = arith.divf %95, %96 : vector<2x32xf32>
    %98 = vector.extract_strided_slice %80 {offsets = [0, 64], sizes = [2, 32], strides = [1, 1]} : vector<2x96xf32> to vector<2x32xf32>
    %99 = vector.extract_strided_slice %81 {offsets = [0, 64], sizes = [2, 32], strides = [1, 1]} : vector<2x96xf32> to vector<2x32xf32>
    %100 = vector.broadcast %8 : vector<1x32xf32> to vector<2x32xf32>
    %101 = arith.addf %99, %100 : vector<2x32xf32>
    %102 = arith.mulf %89, %101 : vector<2x32xf32>
    %103 = arith.addf %98, %102 : vector<2x32xf32>
    %104 = math.tanh %103 : vector<2x32xf32>
    %cst_31 = arith.constant 1.000000e+00 : f32
    %105 = vector.broadcast %cst_31 : f32 to vector<2x32xf32>
    %106 = arith.subf %105, %97 : vector<2x32xf32>
    %107 = arith.mulf %106, %104 : vector<2x32xf32>
    %108 = arith.mulf %97, %75 : vector<2x32xf32>
    %109 = arith.addf %107, %108 : vector<2x32xf32>
    %110 = arith.index_cast %78 : i32 to index
    %c0_32 = arith.constant 0 : index
    %111 = vector.load %arg17[%110, %c0_32] : memref<16x32xf32, #tpu.memory_space<vmem>>, vector<2x32xf32>
    tpu.vector_store %arg17[%110, %c0_32], %109 {strides = array<i32>} : memref<16x32xf32, #tpu.memory_space<vmem>>, vector<2x32xf32>,
    %c3_i32 = arith.constant 3 : i32
    %c2_i32_33 = arith.constant 2 : i32
    %112 = arith.muli %c3_i32, %c2_i32_33 : i32
    %113 = arith.index_cast %112 : i32 to index
    %c0_34 = arith.constant 0 : index
    %114 = vector.load %arg16[%113, %c0_34] : memref<16x96xf32, #tpu.memory_space<vmem>>, vector<2x96xf32>
    %cst_35 = arith.constant dense<0.000000e+00> : vector<2x96xf32>
    %115 = tpu.matmul %109, %7, %cst_35 {dimension_numbers = #tpu.dot_dimension_numbers<[1], [0], [0], [1], [0, 0, 1, 1], [], []>} : vector<2x32xf32>, vector<32x96xf32>, vector<2x96xf32> -> vector<2x96xf32>
    %116 = vector.extract_strided_slice %114 {offsets = [0, 0], sizes = [2, 32], strides = [1, 1]} : vector<2x96xf32> to vector<2x32xf32>
    %117 = vector.extract_strided_slice %115 {offsets = [0, 0], sizes = [2, 32], strides = [1, 1]} : vector<2x96xf32> to vector<2x32xf32>
    %118 = arith.addf %116, %117 : vector<2x32xf32>
    %119 = arith.negf %118 : vector<2x32xf32>
    %120 = math.exp %119 : vector<2x32xf32>
    %cst_36 = arith.constant 1.000000e+00 : f32
    %121 = vector.broadcast %cst_36 : f32 to vector<2x32xf32>
    %122 = arith.addf %121, %120 : vector<2x32xf32>
    %123 = arith.divf %121, %122 : vector<2x32xf32>
    %124 = vector.extract_strided_slice %114 {offsets = [0, 32], sizes = [2, 32], strides = [1, 1]} : vector<2x96xf32> to vector<2x32xf32>
    %125 = vector.extract_strided_slice %115 {offsets = [0, 32], sizes = [2, 32], strides = [1, 1]} : vector<2x96xf32> to vector<2x32xf32>
    %126 = arith.addf %124, %125 : vector<2x32xf32>
    %127 = arith.negf %126 : vector<2x32xf32>
    %128 = math.exp %127 : vector<2x32xf32>
    %cst_37 = arith.constant 1.000000e+00 : f32
    %129 = vector.broadcast %cst_37 : f32 to vector<2x32xf32>
    %130 = arith.addf %129, %128 : vector<2x32xf32>
    %131 = arith.divf %129, %130 : vector<2x32xf32>
    %132 = vector.extract_strided_slice %114 {offsets = [0, 64], sizes = [2, 32], strides = [1, 1]} : vector<2x96xf32> to vector<2x32xf32>
    %133 = vector.extract_strided_slice %115 {offsets = [0, 64], sizes = [2, 32], strides = [1, 1]} : vector<2x96xf32> to vector<2x32xf32>
    %134 = vector.broadcast %8 : vector<1x32xf32> to vector<2x32xf32>
    %135 = arith.addf %133, %134 : vector<2x32xf32>
    %136 = arith.mulf %123, %135 : vector<2x32xf32>
    %137 = arith.addf %132, %136 : vector<2x32xf32>
    %138 = math.tanh %137 : vector<2x32xf32>
    %cst_38 = arith.constant 1.000000e+00 : f32
    %139 = vector.broadcast %cst_38 : f32 to vector<2x32xf32>
    %140 = arith.subf %139, %131 : vector<2x32xf32>
    %141 = arith.mulf %140, %138 : vector<2x32xf32>
    %142 = arith.mulf %131, %109 : vector<2x32xf32>
    %143 = arith.addf %141, %142 : vector<2x32xf32>
    %144 = arith.index_cast %112 : i32 to index
    %c0_39 = arith.constant 0 : index
    %145 = vector.load %arg17[%144, %c0_39] : memref<16x32xf32, #tpu.memory_space<vmem>>, vector<2x32xf32>
    tpu.vector_store %arg17[%144, %c0_39], %143 {strides = array<i32>} : memref<16x32xf32, #tpu.memory_space<vmem>>, vector<2x32xf32>,
    %c4_i32 = arith.constant 4 : i32
    %c2_i32_40 = arith.constant 2 : i32
    %146 = arith.muli %c4_i32, %c2_i32_40 : i32
    %147 = arith.index_cast %146 : i32 to index
    %c0_41 = arith.constant 0 : index
    %148 = vector.load %arg16[%147, %c0_41] : memref<16x96xf32, #tpu.memory_space<vmem>>, vector<2x96xf32>
    %cst_42 = arith.constant dense<0.000000e+00> : vector<2x96xf32>
    %149 = tpu.matmul %143, %7, %cst_42 {dimension_numbers = #tpu.dot_dimension_numbers<[1], [0], [0], [1], [0, 0, 1, 1], [], []>} : vector<2x32xf32>, vector<32x96xf32>, vector<2x96xf32> -> vector<2x96xf32>
    %150 = vector.extract_strided_slice %148 {offsets = [0, 0], sizes = [2, 32], strides = [1, 1]} : vector<2x96xf32> to vector<2x32xf32>
    %151 = vector.extract_strided_slice %149 {offsets = [0, 0], sizes = [2, 32], strides = [1, 1]} : vector<2x96xf32> to vector<2x32xf32>
    %152 = arith.addf %150, %151 : vector<2x32xf32>
    %153 = arith.negf %152 : vector<2x32xf32>
    %154 = math.exp %153 : vector<2x32xf32>
    %cst_43 = arith.constant 1.000000e+00 : f32
    %155 = vector.broadcast %cst_43 : f32 to vector<2x32xf32>
    %156 = arith.addf %155, %154 : vector<2x32xf32>
    %157 = arith.divf %155, %156 : vector<2x32xf32>
    %158 = vector.extract_strided_slice %148 {offsets = [0, 32], sizes = [2, 32], strides = [1, 1]} : vector<2x96xf32> to vector<2x32xf32>
    %159 = vector.extract_strided_slice %149 {offsets = [0, 32], sizes = [2, 32], strides = [1, 1]} : vector<2x96xf32> to vector<2x32xf32>
    %160 = arith.addf %158, %159 : vector<2x32xf32>
    %161 = arith.negf %160 : vector<2x32xf32>
    %162 = math.exp %161 : vector<2x32xf32>
    %cst_44 = arith.constant 1.000000e+00 : f32
    %163 = vector.broadcast %cst_44 : f32 to vector<2x32xf32>
    %164 = arith.addf %163, %162 : vector<2x32xf32>
    %165 = arith.divf %163, %164 : vector<2x32xf32>
    %166 = vector.extract_strided_slice %148 {offsets = [0, 64], sizes = [2, 32], strides = [1, 1]} : vector<2x96xf32> to vector<2x32xf32>
    %167 = vector.extract_strided_slice %149 {offsets = [0, 64], sizes = [2, 32], strides = [1, 1]} : vector<2x96xf32> to vector<2x32xf32>
    %168 = vector.broadcast %8 : vector<1x32xf32> to vector<2x32xf32>
    %169 = arith.addf %167, %168 : vector<2x32xf32>
    %170 = arith.mulf %157, %169 : vector<2x32xf32>
    %171 = arith.addf %166, %170 : vector<2x32xf32>
    %172 = math.tanh %171 : vector<2x32xf32>
    %cst_45 = arith.constant 1.000000e+00 : f32
    %173 = vector.broadcast %cst_45 : f32 to vector<2x32xf32>
    %174 = arith.subf %173, %165 : vector<2x32xf32>
    %175 = arith.mulf %174, %172 : vector<2x32xf32>
    %176 = arith.mulf %165, %143 : vector<2x32xf32>
    %177 = arith.addf %175, %176 : vector<2x32xf32>
    %178 = arith.index_cast %146 : i32 to index
    %c0_46 = arith.constant 0 : index
    %179 = vector.load %arg17[%178, %c0_46] : memref<16x32xf32, #tpu.memory_space<vmem>>, vector<2x32xf32>
    tpu.vector_store %arg17[%178, %c0_46], %177 {strides = array<i32>} : memref<16x32xf32, #tpu.memory_space<vmem>>, vector<2x32xf32>,
    %c5_i32 = arith.constant 5 : i32
    %c2_i32_47 = arith.constant 2 : i32
    %180 = arith.muli %c5_i32, %c2_i32_47 : i32
    %181 = arith.index_cast %180 : i32 to index
    %c0_48 = arith.constant 0 : index
    %182 = vector.load %arg16[%181, %c0_48] : memref<16x96xf32, #tpu.memory_space<vmem>>, vector<2x96xf32>
    %cst_49 = arith.constant dense<0.000000e+00> : vector<2x96xf32>
    %183 = tpu.matmul %177, %7, %cst_49 {dimension_numbers = #tpu.dot_dimension_numbers<[1], [0], [0], [1], [0, 0, 1, 1], [], []>} : vector<2x32xf32>, vector<32x96xf32>, vector<2x96xf32> -> vector<2x96xf32>
    %184 = vector.extract_strided_slice %182 {offsets = [0, 0], sizes = [2, 32], strides = [1, 1]} : vector<2x96xf32> to vector<2x32xf32>
    %185 = vector.extract_strided_slice %183 {offsets = [0, 0], sizes = [2, 32], strides = [1, 1]} : vector<2x96xf32> to vector<2x32xf32>
    %186 = arith.addf %184, %185 : vector<2x32xf32>
    %187 = arith.negf %186 : vector<2x32xf32>
    %188 = math.exp %187 : vector<2x32xf32>
    %cst_50 = arith.constant 1.000000e+00 : f32
    %189 = vector.broadcast %cst_50 : f32 to vector<2x32xf32>
    %190 = arith.addf %189, %188 : vector<2x32xf32>
    %191 = arith.divf %189, %190 : vector<2x32xf32>
    %192 = vector.extract_strided_slice %182 {offsets = [0, 32], sizes = [2, 32], strides = [1, 1]} : vector<2x96xf32> to vector<2x32xf32>
    %193 = vector.extract_strided_slice %183 {offsets = [0, 32], sizes = [2, 32], strides = [1, 1]} : vector<2x96xf32> to vector<2x32xf32>
    %194 = arith.addf %192, %193 : vector<2x32xf32>
    %195 = arith.negf %194 : vector<2x32xf32>
    %196 = math.exp %195 : vector<2x32xf32>
    %cst_51 = arith.constant 1.000000e+00 : f32
    %197 = vector.broadcast %cst_51 : f32 to vector<2x32xf32>
    %198 = arith.addf %197, %196 : vector<2x32xf32>
    %199 = arith.divf %197, %198 : vector<2x32xf32>
    %200 = vector.extract_strided_slice %182 {offsets = [0, 64], sizes = [2, 32], strides = [1, 1]} : vector<2x96xf32> to vector<2x32xf32>
    %201 = vector.extract_strided_slice %183 {offsets = [0, 64], sizes = [2, 32], strides = [1, 1]} : vector<2x96xf32> to vector<2x32xf32>
    %202 = vector.broadcast %8 : vector<1x32xf32> to vector<2x32xf32>
    %203 = arith.addf %201, %202 : vector<2x32xf32>
    %204 = arith.mulf %191, %203 : vector<2x32xf32>
    %205 = arith.addf %200, %204 : vector<2x32xf32>
    %206 = math.tanh %205 : vector<2x32xf32>
    %cst_52 = arith.constant 1.000000e+00 : f32
    %207 = vector.broadcast %cst_52 : f32 to vector<2x32xf32>
    %208 = arith.subf %207, %199 : vector<2x32xf32>
    %209 = arith.mulf %208, %206 : vector<2x32xf32>
    %210 = arith.mulf %199, %177 : vector<2x32xf32>
    %211 = arith.addf %209, %210 : vector<2x32xf32>
    %212 = arith.index_cast %180 : i32 to index
    %c0_53 = arith.constant 0 : index
    %213 = vector.load %arg17[%212, %c0_53] : memref<16x32xf32, #tpu.memory_space<vmem>>, vector<2x32xf32>
    tpu.vector_store %arg17[%212, %c0_53], %211 {strides = array<i32>} : memref<16x32xf32, #tpu.memory_space<vmem>>, vector<2x32xf32>,
    %c6_i32 = arith.constant 6 : i32
    %c2_i32_54 = arith.constant 2 : i32
    %214 = arith.muli %c6_i32, %c2_i32_54 : i32
    %215 = arith.index_cast %214 : i32 to index
    %c0_55 = arith.constant 0 : index
    %216 = vector.load %arg16[%215, %c0_55] : memref<16x96xf32, #tpu.memory_space<vmem>>, vector<2x96xf32>
    %cst_56 = arith.constant dense<0.000000e+00> : vector<2x96xf32>
    %217 = tpu.matmul %211, %7, %cst_56 {dimension_numbers = #tpu.dot_dimension_numbers<[1], [0], [0], [1], [0, 0, 1, 1], [], []>} : vector<2x32xf32>, vector<32x96xf32>, vector<2x96xf32> -> vector<2x96xf32>
    %218 = vector.extract_strided_slice %216 {offsets = [0, 0], sizes = [2, 32], strides = [1, 1]} : vector<2x96xf32> to vector<2x32xf32>
    %219 = vector.extract_strided_slice %217 {offsets = [0, 0], sizes = [2, 32], strides = [1, 1]} : vector<2x96xf32> to vector<2x32xf32>
    %220 = arith.addf %218, %219 : vector<2x32xf32>
    %221 = arith.negf %220 : vector<2x32xf32>
    %222 = math.exp %221 : vector<2x32xf32>
    %cst_57 = arith.constant 1.000000e+00 : f32
    %223 = vector.broadcast %cst_57 : f32 to vector<2x32xf32>
    %224 = arith.addf %223, %222 : vector<2x32xf32>
    %225 = arith.divf %223, %224 : vector<2x32xf32>
    %226 = vector.extract_strided_slice %216 {offsets = [0, 32], sizes = [2, 32], strides = [1, 1]} : vector<2x96xf32> to vector<2x32xf32>
    %227 = vector.extract_strided_slice %217 {offsets = [0, 32], sizes = [2, 32], strides = [1, 1]} : vector<2x96xf32> to vector<2x32xf32>
    %228 = arith.addf %226, %227 : vector<2x32xf32>
    %229 = arith.negf %228 : vector<2x32xf32>
    %230 = math.exp %229 : vector<2x32xf32>
    %cst_58 = arith.constant 1.000000e+00 : f32
    %231 = vector.broadcast %cst_58 : f32 to vector<2x32xf32>
    %232 = arith.addf %231, %230 : vector<2x32xf32>
    %233 = arith.divf %231, %232 : vector<2x32xf32>
    %234 = vector.extract_strided_slice %216 {offsets = [0, 64], sizes = [2, 32], strides = [1, 1]} : vector<2x96xf32> to vector<2x32xf32>
    %235 = vector.extract_strided_slice %217 {offsets = [0, 64], sizes = [2, 32], strides = [1, 1]} : vector<2x96xf32> to vector<2x32xf32>
    %236 = vector.broadcast %8 : vector<1x32xf32> to vector<2x32xf32>
    %237 = arith.addf %235, %236 : vector<2x32xf32>
    %238 = arith.mulf %225, %237 : vector<2x32xf32>
    %239 = arith.addf %234, %238 : vector<2x32xf32>
    %240 = math.tanh %239 : vector<2x32xf32>
    %cst_59 = arith.constant 1.000000e+00 : f32
    %241 = vector.broadcast %cst_59 : f32 to vector<2x32xf32>
    %242 = arith.subf %241, %233 : vector<2x32xf32>
    %243 = arith.mulf %242, %240 : vector<2x32xf32>
    %244 = arith.mulf %233, %211 : vector<2x32xf32>
    %245 = arith.addf %243, %244 : vector<2x32xf32>
    %246 = arith.index_cast %214 : i32 to index
    %c0_60 = arith.constant 0 : index
    %247 = vector.load %arg17[%246, %c0_60] : memref<16x32xf32, #tpu.memory_space<vmem>>, vector<2x32xf32>
    tpu.vector_store %arg17[%246, %c0_60], %245 {strides = array<i32>} : memref<16x32xf32, #tpu.memory_space<vmem>>, vector<2x32xf32>,
    %c7_i32 = arith.constant 7 : i32
    %c2_i32_61 = arith.constant 2 : i32
    %248 = arith.muli %c7_i32, %c2_i32_61 : i32
    %249 = arith.index_cast %248 : i32 to index
    %c0_62 = arith.constant 0 : index
    %250 = vector.load %arg16[%249, %c0_62] : memref<16x96xf32, #tpu.memory_space<vmem>>, vector<2x96xf32>
    %cst_63 = arith.constant dense<0.000000e+00> : vector<2x96xf32>
    %251 = tpu.matmul %245, %7, %cst_63 {dimension_numbers = #tpu.dot_dimension_numbers<[1], [0], [0], [1], [0, 0, 1, 1], [], []>} : vector<2x32xf32>, vector<32x96xf32>, vector<2x96xf32> -> vector<2x96xf32>
    %252 = vector.extract_strided_slice %250 {offsets = [0, 0], sizes = [2, 32], strides = [1, 1]} : vector<2x96xf32> to vector<2x32xf32>
    %253 = vector.extract_strided_slice %251 {offsets = [0, 0], sizes = [2, 32], strides = [1, 1]} : vector<2x96xf32> to vector<2x32xf32>
    %254 = arith.addf %252, %253 : vector<2x32xf32>
    %255 = arith.negf %254 : vector<2x32xf32>
    %256 = math.exp %255 : vector<2x32xf32>
    %cst_64 = arith.constant 1.000000e+00 : f32
    %257 = vector.broadcast %cst_64 : f32 to vector<2x32xf32>
    %258 = arith.addf %257, %256 : vector<2x32xf32>
    %259 = arith.divf %257, %258 : vector<2x32xf32>
    %260 = vector.extract_strided_slice %250 {offsets = [0, 32], sizes = [2, 32], strides = [1, 1]} : vector<2x96xf32> to vector<2x32xf32>
    %261 = vector.extract_strided_slice %251 {offsets = [0, 32], sizes = [2, 32], strides = [1, 1]} : vector<2x96xf32> to vector<2x32xf32>
    %262 = arith.addf %260, %261 : vector<2x32xf32>
    %263 = arith.negf %262 : vector<2x32xf32>
    %264 = math.exp %263 : vector<2x32xf32>
    %cst_65 = arith.constant 1.000000e+00 : f32
    %265 = vector.broadcast %cst_65 : f32 to vector<2x32xf32>
    %266 = arith.addf %265, %264 : vector<2x32xf32>
    %267 = arith.divf %265, %266 : vector<2x32xf32>
    %268 = vector.extract_strided_slice %250 {offsets = [0, 64], sizes = [2, 32], strides = [1, 1]} : vector<2x96xf32> to vector<2x32xf32>
    %269 = vector.extract_strided_slice %251 {offsets = [0, 64], sizes = [2, 32], strides = [1, 1]} : vector<2x96xf32> to vector<2x32xf32>
    %270 = vector.broadcast %8 : vector<1x32xf32> to vector<2x32xf32>
    %271 = arith.addf %269, %270 : vector<2x32xf32>
    %272 = arith.mulf %259, %271 : vector<2x32xf32>
    %273 = arith.addf %268, %272 : vector<2x32xf32>
    %274 = math.tanh %273 : vector<2x32xf32>
    %cst_66 = arith.constant 1.000000e+00 : f32
    %275 = vector.broadcast %cst_66 : f32 to vector<2x32xf32>
    %276 = arith.subf %275, %267 : vector<2x32xf32>
    %277 = arith.mulf %276, %274 : vector<2x32xf32>
    %278 = arith.mulf %267, %245 : vector<2x32xf32>
    %279 = arith.addf %277, %278 : vector<2x32xf32>
    %280 = arith.index_cast %248 : i32 to index
    %c0_67 = arith.constant 0 : index
    %281 = vector.load %arg17[%280, %c0_67] : memref<16x32xf32, #tpu.memory_space<vmem>>, vector<2x32xf32>
    tpu.vector_store %arg17[%280, %c0_67], %279 {strides = array<i32>} : memref<16x32xf32, #tpu.memory_space<vmem>>, vector<2x32xf32>,
    %c8_i32 = arith.constant 8 : i32
    %c0_68 = arith.constant 0 : index
    %c0_69 = arith.constant 0 : index
    %282 = vector.load %arg17[%c0_68, %c0_69] : memref<16x32xf32, #tpu.memory_space<vmem>>, vector<16x32xf32>
    %c0_70 = arith.constant 0 : index
    %c0_71 = arith.constant 0 : index
    %283 = vector.load %arg5[%c0_70, %c0_71] : memref<32x96xf32, #tpu.memory_space<vmem>>, vector<32x96xf32>
    %cst_72 = arith.constant dense<0.000000e+00> : vector<16x96xf32>
    %284 = tpu.matmul %282, %283, %cst_72 {dimension_numbers = #tpu.dot_dimension_numbers<[1], [0], [0], [1], [0, 0, 1, 1], [], []>} : vector<16x32xf32>, vector<32x96xf32>, vector<16x96xf32> -> vector<16x96xf32>
    %c0_73 = arith.constant 0 : index
    %c0_74 = arith.constant 0 : index
    %285 = vector.load %arg7[%c0_73, %c0_74] : memref<1x96xf32, #tpu.memory_space<vmem>>, vector<1x96xf32>
    %286 = vector.broadcast %285 : vector<1x96xf32> to vector<16x96xf32>
    %287 = arith.addf %284, %286 : vector<16x96xf32>
    %c0_75 = arith.constant 0 : index
    %c0_76 = arith.constant 0 : index
    %288 = vector.load %arg16[%c0_75, %c0_76] : memref<16x96xf32, #tpu.memory_space<vmem>>, vector<16x96xf32>
    tpu.vector_store %arg16[%c0_75, %c0_76], %287 {strides = array<i32>} : memref<16x96xf32, #tpu.memory_space<vmem>>, vector<16x96xf32>,
    %c0_77 = arith.constant 0 : index
    %c0_78 = arith.constant 0 : index
    %289 = vector.load %arg6[%c0_77, %c0_78] : memref<32x96xf32, #tpu.memory_space<vmem>>, vector<32x96xf32>
    %c0_79 = arith.constant 0 : index
    %c0_80 = arith.constant 0 : index
    %290 = vector.load %arg8[%c0_79, %c0_80] : memref<1x32xf32, #tpu.memory_space<vmem>>, vector<1x32xf32>
    %cst_81 = arith.constant 0.000000e+00 : f32
    %291 = vector.broadcast %cst_81 : f32 to vector<2x32xf32>
    %c0_i32_82 = arith.constant 0 : i32
    %c2_i32_83 = arith.constant 2 : i32
    %292 = arith.muli %c0_i32_82, %c2_i32_83 : i32
    %293 = arith.index_cast %292 : i32 to index
    %c0_84 = arith.constant 0 : index
    %294 = vector.load %arg16[%293, %c0_84] : memref<16x96xf32, #tpu.memory_space<vmem>>, vector<2x96xf32>
    %cst_85 = arith.constant dense<0.000000e+00> : vector<2x96xf32>
    %295 = tpu.matmul %291, %289, %cst_85 {dimension_numbers = #tpu.dot_dimension_numbers<[1], [0], [0], [1], [0, 0, 1, 1], [], []>} : vector<2x32xf32>, vector<32x96xf32>, vector<2x96xf32> -> vector<2x96xf32>
    %296 = vector.extract_strided_slice %294 {offsets = [0, 0], sizes = [2, 32], strides = [1, 1]} : vector<2x96xf32> to vector<2x32xf32>
    %297 = vector.extract_strided_slice %295 {offsets = [0, 0], sizes = [2, 32], strides = [1, 1]} : vector<2x96xf32> to vector<2x32xf32>
    %298 = arith.addf %296, %297 : vector<2x32xf32>
    %299 = arith.negf %298 : vector<2x32xf32>
    %300 = math.exp %299 : vector<2x32xf32>
    %cst_86 = arith.constant 1.000000e+00 : f32
    %301 = vector.broadcast %cst_86 : f32 to vector<2x32xf32>
    %302 = arith.addf %301, %300 : vector<2x32xf32>
    %303 = arith.divf %301, %302 : vector<2x32xf32>
    %304 = vector.extract_strided_slice %294 {offsets = [0, 32], sizes = [2, 32], strides = [1, 1]} : vector<2x96xf32> to vector<2x32xf32>
    %305 = vector.extract_strided_slice %295 {offsets = [0, 32], sizes = [2, 32], strides = [1, 1]} : vector<2x96xf32> to vector<2x32xf32>
    %306 = arith.addf %304, %305 : vector<2x32xf32>
    %307 = arith.negf %306 : vector<2x32xf32>
    %308 = math.exp %307 : vector<2x32xf32>
    %cst_87 = arith.constant 1.000000e+00 : f32
    %309 = vector.broadcast %cst_87 : f32 to vector<2x32xf32>
    %310 = arith.addf %309, %308 : vector<2x32xf32>
    %311 = arith.divf %309, %310 : vector<2x32xf32>
    %312 = vector.extract_strided_slice %294 {offsets = [0, 64], sizes = [2, 32], strides = [1, 1]} : vector<2x96xf32> to vector<2x32xf32>
    %313 = vector.extract_strided_slice %295 {offsets = [0, 64], sizes = [2, 32], strides = [1, 1]} : vector<2x96xf32> to vector<2x32xf32>
    %314 = vector.broadcast %290 : vector<1x32xf32> to vector<2x32xf32>
    %315 = arith.addf %313, %314 : vector<2x32xf32>
    %316 = arith.mulf %303, %315 : vector<2x32xf32>
    %317 = arith.addf %312, %316 : vector<2x32xf32>
    %318 = math.tanh %317 : vector<2x32xf32>
    %cst_88 = arith.constant 1.000000e+00 : f32
    %319 = vector.broadcast %cst_88 : f32 to vector<2x32xf32>
    %320 = arith.subf %319, %311 : vector<2x32xf32>
    %321 = arith.mulf %320, %318 : vector<2x32xf32>
    %322 = arith.mulf %311, %291 : vector<2x32xf32>
    %323 = arith.addf %321, %322 : vector<2x32xf32>
    %c1_i32_89 = arith.constant 1 : i32
    %c2_i32_90 = arith.constant 2 : i32
    %324 = arith.muli %c1_i32_89, %c2_i32_90 : i32
    %325 = arith.index_cast %324 : i32 to index
    %c0_91 = arith.constant 0 : index
    %326 = vector.load %arg16[%325, %c0_91] : memref<16x96xf32, #tpu.memory_space<vmem>>, vector<2x96xf32>
    %cst_92 = arith.constant dense<0.000000e+00> : vector<2x96xf32>
    %327 = tpu.matmul %323, %289, %cst_92 {dimension_numbers = #tpu.dot_dimension_numbers<[1], [0], [0], [1], [0, 0, 1, 1], [], []>} : vector<2x32xf32>, vector<32x96xf32>, vector<2x96xf32> -> vector<2x96xf32>
    %328 = vector.extract_strided_slice %326 {offsets = [0, 0], sizes = [2, 32], strides = [1, 1]} : vector<2x96xf32> to vector<2x32xf32>
    %329 = vector.extract_strided_slice %327 {offsets = [0, 0], sizes = [2, 32], strides = [1, 1]} : vector<2x96xf32> to vector<2x32xf32>
    %330 = arith.addf %328, %329 : vector<2x32xf32>
    %331 = arith.negf %330 : vector<2x32xf32>
    %332 = math.exp %331 : vector<2x32xf32>
    %cst_93 = arith.constant 1.000000e+00 : f32
    %333 = vector.broadcast %cst_93 : f32 to vector<2x32xf32>
    %334 = arith.addf %333, %332 : vector<2x32xf32>
    %335 = arith.divf %333, %334 : vector<2x32xf32>
    %336 = vector.extract_strided_slice %326 {offsets = [0, 32], sizes = [2, 32], strides = [1, 1]} : vector<2x96xf32> to vector<2x32xf32>
    %337 = vector.extract_strided_slice %327 {offsets = [0, 32], sizes = [2, 32], strides = [1, 1]} : vector<2x96xf32> to vector<2x32xf32>
    %338 = arith.addf %336, %337 : vector<2x32xf32>
    %339 = arith.negf %338 : vector<2x32xf32>
    %340 = math.exp %339 : vector<2x32xf32>
    %cst_94 = arith.constant 1.000000e+00 : f32
    %341 = vector.broadcast %cst_94 : f32 to vector<2x32xf32>
    %342 = arith.addf %341, %340 : vector<2x32xf32>
    %343 = arith.divf %341, %342 : vector<2x32xf32>
    %344 = vector.extract_strided_slice %326 {offsets = [0, 64], sizes = [2, 32], strides = [1, 1]} : vector<2x96xf32> to vector<2x32xf32>
    %345 = vector.extract_strided_slice %327 {offsets = [0, 64], sizes = [2, 32], strides = [1, 1]} : vector<2x96xf32> to vector<2x32xf32>
    %346 = vector.broadcast %290 : vector<1x32xf32> to vector<2x32xf32>
    %347 = arith.addf %345, %346 : vector<2x32xf32>
    %348 = arith.mulf %335, %347 : vector<2x32xf32>
    %349 = arith.addf %344, %348 : vector<2x32xf32>
    %350 = math.tanh %349 : vector<2x32xf32>
    %cst_95 = arith.constant 1.000000e+00 : f32
    %351 = vector.broadcast %cst_95 : f32 to vector<2x32xf32>
    %352 = arith.subf %351, %343 : vector<2x32xf32>
    %353 = arith.mulf %352, %350 : vector<2x32xf32>
    %354 = arith.mulf %343, %323 : vector<2x32xf32>
    %355 = arith.addf %353, %354 : vector<2x32xf32>
    %c2_i32_96 = arith.constant 2 : i32
    %c2_i32_97 = arith.constant 2 : i32
    %356 = arith.muli %c2_i32_96, %c2_i32_97 : i32
    %357 = arith.index_cast %356 : i32 to index
    %c0_98 = arith.constant 0 : index
    %358 = vector.load %arg16[%357, %c0_98] : memref<16x96xf32, #tpu.memory_space<vmem>>, vector<2x96xf32>
    %cst_99 = arith.constant dense<0.000000e+00> : vector<2x96xf32>
    %359 = tpu.matmul %355, %289, %cst_99 {dimension_numbers = #tpu.dot_dimension_numbers<[1], [0], [0], [1], [0, 0, 1, 1], [], []>} : vector<2x32xf32>, vector<32x96xf32>, vector<2x96xf32> -> vector<2x96xf32>
    %360 = vector.extract_strided_slice %358 {offsets = [0, 0], sizes = [2, 32], strides = [1, 1]} : vector<2x96xf32> to vector<2x32xf32>
    %361 = vector.extract_strided_slice %359 {offsets = [0, 0], sizes = [2, 32], strides = [1, 1]} : vector<2x96xf32> to vector<2x32xf32>
    %362 = arith.addf %360, %361 : vector<2x32xf32>
    %363 = arith.negf %362 : vector<2x32xf32>
    %364 = math.exp %363 : vector<2x32xf32>
    %cst_100 = arith.constant 1.000000e+00 : f32
    %365 = vector.broadcast %cst_100 : f32 to vector<2x32xf32>
    %366 = arith.addf %365, %364 : vector<2x32xf32>
    %367 = arith.divf %365, %366 : vector<2x32xf32>
    %368 = vector.extract_strided_slice %358 {offsets = [0, 32], sizes = [2, 32], strides = [1, 1]} : vector<2x96xf32> to vector<2x32xf32>
    %369 = vector.extract_strided_slice %359 {offsets = [0, 32], sizes = [2, 32], strides = [1, 1]} : vector<2x96xf32> to vector<2x32xf32>
    %370 = arith.addf %368, %369 : vector<2x32xf32>
    %371 = arith.negf %370 : vector<2x32xf32>
    %372 = math.exp %371 : vector<2x32xf32>
    %cst_101 = arith.constant 1.000000e+00 : f32
    %373 = vector.broadcast %cst_101 : f32 to vector<2x32xf32>
    %374 = arith.addf %373, %372 : vector<2x32xf32>
    %375 = arith.divf %373, %374 : vector<2x32xf32>
    %376 = vector.extract_strided_slice %358 {offsets = [0, 64], sizes = [2, 32], strides = [1, 1]} : vector<2x96xf32> to vector<2x32xf32>
    %377 = vector.extract_strided_slice %359 {offsets = [0, 64], sizes = [2, 32], strides = [1, 1]} : vector<2x96xf32> to vector<2x32xf32>
    %378 = vector.broadcast %290 : vector<1x32xf32> to vector<2x32xf32>
    %379 = arith.addf %377, %378 : vector<2x32xf32>
    %380 = arith.mulf %367, %379 : vector<2x32xf32>
    %381 = arith.addf %376, %380 : vector<2x32xf32>
    %382 = math.tanh %381 : vector<2x32xf32>
    %cst_102 = arith.constant 1.000000e+00 : f32
    %383 = vector.broadcast %cst_102 : f32 to vector<2x32xf32>
    %384 = arith.subf %383, %375 : vector<2x32xf32>
    %385 = arith.mulf %384, %382 : vector<2x32xf32>
    %386 = arith.mulf %375, %355 : vector<2x32xf32>
    %387 = arith.addf %385, %386 : vector<2x32xf32>
    %c3_i32_103 = arith.constant 3 : i32
    %c2_i32_104 = arith.constant 2 : i32
    %388 = arith.muli %c3_i32_103, %c2_i32_104 : i32
    %389 = arith.index_cast %388 : i32 to index
    %c0_105 = arith.constant 0 : index
    %390 = vector.load %arg16[%389, %c0_105] : memref<16x96xf32, #tpu.memory_space<vmem>>, vector<2x96xf32>
    %cst_106 = arith.constant dense<0.000000e+00> : vector<2x96xf32>
    %391 = tpu.matmul %387, %289, %cst_106 {dimension_numbers = #tpu.dot_dimension_numbers<[1], [0], [0], [1], [0, 0, 1, 1], [], []>} : vector<2x32xf32>, vector<32x96xf32>, vector<2x96xf32> -> vector<2x96xf32>
    %392 = vector.extract_strided_slice %390 {offsets = [0, 0], sizes = [2, 32], strides = [1, 1]} : vector<2x96xf32> to vector<2x32xf32>
    %393 = vector.extract_strided_slice %391 {offsets = [0, 0], sizes = [2, 32], strides = [1, 1]} : vector<2x96xf32> to vector<2x32xf32>
    %394 = arith.addf %392, %393 : vector<2x32xf32>
    %395 = arith.negf %394 : vector<2x32xf32>
    %396 = math.exp %395 : vector<2x32xf32>
    %cst_107 = arith.constant 1.000000e+00 : f32
    %397 = vector.broadcast %cst_107 : f32 to vector<2x32xf32>
    %398 = arith.addf %397, %396 : vector<2x32xf32>
    %399 = arith.divf %397, %398 : vector<2x32xf32>
    %400 = vector.extract_strided_slice %390 {offsets = [0, 32], sizes = [2, 32], strides = [1, 1]} : vector<2x96xf32> to vector<2x32xf32>
    %401 = vector.extract_strided_slice %391 {offsets = [0, 32], sizes = [2, 32], strides = [1, 1]} : vector<2x96xf32> to vector<2x32xf32>
    %402 = arith.addf %400, %401 : vector<2x32xf32>
    %403 = arith.negf %402 : vector<2x32xf32>
    %404 = math.exp %403 : vector<2x32xf32>
    %cst_108 = arith.constant 1.000000e+00 : f32
    %405 = vector.broadcast %cst_108 : f32 to vector<2x32xf32>
    %406 = arith.addf %405, %404 : vector<2x32xf32>
    %407 = arith.divf %405, %406 : vector<2x32xf32>
    %408 = vector.extract_strided_slice %390 {offsets = [0, 64], sizes = [2, 32], strides = [1, 1]} : vector<2x96xf32> to vector<2x32xf32>
    %409 = vector.extract_strided_slice %391 {offsets = [0, 64], sizes = [2, 32], strides = [1, 1]} : vector<2x96xf32> to vector<2x32xf32>
    %410 = vector.broadcast %290 : vector<1x32xf32> to vector<2x32xf32>
    %411 = arith.addf %409, %410 : vector<2x32xf32>
    %412 = arith.mulf %399, %411 : vector<2x32xf32>
    %413 = arith.addf %408, %412 : vector<2x32xf32>
    %414 = math.tanh %413 : vector<2x32xf32>
    %cst_109 = arith.constant 1.000000e+00 : f32
    %415 = vector.broadcast %cst_109 : f32 to vector<2x32xf32>
    %416 = arith.subf %415, %407 : vector<2x32xf32>
    %417 = arith.mulf %416, %414 : vector<2x32xf32>
    %418 = arith.mulf %407, %387 : vector<2x32xf32>
    %419 = arith.addf %417, %418 : vector<2x32xf32>
    %c4_i32_110 = arith.constant 4 : i32
    %c2_i32_111 = arith.constant 2 : i32
    %420 = arith.muli %c4_i32_110, %c2_i32_111 : i32
    %421 = arith.index_cast %420 : i32 to index
    %c0_112 = arith.constant 0 : index
    %422 = vector.load %arg16[%421, %c0_112] : memref<16x96xf32, #tpu.memory_space<vmem>>, vector<2x96xf32>
    %cst_113 = arith.constant dense<0.000000e+00> : vector<2x96xf32>
    %423 = tpu.matmul %419, %289, %cst_113 {dimension_numbers = #tpu.dot_dimension_numbers<[1], [0], [0], [1], [0, 0, 1, 1], [], []>} : vector<2x32xf32>, vector<32x96xf32>, vector<2x96xf32> -> vector<2x96xf32>
    %424 = vector.extract_strided_slice %422 {offsets = [0, 0], sizes = [2, 32], strides = [1, 1]} : vector<2x96xf32> to vector<2x32xf32>
    %425 = vector.extract_strided_slice %423 {offsets = [0, 0], sizes = [2, 32], strides = [1, 1]} : vector<2x96xf32> to vector<2x32xf32>
    %426 = arith.addf %424, %425 : vector<2x32xf32>
    %427 = arith.negf %426 : vector<2x32xf32>
    %428 = math.exp %427 : vector<2x32xf32>
    %cst_114 = arith.constant 1.000000e+00 : f32
    %429 = vector.broadcast %cst_114 : f32 to vector<2x32xf32>
    %430 = arith.addf %429, %428 : vector<2x32xf32>
    %431 = arith.divf %429, %430 : vector<2x32xf32>
    %432 = vector.extract_strided_slice %422 {offsets = [0, 32], sizes = [2, 32], strides = [1, 1]} : vector<2x96xf32> to vector<2x32xf32>
    %433 = vector.extract_strided_slice %423 {offsets = [0, 32], sizes = [2, 32], strides = [1, 1]} : vector<2x96xf32> to vector<2x32xf32>
    %434 = arith.addf %432, %433 : vector<2x32xf32>
    %435 = arith.negf %434 : vector<2x32xf32>
    %436 = math.exp %435 : vector<2x32xf32>
    %cst_115 = arith.constant 1.000000e+00 : f32
    %437 = vector.broadcast %cst_115 : f32 to vector<2x32xf32>
    %438 = arith.addf %437, %436 : vector<2x32xf32>
    %439 = arith.divf %437, %438 : vector<2x32xf32>
    %440 = vector.extract_strided_slice %422 {offsets = [0, 64], sizes = [2, 32], strides = [1, 1]} : vector<2x96xf32> to vector<2x32xf32>
    %441 = vector.extract_strided_slice %423 {offsets = [0, 64], sizes = [2, 32], strides = [1, 1]} : vector<2x96xf32> to vector<2x32xf32>
    %442 = vector.broadcast %290 : vector<1x32xf32> to vector<2x32xf32>
    %443 = arith.addf %441, %442 : vector<2x32xf32>
    %444 = arith.mulf %431, %443 : vector<2x32xf32>
    %445 = arith.addf %440, %444 : vector<2x32xf32>
    %446 = math.tanh %445 : vector<2x32xf32>
    %cst_116 = arith.constant 1.000000e+00 : f32
    %447 = vector.broadcast %cst_116 : f32 to vector<2x32xf32>
    %448 = arith.subf %447, %439 : vector<2x32xf32>
    %449 = arith.mulf %448, %446 : vector<2x32xf32>
    %450 = arith.mulf %439, %419 : vector<2x32xf32>
    %451 = arith.addf %449, %450 : vector<2x32xf32>
    %c5_i32_117 = arith.constant 5 : i32
    %c2_i32_118 = arith.constant 2 : i32
    %452 = arith.muli %c5_i32_117, %c2_i32_118 : i32
    %453 = arith.index_cast %452 : i32 to index
    %c0_119 = arith.constant 0 : index
    %454 = vector.load %arg16[%453, %c0_119] : memref<16x96xf32, #tpu.memory_space<vmem>>, vector<2x96xf32>
    %cst_120 = arith.constant dense<0.000000e+00> : vector<2x96xf32>
    %455 = tpu.matmul %451, %289, %cst_120 {dimension_numbers = #tpu.dot_dimension_numbers<[1], [0], [0], [1], [0, 0, 1, 1], [], []>} : vector<2x32xf32>, vector<32x96xf32>, vector<2x96xf32> -> vector<2x96xf32>
    %456 = vector.extract_strided_slice %454 {offsets = [0, 0], sizes = [2, 32], strides = [1, 1]} : vector<2x96xf32> to vector<2x32xf32>
    %457 = vector.extract_strided_slice %455 {offsets = [0, 0], sizes = [2, 32], strides = [1, 1]} : vector<2x96xf32> to vector<2x32xf32>
    %458 = arith.addf %456, %457 : vector<2x32xf32>
    %459 = arith.negf %458 : vector<2x32xf32>
    %460 = math.exp %459 : vector<2x32xf32>
    %cst_121 = arith.constant 1.000000e+00 : f32
    %461 = vector.broadcast %cst_121 : f32 to vector<2x32xf32>
    %462 = arith.addf %461, %460 : vector<2x32xf32>
    %463 = arith.divf %461, %462 : vector<2x32xf32>
    %464 = vector.extract_strided_slice %454 {offsets = [0, 32], sizes = [2, 32], strides = [1, 1]} : vector<2x96xf32> to vector<2x32xf32>
    %465 = vector.extract_strided_slice %455 {offsets = [0, 32], sizes = [2, 32], strides = [1, 1]} : vector<2x96xf32> to vector<2x32xf32>
    %466 = arith.addf %464, %465 : vector<2x32xf32>
    %467 = arith.negf %466 : vector<2x32xf32>
    %468 = math.exp %467 : vector<2x32xf32>
    %cst_122 = arith.constant 1.000000e+00 : f32
    %469 = vector.broadcast %cst_122 : f32 to vector<2x32xf32>
    %470 = arith.addf %469, %468 : vector<2x32xf32>
    %471 = arith.divf %469, %470 : vector<2x32xf32>
    %472 = vector.extract_strided_slice %454 {offsets = [0, 64], sizes = [2, 32], strides = [1, 1]} : vector<2x96xf32> to vector<2x32xf32>
    %473 = vector.extract_strided_slice %455 {offsets = [0, 64], sizes = [2, 32], strides = [1, 1]} : vector<2x96xf32> to vector<2x32xf32>
    %474 = vector.broadcast %290 : vector<1x32xf32> to vector<2x32xf32>
    %475 = arith.addf %473, %474 : vector<2x32xf32>
    %476 = arith.mulf %463, %475 : vector<2x32xf32>
    %477 = arith.addf %472, %476 : vector<2x32xf32>
    %478 = math.tanh %477 : vector<2x32xf32>
    %cst_123 = arith.constant 1.000000e+00 : f32
    %479 = vector.broadcast %cst_123 : f32 to vector<2x32xf32>
    %480 = arith.subf %479, %471 : vector<2x32xf32>
    %481 = arith.mulf %480, %478 : vector<2x32xf32>
    %482 = arith.mulf %471, %451 : vector<2x32xf32>
    %483 = arith.addf %481, %482 : vector<2x32xf32>
    %c6_i32_124 = arith.constant 6 : i32
    %c2_i32_125 = arith.constant 2 : i32
    %484 = arith.muli %c6_i32_124, %c2_i32_125 : i32
    %485 = arith.index_cast %484 : i32 to index
    %c0_126 = arith.constant 0 : index
    %486 = vector.load %arg16[%485, %c0_126] : memref<16x96xf32, #tpu.memory_space<vmem>>, vector<2x96xf32>
    %cst_127 = arith.constant dense<0.000000e+00> : vector<2x96xf32>
    %487 = tpu.matmul %483, %289, %cst_127 {dimension_numbers = #tpu.dot_dimension_numbers<[1], [0], [0], [1], [0, 0, 1, 1], [], []>} : vector<2x32xf32>, vector<32x96xf32>, vector<2x96xf32> -> vector<2x96xf32>
    %488 = vector.extract_strided_slice %486 {offsets = [0, 0], sizes = [2, 32], strides = [1, 1]} : vector<2x96xf32> to vector<2x32xf32>
    %489 = vector.extract_strided_slice %487 {offsets = [0, 0], sizes = [2, 32], strides = [1, 1]} : vector<2x96xf32> to vector<2x32xf32>
    %490 = arith.addf %488, %489 : vector<2x32xf32>
    %491 = arith.negf %490 : vector<2x32xf32>
    %492 = math.exp %491 : vector<2x32xf32>
    %cst_128 = arith.constant 1.000000e+00 : f32
    %493 = vector.broadcast %cst_128 : f32 to vector<2x32xf32>
    %494 = arith.addf %493, %492 : vector<2x32xf32>
    %495 = arith.divf %493, %494 : vector<2x32xf32>
    %496 = vector.extract_strided_slice %486 {offsets = [0, 32], sizes = [2, 32], strides = [1, 1]} : vector<2x96xf32> to vector<2x32xf32>
    %497 = vector.extract_strided_slice %487 {offsets = [0, 32], sizes = [2, 32], strides = [1, 1]} : vector<2x96xf32> to vector<2x32xf32>
    %498 = arith.addf %496, %497 : vector<2x32xf32>
    %499 = arith.negf %498 : vector<2x32xf32>
    %500 = math.exp %499 : vector<2x32xf32>
    %cst_129 = arith.constant 1.000000e+00 : f32
    %501 = vector.broadcast %cst_129 : f32 to vector<2x32xf32>
    %502 = arith.addf %501, %500 : vector<2x32xf32>
    %503 = arith.divf %501, %502 : vector<2x32xf32>
    %504 = vector.extract_strided_slice %486 {offsets = [0, 64], sizes = [2, 32], strides = [1, 1]} : vector<2x96xf32> to vector<2x32xf32>
    %505 = vector.extract_strided_slice %487 {offsets = [0, 64], sizes = [2, 32], strides = [1, 1]} : vector<2x96xf32> to vector<2x32xf32>
    %506 = vector.broadcast %290 : vector<1x32xf32> to vector<2x32xf32>
    %507 = arith.addf %505, %506 : vector<2x32xf32>
    %508 = arith.mulf %495, %507 : vector<2x32xf32>
    %509 = arith.addf %504, %508 : vector<2x32xf32>
    %510 = math.tanh %509 : vector<2x32xf32>
    %cst_130 = arith.constant 1.000000e+00 : f32
    %511 = vector.broadcast %cst_130 : f32 to vector<2x32xf32>
    %512 = arith.subf %511, %503 : vector<2x32xf32>
    %513 = arith.mulf %512, %510 : vector<2x32xf32>
    %514 = arith.mulf %503, %483 : vector<2x32xf32>
    %515 = arith.addf %513, %514 : vector<2x32xf32>
    %c7_i32_131 = arith.constant 7 : i32
    %c2_i32_132 = arith.constant 2 : i32
    %516 = arith.muli %c7_i32_131, %c2_i32_132 : i32
    %517 = arith.index_cast %516 : i32 to index
    %c0_133 = arith.constant 0 : index
    %518 = vector.load %arg16[%517, %c0_133] : memref<16x96xf32, #tpu.memory_space<vmem>>, vector<2x96xf32>
    %cst_134 = arith.constant dense<0.000000e+00> : vector<2x96xf32>
    %519 = tpu.matmul %515, %289, %cst_134 {dimension_numbers = #tpu.dot_dimension_numbers<[1], [0], [0], [1], [0, 0, 1, 1], [], []>} : vector<2x32xf32>, vector<32x96xf32>, vector<2x96xf32> -> vector<2x96xf32>
    %520 = vector.extract_strided_slice %518 {offsets = [0, 0], sizes = [2, 32], strides = [1, 1]} : vector<2x96xf32> to vector<2x32xf32>
    %521 = vector.extract_strided_slice %519 {offsets = [0, 0], sizes = [2, 32], strides = [1, 1]} : vector<2x96xf32> to vector<2x32xf32>
    %522 = arith.addf %520, %521 : vector<2x32xf32>
    %523 = arith.negf %522 : vector<2x32xf32>
    %524 = math.exp %523 : vector<2x32xf32>
    %cst_135 = arith.constant 1.000000e+00 : f32
    %525 = vector.broadcast %cst_135 : f32 to vector<2x32xf32>
    %526 = arith.addf %525, %524 : vector<2x32xf32>
    %527 = arith.divf %525, %526 : vector<2x32xf32>
    %528 = vector.extract_strided_slice %518 {offsets = [0, 32], sizes = [2, 32], strides = [1, 1]} : vector<2x96xf32> to vector<2x32xf32>
    %529 = vector.extract_strided_slice %519 {offsets = [0, 32], sizes = [2, 32], strides = [1, 1]} : vector<2x96xf32> to vector<2x32xf32>
    %530 = arith.addf %528, %529 : vector<2x32xf32>
    %531 = arith.negf %530 : vector<2x32xf32>
    %532 = math.exp %531 : vector<2x32xf32>
    %cst_136 = arith.constant 1.000000e+00 : f32
    %533 = vector.broadcast %cst_136 : f32 to vector<2x32xf32>
    %534 = arith.addf %533, %532 : vector<2x32xf32>
    %535 = arith.divf %533, %534 : vector<2x32xf32>
    %536 = vector.extract_strided_slice %518 {offsets = [0, 64], sizes = [2, 32], strides = [1, 1]} : vector<2x96xf32> to vector<2x32xf32>
    %537 = vector.extract_strided_slice %519 {offsets = [0, 64], sizes = [2, 32], strides = [1, 1]} : vector<2x96xf32> to vector<2x32xf32>
    %538 = vector.broadcast %290 : vector<1x32xf32> to vector<2x32xf32>
    %539 = arith.addf %537, %538 : vector<2x32xf32>
    %540 = arith.mulf %527, %539 : vector<2x32xf32>
    %541 = arith.addf %536, %540 : vector<2x32xf32>
    %542 = math.tanh %541 : vector<2x32xf32>
    %cst_137 = arith.constant 1.000000e+00 : f32
    %543 = vector.broadcast %cst_137 : f32 to vector<2x32xf32>
    %544 = arith.subf %543, %535 : vector<2x32xf32>
    %545 = arith.mulf %544, %542 : vector<2x32xf32>
    %546 = arith.mulf %535, %515 : vector<2x32xf32>
    %547 = arith.addf %545, %546 : vector<2x32xf32>
    %c8_i32_138 = arith.constant 8 : i32
    %c0_139 = arith.constant 0 : index
    %c0_140 = arith.constant 0 : index
    %548 = vector.load %arg9[%c0_139, %c0_140] : memref<32x64xf32, #tpu.memory_space<vmem>>, vector<32x64xf32>
    %cst_141 = arith.constant dense<0.000000e+00> : vector<2x64xf32>
    %549 = tpu.matmul %547, %548, %cst_141 {dimension_numbers = #tpu.dot_dimension_numbers<[1], [0], [0], [1], [0, 0, 1, 1], [], []>} : vector<2x32xf32>, vector<32x64xf32>, vector<2x64xf32> -> vector<2x64xf32>
    %c0_142 = arith.constant 0 : index
    %c0_143 = arith.constant 0 : index
    %550 = vector.load %arg10[%c0_142, %c0_143] : memref<1x64xf32, #tpu.memory_space<vmem>>, vector<1x64xf32>
    %551 = vector.broadcast %550 : vector<1x64xf32> to vector<2x64xf32>
    %552 = arith.addf %549, %551 : vector<2x64xf32>
    %cst_144 = arith.constant 0.000000e+00 : f32
    %553 = vector.broadcast %cst_144 : f32 to vector<2x64xf32>
    %554 = arith.maximumf %552, %553 : vector<2x64xf32>
    %c0_145 = arith.constant 0 : index
    %c0_146 = arith.constant 0 : index
    %555 = vector.load %arg11[%c0_145, %c0_146] : memref<64x32xf32, #tpu.memory_space<vmem>>, vector<64x32xf32>
    %cst_147 = arith.constant dense<0.000000e+00> : vector<2x32xf32>
    %556 = tpu.matmul %554, %555, %cst_147 {dimension_numbers = #tpu.dot_dimension_numbers<[1], [0], [0], [1], [0, 0, 1, 1], [], []>} : vector<2x64xf32>, vector<64x32xf32>, vector<2x32xf32> -> vector<2x32xf32>
    %c0_148 = arith.constant 0 : index
    %c0_149 = arith.constant 0 : index
    %557 = vector.load %arg12[%c0_148, %c0_149] : memref<1x32xf32, #tpu.memory_space<vmem>>, vector<1x32xf32>
    %558 = vector.broadcast %557 : vector<1x32xf32> to vector<2x32xf32>
    %559 = arith.addf %556, %558 : vector<2x32xf32>
    %cst_150 = arith.constant 0.000000e+00 : f32
    %560 = vector.broadcast %cst_150 : f32 to vector<2x32xf32>
    %561 = arith.maximumf %559, %560 : vector<2x32xf32>
    %c0_151 = arith.constant 0 : index
    %c0_152 = arith.constant 0 : index
    %562 = vector.load %arg13[%c0_151, %c0_152] : memref<32x4xf32, #tpu.memory_space<vmem>>, vector<32x4xf32>
    %cst_153 = arith.constant dense<0.000000e+00> : vector<2x4xf32>
    %563 = tpu.matmul %561, %562, %cst_153 {dimension_numbers = #tpu.dot_dimension_numbers<[1], [0], [0], [1], [0, 0, 1, 1], [], []>} : vector<2x32xf32>, vector<32x4xf32>, vector<2x4xf32> -> vector<2x4xf32>
    %c0_154 = arith.constant 0 : index
    %c0_155 = arith.constant 0 : index
    %564 = vector.load %arg14[%c0_154, %c0_155] : memref<1x4xf32, #tpu.memory_space<vmem>>, vector<1x4xf32>
    %565 = vector.broadcast %564 : vector<1x4xf32> to vector<2x4xf32>
    %566 = arith.addf %563, %565 : vector<2x4xf32>
    %c0_156 = arith.constant 0 : index
    %c0_157 = arith.constant 0 : index
    %567 = vector.load %arg15[%c0_156, %c0_157] : memref<2x4xf32, #tpu.memory_space<vmem>>, vector<2x4xf32>
    tpu.vector_store %arg15[%c0_156, %c0_157], %566 {strides = array<i32>} : memref<2x4xf32, #tpu.memory_space<vmem>>, vector<2x4xf32>,
    return
  }
}

</mosaic_0001>

<llo_original>
// kernel: gru_net_forward.1
$region0: #{gru_net_forward.1}
  #allocation0 [shape = 'u32[]', space=smem, size = 0x4, offset = 0x4, fixed_abs, tag = 'smem constant byte address 0x4 - core index']
  #allocation1 [shape = 'u32[144,128]{1,0:T(1,128)}', space=vmem, size = 0x12000, scoped, tag = 'internal scratch']
  #allocation2 [shape = 'f32[16,96]{1,0:T(8,128)}', space=vmem, size = 0x2000, scoped, tag = 'scratch operand']
  #allocation3 [shape = 'f32[16,32]{1,0:T(8,128)}', space=vmem, size = 0x2000, scoped, tag = 'scratch operand']
  %s0 = inlined_call_operand.vmem [shape: f32[16,16], index: 0, kind: input, shape index: {}]
  %s1 = inlined_call_operand.vmem [shape: f32[16,96], index: 1, kind: input, shape index: {}]
  %s2 = inlined_call_operand.vmem [shape: f32[32,96], index: 2, kind: input, shape index: {}]
  %s3 = inlined_call_operand.vmem [shape: f32[1,96], index: 3, kind: input, shape index: {}]
  %s4 = inlined_call_operand.vmem [shape: f32[1,32], index: 4, kind: input, shape index: {}]
  %s5 = inlined_call_operand.vmem [shape: f32[32,96], index: 5, kind: input, shape index: {}]
  %s6 = inlined_call_operand.vmem [shape: f32[32,96], index: 6, kind: input, shape index: {}]
  %s7 = inlined_call_operand.vmem [shape: f32[1,96], index: 7, kind: input, shape index: {}]
  %s8 = inlined_call_operand.vmem [shape: f32[1,32], index: 8, kind: input, shape index: {}]
  %s9 = inlined_call_operand.vmem [shape: f32[32,64], index: 9, kind: input, shape index: {}]
  %s10 = inlined_call_operand.vmem [shape: f32[1,64], index: 10, kind: input, shape index: {}]
  %s11 = inlined_call_operand.vmem [shape: f32[64,32], index: 11, kind: input, shape index: {}]
  %s12 = inlined_call_operand.vmem [shape: f32[1,32], index: 12, kind: input, shape index: {}]
  %s13 = inlined_call_operand.vmem [shape: f32[32,4], index: 13, kind: input, shape index: {}]
  %s14 = inlined_call_operand.vmem [shape: f32[1,4], index: 14, kind: input, shape index: {}]
  %s15 = inlined_call_operand.hbm [shape: f32[2,4], index: 15, kind: output, shape index: {}]
  %s16 = sld [smem:[#allocation0]]
  $region70: #{gru_net_forward.1} parent=0
    _
  %s18 = ssub.s32 1, %s16
  %s19 = scalar_select 0, %s18, %s16
  $region1: #{gru_net_forward.1} parent=0
    #allocation4 [shape = 'u8[1024]{0}', space=vmem, size = 0x400, scoped, tag = 'output window, operand 0, single buffered']
    #allocation5 [shape = 's32[1]{0}', space=sflag, size = 0x4, scoped, tag = 'scoped memory for gru_net_forward.1']
    %20 = vsyncpa [#allocation5], 0
    // Predicated region
    $region2: #{gru_net_forward.1} parent=1 // pred_check
      _
    $region3: #{gru_net_forward.1} parent=1 // pred_check_branch
      %22 = sbr.rel (0) target = $region5
    $region4: #{gru_net_forward.1} parent=1 // pred_region
      _
    $region5: #{gru_net_forward.1} parent=1 // pred_fallthru
      _
    // Predicated region
    $region6: #{gru_net_forward.1} parent=1 // pred_check
      _
    $region7: #{gru_net_forward.1} parent=1 // pred_check_branch
      %24 = sbr.rel (0) target = $region9
    $region8: #{gru_net_forward.1} parent=1 // pred_region
      _
    $region9: #{gru_net_forward.1} parent=1 // pred_fallthru
      _
    // Predicated region
    $region10: #{gru_net_forward.1} parent=1 // pred_check
      _
    $region11: #{gru_net_forward.1} parent=1 // pred_check_branch
      %26 = sbr.rel (0) target = $region13
    $region12: #{gru_net_forward.1} parent=1 // pred_region
      _
    $region13: #{gru_net_forward.1} parent=1 // pred_fallthru
      _
    // Predicated region
    $region14: #{gru_net_forward.1} parent=1 // pred_check
      _
    $region15: #{gru_net_forward.1} parent=1 // pred_check_branch
      %28 = sbr.rel (0) target = $region17
    $region16: #{gru_net_forward.1} parent=1 // pred_region
      _
    $region17: #{gru_net_forward.1} parent=1 // pred_fallthru
      _
    // Predicated region
    $region18: #{gru_net_forward.1} parent=1 // pred_check
      _
    $region19: #{gru_net_forward.1} parent=1 // pred_check_branch
      %30 = sbr.rel (0) target = $region21
    $region20: #{gru_net_forward.1} parent=1 // pred_region
      _
    $region21: #{gru_net_forward.1} parent=1 // pred_fallthru
      _
    // Predicated region
    $region22: #{gru_net_forward.1} parent=1 // pred_check
      _
    $region23: #{gru_net_forward.1} parent=1 // pred_check_branch
      %32 = sbr.rel (0) target = $region25
    $region24: #{gru_net_forward.1} parent=1 // pred_region
      _
    $region25: #{gru_net_forward.1} parent=1 // pred_fallthru
      _
    // Predicated region
    $region26: #{gru_net_forward.1} parent=1 // pred_check
      _
    $region27: #{gru_net_forward.1} parent=1 // pred_check_branch
      %34 = sbr.rel (0) target = $region29
    $region28: #{gru_net_forward.1} parent=1 // pred_region
      _
    $region29: #{gru_net_forward.1} parent=1 // pred_fallthru
      _
    // Predicated region
    $region30: #{gru_net_forward.1} parent=1 // pred_check
      _
    $region31: #{gru_net_forward.1} parent=1 // pred_check_branch
      %36 = sbr.rel (0) target = $region33
    $region32: #{gru_net_forward.1} parent=1 // pred_region
      _
    $region33: #{gru_net_forward.1} parent=1 // pred_fallthru
      _
    // Predicated region
    $region34: #{gru_net_forward.1} parent=1 // pred_check
      _
    $region35: #{gru_net_forward.1} parent=1 // pred_check_branch
      %38 = sbr.rel (0) target = $region37
    $region36: #{gru_net_forward.1} parent=1 // pred_region
      _
    $region37: #{gru_net_forward.1} parent=1 // pred_fallthru
      _
    // Predicated region
    $region38: #{gru_net_forward.1} parent=1 // pred_check
      _
    $region39: #{gru_net_forward.1} parent=1 // pred_check_branch
      %40 = sbr.rel (0) target = $region41
    $region40: #{gru_net_forward.1} parent=1 // pred_region
      _
    $region41: #{gru_net_forward.1} parent=1 // pred_fallthru
      _
    // Predicated region
    $region42: #{gru_net_forward.1} parent=1 // pred_check
      _
    $region43: #{gru_net_forward.1} parent=1 // pred_check_branch
      %42 = sbr.rel (0) target = $region45
    $region44: #{gru_net_forward.1} parent=1 // pred_region
      _
    $region45: #{gru_net_forward.1} parent=1 // pred_fallthru
      _
    // Predicated region
    $region46: #{gru_net_forward.1} parent=1 // pred_check
      _
    $region47: #{gru_net_forward.1} parent=1 // pred_check_branch
      %44 = sbr.rel (0) target = $region49
    $region48: #{gru_net_forward.1} parent=1 // pred_region
      _
    $region49: #{gru_net_forward.1} parent=1 // pred_fallthru
      _
    // Predicated region
    $region50: #{gru_net_forward.1} parent=1 // pred_check
      _
    $region51: #{gru_net_forward.1} parent=1 // pred_check_branch
      %46 = sbr.rel (0) target = $region53
    $region52: #{gru_net_forward.1} parent=1 // pred_region
      _
    $region53: #{gru_net_forward.1} parent=1 // pred_fallthru
      _
    // Predicated region
    $region54: #{gru_net_forward.1} parent=1 // pred_check
      _
    $region55: #{gru_net_forward.1} parent=1 // pred_check_branch
      %48 = sbr.rel (0) target = $region57
    $region56: #{gru_net_forward.1} parent=1 // pred_region
      _
    $region57: #{gru_net_forward.1} parent=1 // pred_fallthru
      _
    // Predicated region
    $region58: #{gru_net_forward.1} parent=1 // pred_check
      _
    $region59: #{gru_net_forward.1} parent=1 // pred_check_branch
      %50 = sbr.rel (0) target = $region61
    $region60: #{gru_net_forward.1} parent=1 // pred_region
      _
    $region61: #{gru_net_forward.1} parent=1 // pred_fallthru
      _
    %v51 = vld [vmem:[%s0] sm:$0xff]
    %v52 = vld [vmem:[%s0 + $0x8] sm:$0xff]
    %v53 = vld [vmem:[%s1] sm:$0xff]
    %v54 = vld [vmem:[%s1 + $0x8] sm:$0xff]
    %v55 = vld [vmem:[%s3] sm:$0x1]
    %v57 = vlaneseq
    %v58 = vshrl.u32 %v57, 7
    %v59 = vsub.s32 0, %v58
    %v60 = vrot.slane %v55, %v59
    %vm62 = vcmask 130048
    %v64 = vsel %vm62, %v51, 0
    %v67 = vsel %vm62, %v52, 0
    %69 = vmatprep.subr.mxu0 0.0
    %70 = vmatpush1.msra.mxu0 %v53
    %71 = vmatprep.subr.mxu0 0.0
    %72 = vmatpush1.msra.mxu0 %v54
    %73 = vmatprep.subr.mxu0 0.0
    %74 = vmatpush1.msra.mxu0 0.0
    %75 = vmatprep.subr.mxu0 0.0
    %76 = vmatpush1.msra.mxu0 0.0
    %77 = vmatprep.subr.mxu0 0.0
    %78 = vmatpush1.msra.mxu0 0.0
    %79 = vmatprep.subr.mxu0 0.0
    %80 = vmatpush1.msra.mxu0 0.0
    %81 = vmatprep.subr.mxu0 0.0
    %82 = vmatpush1.msra.mxu0 0.0
    %83 = vmatprep.subr.mxu0 0.0
    %84 = vmatpush1.msra.mxu0 0.0
    %85 = vmatprep.subr.mxu0 0.0
    %86 = vmatpush1.msra.mxu0 0.0
    %87 = vmatprep.subr.mxu0 0.0
    %88 = vmatpush1.msra.mxu0 0.0
    %89 = vmatprep.subr.mxu0 0.0
    %90 = vmatpush1.msra.mxu0 0.0
    %91 = vmatprep.subr.mxu0 0.0
    %92 = vmatpush1.msra.mxu0 0.0
    %93 = vmatprep.subr.mxu0 0.0
    %94 = vmatpush1.msra.mxu0 0.0
    %95 = vmatprep.subr.mxu0 0.0
    %96 = vmatpush1.msra.mxu0 0.0
    %97 = vmatprep.subr.mxu0 0.0
    %98 = vmatpush1.msra.mxu0 0.0
    %99 = vmatprep.subr.mxu0 0.0
    %100 = vmatpush1.msra.mxu0 0.0
    %101 = vmatprep.subr.mxu0 0.0
    %102 = vmatpush1.msra.mxu0 0.0
    %103 = vmatprep.subr.mxu0 0.0
    %104 = vmatpush1.msra.mxu0 0.0
    %105 = vmatprep.subr.mxu0 0.0
    %106 = vmatpush1.msra.mxu0 0.0
    %107 = vmatprep.subr.mxu0 0.0
    %108 = vmatpush1.msra.mxu0 0.0
    %109 = vmatprep.subr.mxu0 0.0
    %110 = vmatpush1.msra.mxu0 0.0
    %111 = vmatprep.subr.mxu0 0.0
    %112 = vmatpush1.msra.mxu0 0.0
    %113 = vmatprep.subr.mxu0 0.0
    %114 = vmatpush1.msra.mxu0 0.0
    %115 = vmatprep.subr.mxu0 0.0
    %116 = vmatpush1.msra.mxu0 0.0
    %117 = vmatprep.subr.mxu0 0.0
    %118 = vmatpush1.msra.mxu0 0.0
    %119 = vmatprep.subr.mxu0 0.0
    %120 = vmatpush1.msra.mxu0 0.0
    %121 = vmatprep.subr.mxu0 0.0
    %122 = vmatpush1.msra.mxu0 0.0
    %123 = vmatprep.subr.mxu0 0.0
    %124 = vmatpush1.msra.mxu0 0.0
    %125 = vmatprep.subr.mxu0 0.0
    %126 = vmatpush1.msra.mxu0 0.0
    %127 = vmatprep.subr.mxu0 0.0
    %128 = vmatpush1.msra.mxu0 0.0
    %129 = vmatprep.subr.mxu0 0.0
    %130 = vmatpush1.msra.mxu0 0.0
    %131 = vmatprep.subr.mxu0 0.0
    %132 = vmatpush1.msra.mxu0 0.0
    %133 = vmatprep.mubr.f32.mxu0 0.0
    %134 = vmatmul.mubr.f32.gmra.mrb[0].mxu0 %v64
    %v135 = vpop.f32.mrb[0].mxu0
    %v136 = vadd.f32 %v60, %v135
    %v137 = vpop.f32.mrb[0].mxu0
    %138 = vmatprep.mubr.f32.mxu0 0.0
    %139 = vmatmul.mubr.f32.gmra.mrb[0].mxu0 %v67
    %v140 = vpop.f32.mrb[0].mxu0
    %v141 = vadd.f32 %v60, %v140
    %v142 = vpop.f32.mrb[0].mxu0
    %143 = vdwg.mxu0
    %vm144 = vcmask 785408
    %145 = vst.msk [vmem:[#allocation2] sm:$0xff] %vm144, %v136
    %146 = vst.msk [vmem:[#allocation2 + $0x8] sm:$0xff] %vm144, %v141
    %v147 = vld [vmem:[%s2] sm:$0xff]
    %v148 = vld [vmem:[%s2 + $0x8] sm:$0xff]
    %v149 = vld [vmem:[%s2 + $0x10] sm:$0xff]
    %v150 = vld [vmem:[%s2 + $0x18] sm:$0xff]
    %v151 = vld [vmem:[%s4] sm:$0x1]
    %v152 = vld [vmem:[#allocation2] sm:$0x3]
    %vm153 = vcmask 261120
    %v155 = vsel %vm153, 0.0, 0
    %157 = vmatprep.subr.mxu0 0.0
    %158 = vmatpush1.msra.mxu0 %v147
    %159 = vmatprep.subr.mxu0 0.0
    %160 = vmatpush1.msra.mxu0 %v148
    %161 = vmatprep.subr.mxu0 0.0
    %162 = vmatpush1.msra.mxu0 %v149
    %163 = vmatprep.subr.mxu0 0.0
    %164 = vmatpush1.msra.mxu0 %v150
    %165 = vmatprep.subr.mxu0 0.0
    %166 = vmatpush1.msra.mxu0 0.0
    %167 = vmatprep.subr.mxu0 0.0
    %168 = vmatpush1.msra.mxu0 0.0
    %169 = vmatprep.subr.mxu0 0.0
    %170 = vmatpush1.msra.mxu0 0.0
    %171 = vmatprep.subr.mxu0 0.0
    %172 = vmatpush1.msra.mxu0 0.0
    %173 = vmatprep.subr.mxu0 0.0
    %174 = vmatpush1.msra.mxu0 0.0
    %175 = vmatprep.subr.mxu0 0.0
    %176 = vmatpush1.msra.mxu0 0.0
    %177 = vmatprep.subr.mxu0 0.0
    %178 = vmatpush1.msra.mxu0 0.0
    %179 = vmatprep.subr.mxu0 0.0
    %180 = vmatpush1.msra.mxu0 0.0
    %181 = vmatprep.subr.mxu0 0.0
    %182 = vmatpush1.msra.mxu0 0.0
    %183 = vmatprep.subr.mxu0 0.0
    %184 = vmatpush1.msra.mxu0 0.0
    %185 = vmatprep.subr.mxu0 0.0
    %186 = vmatpush1.msra.mxu0 0.0
    %187 = vmatprep.subr.mxu0 0.0
    %188 = vmatpush1.msra.mxu0 0.0
    %189 = vmatprep.subr.mxu0 0.0
    %190 = vmatpush1.msra.mxu0 0.0
    %191 = vmatprep.subr.mxu0 0.0
    %192 = vmatpush1.msra.mxu0 0.0
    %193 = vmatprep.subr.mxu0 0.0
    %194 = vmatpush1.msra.mxu0 0.0
    %195 = vmatprep.subr.mxu0 0.0
    %196 = vmatpush1.msra.mxu0 0.0
    %197 = vmatprep.subr.mxu0 0.0
    %198 = vmatpush1.msra.mxu0 0.0
    %199 = vmatprep.subr.mxu0 0.0
    %200 = vmatpush1.msra.mxu0 0.0
    %201 = vmatprep.subr.mxu0 0.0
    %202 = vmatpush1.msra.mxu0 0.0
    %203 = vmatprep.subr.mxu0 0.0
    %204 = vmatpush1.msra.mxu0 0.0
    %205 = vmatprep.subr.mxu0 0.0
    %206 = vmatpush1.msra.mxu0 0.0
    %207 = vmatprep.subr.mxu0 0.0
    %208 = vmatpush1.msra.mxu0 0.0
    %209 = vmatprep.subr.mxu0 0.0
    %210 = vmatpush1.msra.mxu0 0.0
    %211 = vmatprep.subr.mxu0 0.0
    %212 = vmatpush1.msra.mxu0 0.0
    %213 = vmatprep.subr.mxu0 0.0
    %214 = vmatpush1.msra.mxu0 0.0
    %215 = vmatprep.subr.mxu0 0.0
    %216 = vmatpush1.msra.mxu0 0.0
    %217 = vmatprep.subr.mxu0 0.0
    %218 = vmatpush1.msra.mxu0 0.0
    %219 = vmatprep.subr.mxu0 0.0
    %220 = vmatpush1.msra.mxu0 0.0
    %221 = vmatprep.mubr.f32.mxu0 0.0
    %222 = vmatmul.mubr.f32.gmra.mrb[0].mxu0 %v155
    %v223 = vpop.f32.mrb[0].mxu0
    %v224 = vadd.f32 0.0, %v223
    %v225 = vpop.f32.mrb[0].mxu0
    %226 = vdwg.mxu0
    %v227 = vadd.f32 %v152, %v224
    %v228 = vxor.u32 %v227, 2147483648
    %v229 = vmul.f32 %v228, 1.442695
    %v230 = vpow.pop %v229
    %v231 = vadd.f32 %v230, 1.0
    %v232 = vrcp.pop %v231
    %v233 = vmul.f32 1.0, %v232
    %v235 = vlaneseq
    %v236 = vshrl.u32 %v235, 7
    %v237 = vsub.s32 0, %v236
    %v238 = vrot.slane %v151, %v237
    %239 = vrot.lane.b32.xlu0 %v238, 64
    %v240 = vpop.permute.xlu0 %239
    %v242 = vadd.f32 %v224, %v240
    %244 = vrot.lane.b32.xlu0 %v242, 64
    %v245 = vpop.permute.xlu0 %244
    %v247 = vmul.f32 %v233, %v245
    %249 = vrot.lane.b32.xlu0 %v247, 64
    %v250 = vpop.permute.xlu0 %249
    %v252 = vadd.f32 %v152, %v250
    %v253 = vtanh.pop %v252
    %v254 = vsub.f32 1.0, %v233
    %256 = vrot.lane.b32.xlu0 %v253, 96
    %v257 = vpop.permute.xlu0 %256
    %v259 = vmul.f32 %v254, %v257
    %v260 = vmul.f32 %v233, 0.0
    %v261 = vadd.f32 %v259, %v260
    %263 = vrot.lane.b32.xlu0 %v261, 96
    %v264 = vpop.permute.xlu0 %263
    %vm266 = vcmask 254976
    %267 = vst.msk [vmem:[#allocation3] sm:$0x3] %vm266, %v264
    %v268 = vld [vmem:[#allocation2 + $0x2] sm:$0x3]
    %v269 = vsel %vm153, %v264, 0
    %271 = vmatprep.subr.mxu0 0.0
    %272 = vmatpush1.msra.mxu0 %v147
    %273 = vmatprep.subr.mxu0 0.0
    %274 = vmatpush1.msra.mxu0 %v148
    %275 = vmatprep.subr.mxu0 0.0
    %276 = vmatpush1.msra.mxu0 %v149
    %277 = vmatprep.subr.mxu0 0.0
    %278 = vmatpush1.msra.mxu0 %v150
    %279 = vmatprep.subr.mxu0 0.0
    %280 = vmatpush1.msra.mxu0 0.0
    %281 = vmatprep.subr.mxu0 0.0
    %282 = vmatpush1.msra.mxu0 0.0
    %283 = vmatprep.subr.mxu0 0.0
    %284 = vmatpush1.msra.mxu0 0.0
    %285 = vmatprep.subr.mxu0 0.0
    %286 = vmatpush1.msra.mxu0 0.0
    %287 = vmatprep.subr.mxu0 0.0
    %288 = vmatpush1.msra.mxu0 0.0
    %289 = vmatprep.subr.mxu0 0.0
    %290 = vmatpush1.msra.mxu0 0.0
    %291 = vmatprep.subr.mxu0 0.0
    %292 = vmatpush1.msra.mxu0 0.0
    %293 = vmatprep.subr.mxu0 0.0
    %294 = vmatpush1.msra.mxu0 0.0
    %295 = vmatprep.subr.mxu0 0.0
    %296 = vmatpush1.msra.mxu0 0.0
    %297 = vmatprep.subr.mxu0 0.0
    %298 = vmatpush1.msra.mxu0 0.0
    %299 = vmatprep.subr.mxu0 0.0
    %300 = vmatpush1.msra.mxu0 0.0
    %301 = vmatprep.subr.mxu0 0.0
    %302 = vmatpush1.msra.mxu0 0.0
    %303 = vmatprep.subr.mxu0 0.0
    %304 = vmatpush1.msra.mxu0 0.0
    %305 = vmatprep.subr.mxu0 0.0
    %306 = vmatpush1.msra.mxu0 0.0
    %307 = vmatprep.subr.mxu0 0.0
    %308 = vmatpush1.msra.mxu0 0.0
    %309 = vmatprep.subr.mxu0 0.0
    %310 = vmatpush1.msra.mxu0 0.0
    %311 = vmatprep.subr.mxu0 0.0
    %312 = vmatpush1.msra.mxu0 0.0
    %313 = vmatprep.subr.mxu0 0.0
    %314 = vmatpush1.msra.mxu0 0.0
    %315 = vmatprep.subr.mxu0 0.0
    %316 = vmatpush1.msra.mxu0 0.0
    %317 = vmatprep.subr.mxu0 0.0
    %318 = vmatpush1.msra.mxu0 0.0
    %319 = vmatprep.subr.mxu0 0.0
    %320 = vmatpush1.msra.mxu0 0.0
    %321 = vmatprep.subr.mxu0 0.0
    %322 = vmatpush1.msra.mxu0 0.0
    %323 = vmatprep.subr.mxu0 0.0
    %324 = vmatpush1.msra.mxu0 0.0
    %325 = vmatprep.subr.mxu0 0.0
    %326 = vmatpush1.msra.mxu0 0.0
    %327 = vmatprep.subr.mxu0 0.0
    %328 = vmatpush1.msra.mxu0 0.0
    %329 = vmatprep.subr.mxu0 0.0
    %330 = vmatpush1.msra.mxu0 0.0
    %331 = vmatprep.subr.mxu0 0.0
    %332 = vmatpush1.msra.mxu0 0.0
    %333 = vmatprep.subr.mxu0 0.0
    %334 = vmatpush1.msra.mxu0 0.0
    %335 = vmatprep.mubr.f32.mxu0 0.0
    %336 = vmatmul.mubr.f32.gmra.mrb[0].mxu0 %v269
    %v337 = vpop.f32.mrb[0].mxu0
    %v338 = vadd.f32 0.0, %v337
    %v339 = vpop.f32.mrb[0].mxu0
    %340 = vdwg.mxu0
    %v341 = vadd.f32 %v268, %v338
    %v342 = vxor.u32 %v341, 2147483648
    %v343 = vmul.f32 %v342, 1.442695
    %v344 = vpow.pop %v343
    %v345 = vadd.f32 %v344, 1.0
    %v346 = vrcp.pop %v345
    %v347 = vmul.f32 1.0, %v346
    %v348 = vadd.f32 %v338, %v240
    %350 = vrot.lane.b32.xlu0 %v348, 64
    %v351 = vpop.permute.xlu0 %350
    %v353 = vmul.f32 %v347, %v351
    %355 = vrot.lane.b32.xlu0 %v353, 64
    %v356 = vpop.permute.xlu0 %355
    %v358 = vadd.f32 %v268, %v356
    %v359 = vtanh.pop %v358
    %v360 = vsub.f32 1.0, %v347
    %362 = vrot.lane.b32.xlu0 %v359, 96
    %v363 = vpop.permute.xlu0 %362
    %v365 = vmul.f32 %v360, %v363
    %v366 = vmul.f32 %v347, %v261
    %v367 = vadd.f32 %v365, %v366
    %369 = vrot.lane.b32.xlu0 %v367, 96
    %v370 = vpop.permute.xlu0 %369
    %372 = vst.msk [vmem:[#allocation3 + $0x2] sm:$0x3] %vm266, %v370
    %v373 = vld [vmem:[#allocation2 + $0x4] sm:$0x3]
    %v374 = vsel %vm153, %v370, 0
    %376 = vmatprep.subr.mxu0 0.0
    %377 = vmatpush1.msra.mxu0 %v147
    %378 = vmatprep.subr.mxu0 0.0
    %379 = vmatpush1.msra.mxu0 %v148
    %380 = vmatprep.subr.mxu0 0.0
    %381 = vmatpush1.msra.mxu0 %v149
    %382 = vmatprep.subr.mxu0 0.0
    %383 = vmatpush1.msra.mxu0 %v150
    %384 = vmatprep.subr.mxu0 0.0
    %385 = vmatpush1.msra.mxu0 0.0
    %386 = vmatprep.subr.mxu0 0.0
    %387 = vmatpush1.msra.mxu0 0.0
    %388 = vmatprep.subr.mxu0 0.0
    %389 = vmatpush1.msra.mxu0 0.0
    %390 = vmatprep.subr.mxu0 0.0
    %391 = vmatpush1.msra.mxu0 0.0
    %392 = vmatprep.subr.mxu0 0.0
    %393 = vmatpush1.msra.mxu0 0.0
    %394 = vmatprep.subr.mxu0 0.0
    %395 = vmatpush1.msra.mxu0 0.0
    %396 = vmatprep.subr.mxu0 0.0
    %397 = vmatpush1.msra.mxu0 0.0
    %398 = vmatprep.subr.mxu0 0.0
    %399 = vmatpush1.msra.mxu0 0.0
    %400 = vmatprep.subr.mxu0 0.0
    %401 = vmatpush1.msra.mxu0 0.0
    %402 = vmatprep.subr.mxu0 0.0
    %403 = vmatpush1.msra.mxu0 0.0
    %404 = vmatprep.subr.mxu0 0.0
    %405 = vmatpush1.msra.mxu0 0.0
    %406 = vmatprep.subr.mxu0 0.0
    %407 = vmatpush1.msra.mxu0 0.0
    %408 = vmatprep.subr.mxu0 0.0
    %409 = vmatpush1.msra.mxu0 0.0
    %410 = vmatprep.subr.mxu0 0.0
    %411 = vmatpush1.msra.mxu0 0.0
    %412 = vmatprep.subr.mxu0 0.0
    %413 = vmatpush1.msra.mxu0 0.0
    %414 = vmatprep.subr.mxu0 0.0
    %415 = vmatpush1.msra.mxu0 0.0
    %416 = vmatprep.subr.mxu0 0.0
    %417 = vmatpush1.msra.mxu0 0.0
    %418 = vmatprep.subr.mxu0 0.0
    %419 = vmatpush1.msra.mxu0 0.0
    %420 = vmatprep.subr.mxu0 0.0
    %421 = vmatpush1.msra.mxu0 0.0
    %422 = vmatprep.subr.mxu0 0.0
    %423 = vmatpush1.msra.mxu0 0.0
    %424 = vmatprep.subr.mxu0 0.0
    %425 = vmatpush1.msra.mxu0 0.0
    %426 = vmatprep.subr.mxu0 0.0
    %427 = vmatpush1.msra.mxu0 0.0
    %428 = vmatprep.subr.mxu0 0.0
    %429 = vmatpush1.msra.mxu0 0.0
    %430 = vmatprep.subr.mxu0 0.0
    %431 = vmatpush1.msra.mxu0 0.0
    %432 = vmatprep.subr.mxu0 0.0
    %433 = vmatpush1.msra.mxu0 0.0
    %434 = vmatprep.subr.mxu0 0.0
    %435 = vmatpush1.msra.mxu0 0.0
    %436 = vmatprep.subr.mxu0 0.0
    %437 = vmatpush1.msra.mxu0 0.0
    %438 = vmatprep.subr.mxu0 0.0
    %439 = vmatpush1.msra.mxu0 0.0
    %440 = vmatprep.mubr.f32.mxu0 0.0
    %441 = vmatmul.mubr.f32.gmra.mrb[0].mxu0 %v374
    %v442 = vpop.f32.mrb[0].mxu0
    %v443 = vadd.f32 0.0, %v442
    %v444 = vpop.f32.mrb[0].mxu0
    %445 = vdwg.mxu0
    %v446 = vadd.f32 %v373, %v443
    %v447 = vxor.u32 %v446, 2147483648
    %v448 = vmul.f32 %v447, 1.442695
    %v449 = vpow.pop %v448
    %v450 = vadd.f32 %v449, 1.0
    %v451 = vrcp.pop %v450
    %v452 = vmul.f32 1.0, %v451
    %v453 = vadd.f32 %v443, %v240
    %455 = vrot.lane.b32.xlu0 %v453, 64
    %v456 = vpop.permute.xlu0 %455
    %v458 = vmul.f32 %v452, %v456
    %460 = vrot.lane.b32.xlu0 %v458, 64
    %v461 = vpop.permute.xlu0 %460
    %v463 = vadd.f32 %v373, %v461
    %v464 = vtanh.pop %v463
    %v465 = vsub.f32 1.0, %v452
    %467 = vrot.lane.b32.xlu0 %v464, 96
    %v468 = vpop.permute.xlu0 %467
    %v470 = vmul.f32 %v465, %v468
    %v471 = vmul.f32 %v452, %v367
    %v472 = vadd.f32 %v470, %v471
    %474 = vrot.lane.b32.xlu0 %v472, 96
    %v475 = vpop.permute.xlu0 %474
    %477 = vst.msk [vmem:[#allocation3 + $0x4] sm:$0x3] %vm266, %v475
    %v478 = vld [vmem:[#allocation2 + $0x6] sm:$0x3]
    %v479 = vsel %vm153, %v475, 0
    %481 = vmatprep.subr.mxu0 0.0
    %482 = vmatpush1.msra.mxu0 %v147
    %483 = vmatprep.subr.mxu0 0.0
    %484 = vmatpush1.msra.mxu0 %v148
    %485 = vmatprep.subr.mxu0 0.0
    %486 = vmatpush1.msra.mxu0 %v149
    %487 = vmatprep.subr.mxu0 0.0
    %488 = vmatpush1.msra.mxu0 %v150
    %489 = vmatprep.subr.mxu0 0.0
    %490 = vmatpush1.msra.mxu0 0.0
    %491 = vmatprep.subr.mxu0 0.0
    %492 = vmatpush1.msra.mxu0 0.0
    %493 = vmatprep.subr.mxu0 0.0
    %494 = vmatpush1.msra.mxu0 0.0
    %495 = vmatprep.subr.mxu0 0.0
    %496 = vmatpush1.msra.mxu0 0.0
    %497 = vmatprep.subr.mxu0 0.0
    %498 = vmatpush1.msra.mxu0 0.0
    %499 = vmatprep.subr.mxu0 0.0
    %500 = vmatpush1.msra.mxu0 0.0
    %501 = vmatprep.subr.mxu0 0.0
    %502 = vmatpush1.msra.mxu0 0.0
    %503 = vmatprep.subr.mxu0 0.0
    %504 = vmatpush1.msra.mxu0 0.0
    %505 = vmatprep.subr.mxu0 0.0
    %506 = vmatpush1.msra.mxu0 0.0
    %507 = vmatprep.subr.mxu0 0.0
    %508 = vmatpush1.msra.mxu0 0.0
    %509 = vmatprep.subr.mxu0 0.0
    %510 = vmatpush1.msra.mxu0 0.0
    %511 = vmatprep.subr.mxu0 0.0
    %512 = vmatpush1.msra.mxu0 0.0
    %513 = vmatprep.subr.mxu0 0.0
    %514 = vmatpush1.msra.mxu0 0.0
    %515 = vmatprep.subr.mxu0 0.0
    %516 = vmatpush1.msra.mxu0 0.0
    %517 = vmatprep.subr.mxu0 0.0
    %518 = vmatpush1.msra.mxu0 0.0
    %519 = vmatprep.subr.mxu0 0.0
    %520 = vmatpush1.msra.mxu0 0.0
    %521 = vmatprep.subr.mxu0 0.0
    %522 = vmatpush1.msra.mxu0 0.0
    %523 = vmatprep.subr.mxu0 0.0
    %524 = vmatpush1.msra.mxu0 0.0
    %525 = vmatprep.subr.mxu0 0.0
    %526 = vmatpush1.msra.mxu0 0.0
    %527 = vmatprep.subr.mxu0 0.0
    %528 = vmatpush1.msra.mxu0 0.0
    %529 = vmatprep.subr.mxu0 0.0
    %530 = vmatpush1.msra.mxu0 0.0
    %531 = vmatprep.subr.mxu0 0.0
    %532 = vmatpush1.msra.mxu0 0.0
    %533 = vmatprep.subr.mxu0 0.0
    %534 = vmatpush1.msra.mxu0 0.0
    %535 = vmatprep.subr.mxu0 0.0
    %536 = vmatpush1.msra.mxu0 0.0
    %537 = vmatprep.subr.mxu0 0.0
    %538 = vmatpush1.msra.mxu0 0.0
    %539 = vmatprep.subr.mxu0 0.0
    %540 = vmatpush1.msra.mxu0 0.0
    %541 = vmatprep.subr.mxu0 0.0
    %542 = vmatpush1.msra.mxu0 0.0
    %543 = vmatprep.subr.mxu0 0.0
    %544 = vmatpush1.msra.mxu0 0.0
    %545 = vmatprep.mubr.f32.mxu0 0.0
    %546 = vmatmul.mubr.f32.gmra.mrb[0].mxu0 %v479
    %v547 = vpop.f32.mrb[0].mxu0
    %v548 = vadd.f32 0.0, %v547
    %v549 = vpop.f32.mrb[0].mxu0
    %550 = vdwg.mxu0
    %v551 = vadd.f32 %v478, %v548
    %v552 = vxor.u32 %v551, 2147483648
    %v553 = vmul.f32 %v552, 1.442695
    %v554 = vpow.pop %v553
    %v555 = vadd.f32 %v554, 1.0
    %v556 = vrcp.pop %v555
    %v557 = vmul.f32 1.0, %v556
    %v558 = vadd.f32 %v548, %v240
    %560 = vrot.lane.b32.xlu0 %v558, 64
    %v561 = vpop.permute.xlu0 %560
    %v563 = vmul.f32 %v557, %v561
    %565 = vrot.lane.b32.xlu0 %v563, 64
    %v566 = vpop.permute.xlu0 %565
    %v568 = vadd.f32 %v478, %v566
    %v569 = vtanh.pop %v568
    %v570 = vsub.f32 1.0, %v557
    %572 = vrot.lane.b32.xlu0 %v569, 96
    %v573 = vpop.permute.xlu0 %572
    %v575 = vmul.f32 %v570, %v573
    %v576 = vmul.f32 %v557, %v472
    %v577 = vadd.f32 %v575, %v576
    %579 = vrot.lane.b32.xlu0 %v577, 96
    %v580 = vpop.permute.xlu0 %579
    %582 = vst.msk [vmem:[#allocation3 + $0x6] sm:$0x3] %vm266, %v580
    %v583 = vld [vmem:[#allocation2 + $0x8] sm:$0x3]
    %v584 = vsel %vm153, %v580, 0
    %586 = vmatprep.subr.mxu0 0.0
    %587 = vmatpush1.msra.mxu0 %v147
    %588 = vmatprep.subr.mxu0 0.0
    %589 = vmatpush1.msra.mxu0 %v148
    %590 = vmatprep.subr.mxu0 0.0
    %591 = vmatpush1.msra.mxu0 %v149
    %592 = vmatprep.subr.mxu0 0.0
    %593 = vmatpush1.msra.mxu0 %v150
    %594 = vmatprep.subr.mxu0 0.0
    %595 = vmatpush1.msra.mxu0 0.0
    %596 = vmatprep.subr.mxu0 0.0
    %597 = vmatpush1.msra.mxu0 0.0
    %598 = vmatprep.subr.mxu0 0.0
    %599 = vmatpush1.msra.mxu0 0.0
    %600 = vmatprep.subr.mxu0 0.0
    %601 = vmatpush1.msra.mxu0 0.0
    %602 = vmatprep.subr.mxu0 0.0
    %603 = vmatpush1.msra.mxu0 0.0
    %604 = vmatprep.subr.mxu0 0.0
    %605 = vmatpush1.msra.mxu0 0.0
    %606 = vmatprep.subr.mxu0 0.0
    %607 = vmatpush1.msra.mxu0 0.0
    %608 = vmatprep.subr.mxu0 0.0
    %609 = vmatpush1.msra.mxu0 0.0
    %610 = vmatprep.subr.mxu0 0.0
    %611 = vmatpush1.msra.mxu0 0.0
    %612 = vmatprep.subr.mxu0 0.0
    %613 = vmatpush1.msra.mxu0 0.0
    %614 = vmatprep.subr.mxu0 0.0
    %615 = vmatpush1.msra.mxu0 0.0
    %616 = vmatprep.subr.mxu0 0.0
    %617 = vmatpush1.msra.mxu0 0.0
    %618 = vmatprep.subr.mxu0 0.0
    %619 = vmatpush1.msra.mxu0 0.0
    %620 = vmatprep.subr.mxu0 0.0
    %621 = vmatpush1.msra.mxu0 0.0
    %622 = vmatprep.subr.mxu0 0.0
    %623 = vmatpush1.msra.mxu0 0.0
    %624 = vmatprep.subr.mxu0 0.0
    %625 = vmatpush1.msra.mxu0 0.0
    %626 = vmatprep.subr.mxu0 0.0
    %627 = vmatpush1.msra.mxu0 0.0
    %628 = vmatprep.subr.mxu0 0.0
    %629 = vmatpush1.msra.mxu0 0.0
    %630 = vmatprep.subr.mxu0 0.0
    %631 = vmatpush1.msra.mxu0 0.0
    %632 = vmatprep.subr.mxu0 0.0
    %633 = vmatpush1.msra.mxu0 0.0
    %634 = vmatprep.subr.mxu0 0.0
    %635 = vmatpush1.msra.mxu0 0.0
    %636 = vmatprep.subr.mxu0 0.0
    %637 = vmatpush1.msra.mxu0 0.0
    %638 = vmatprep.subr.mxu0 0.0
    %639 = vmatpush1.msra.mxu0 0.0
    %640 = vmatprep.subr.mxu0 0.0
    %641 = vmatpush1.msra.mxu0 0.0
    %642 = vmatprep.subr.mxu0 0.0
    %643 = vmatpush1.msra.mxu0 0.0
    %644 = vmatprep.subr.mxu0 0.0
    %645 = vmatpush1.msra.mxu0 0.0
    %646 = vmatprep.subr.mxu0 0.0
    %647 = vmatpush1.msra.mxu0 0.0
    %648 = vmatprep.subr.mxu0 0.0
    %649 = vmatpush1.msra.mxu0 0.0
    %650 = vmatprep.mubr.f32.mxu0 0.0
    %651 = vmatmul.mubr.f32.gmra.mrb[0].mxu0 %v584
    %v652 = vpop.f32.mrb[0].mxu0
    %v653 = vadd.f32 0.0, %v652
    %v654 = vpop.f32.mrb[0].mxu0
    %655 = vdwg.mxu0
    %v656 = vadd.f32 %v583, %v653
    %v657 = vxor.u32 %v656, 2147483648
    %v658 = vmul.f32 %v657, 1.442695
    %v659 = vpow.pop %v658
    %v660 = vadd.f32 %v659, 1.0
    %v661 = vrcp.pop %v660
    %v662 = vmul.f32 1.0, %v661
    %v663 = vadd.f32 %v653, %v240
    %665 = vrot.lane.b32.xlu0 %v663, 64
    %v666 = vpop.permute.xlu0 %665
    %v668 = vmul.f32 %v662, %v666
    %670 = vrot.lane.b32.xlu0 %v668, 64
    %v671 = vpop.permute.xlu0 %670
    %v673 = vadd.f32 %v583, %v671
    %v674 = vtanh.pop %v673
    %v675 = vsub.f32 1.0, %v662
    %677 = vrot.lane.b32.xlu0 %v674, 96
    %v678 = vpop.permute.xlu0 %677
    %v680 = vmul.f32 %v675, %v678
    %v681 = vmul.f32 %v662, %v577
    %v682 = vadd.f32 %v680, %v681
    %684 = vrot.lane.b32.xlu0 %v682, 96
    %v685 = vpop.permute.xlu0 %684
    %687 = vst.msk [vmem:[#allocation3 + $0x8] sm:$0x3] %vm266, %v685
    %v688 = vld [vmem:[#allocation2 + $0xa] sm:$0x3]
    %v689 = vsel %vm153, %v685, 0
    %691 = vmatprep.subr.mxu0 0.0
    %692 = vmatpush1.msra.mxu0 %v147
    %693 = vmatprep.subr.mxu0 0.0
    %694 = vmatpush1.msra.mxu0 %v148
    %695 = vmatprep.subr.mxu0 0.0
    %696 = vmatpush1.msra.mxu0 %v149
    %697 = vmatprep.subr.mxu0 0.0
    %698 = vmatpush1.msra.mxu0 %v150
    %699 = vmatprep.subr.mxu0 0.0
    %700 = vmatpush1.msra.mxu0 0.0
    %701 = vmatprep.subr.mxu0 0.0
    %702 = vmatpush1.msra.mxu0 0.0
    %703 = vmatprep.subr.mxu0 0.0
    %704 = vmatpush1.msra.mxu0 0.0
    %705 = vmatprep.subr.mxu0 0.0
    %706 = vmatpush1.msra.mxu0 0.0
    %707 = vmatprep.subr.mxu0 0.0
    %708 = vmatpush1.msra.mxu0 0.0
    %709 = vmatprep.subr.mxu0 0.0
    %710 = vmatpush1.msra.mxu0 0.0
    %711 = vmatprep.subr.mxu0 0.0
    %712 = vmatpush1.msra.mxu0 0.0
    %713 = vmatprep.subr.mxu0 0.0
    %714 = vmatpush1.msra.mxu0 0.0
    %715 = vmatprep.subr.mxu0 0.0
    %716 = vmatpush1.msra.mxu0 0.0
    %717 = vmatprep.subr.mxu0 0.0
    %718 = vmatpush1.msra.mxu0 0.0
    %719 = vmatprep.subr.mxu0 0.0
    %720 = vmatpush1.msra.mxu0 0.0
    %721 = vmatprep.subr.mxu0 0.0
    %722 = vmatpush1.msra.mxu0 0.0
    %723 = vmatprep.subr.mxu0 0.0
    %724 = vmatpush1.msra.mxu0 0.0
    %725 = vmatprep.subr.mxu0 0.0
    %726 = vmatpush1.msra.mxu0 0.0
    %727 = vmatprep.subr.mxu0 0.0
    %728 = vmatpush1.msra.mxu0 0.0
    %729 = vmatprep.subr.mxu0 0.0
    %730 = vmatpush1.msra.mxu0 0.0
    %731 = vmatprep.subr.mxu0 0.0
    %732 = vmatpush1.msra.mxu0 0.0
    %733 = vmatprep.subr.mxu0 0.0
    %734 = vmatpush1.msra.mxu0 0.0
    %735 = vmatprep.subr.mxu0 0.0
    %736 = vmatpush1.msra.mxu0 0.0
    %737 = vmatprep.subr.mxu0 0.0
    %738 = vmatpush1.msra.mxu0 0.0
    %739 = vmatprep.subr.mxu0 0.0
    %740 = vmatpush1.msra.mxu0 0.0
    %741 = vmatprep.subr.mxu0 0.0
    %742 = vmatpush1.msra.mxu0 0.0
    %743 = vmatprep.subr.mxu0 0.0
    %744 = vmatpush1.msra.mxu0 0.0
    %745 = vmatprep.subr.mxu0 0.0
    %746 = vmatpush1.msra.mxu0 0.0
    %747 = vmatprep.subr.mxu0 0.0
    %748 = vmatpush1.msra.mxu0 0.0
    %749 = vmatprep.subr.mxu0 0.0
    %750 = vmatpush1.msra.mxu0 0.0
    %751 = vmatprep.subr.mxu0 0.0
    %752 = vmatpush1.msra.mxu0 0.0
    %753 = vmatprep.subr.mxu0 0.0
    %754 = vmatpush1.msra.mxu0 0.0
    %755 = vmatprep.mubr.f32.mxu0 0.0
    %756 = vmatmul.mubr.f32.gmra.mrb[0].mxu0 %v689
    %v757 = vpop.f32.mrb[0].mxu0
    %v758 = vadd.f32 0.0, %v757
    %v759 = vpop.f32.mrb[0].mxu0
    %760 = vdwg.mxu0
    %v761 = vadd.f32 %v688, %v758
    %v762 = vxor.u32 %v761, 2147483648
    %v763 = vmul.f32 %v762, 1.442695
    %v764 = vpow.pop %v763
    %v765 = vadd.f32 %v764, 1.0
    %v766 = vrcp.pop %v765
    %v767 = vmul.f32 1.0, %v766
    %v768 = vadd.f32 %v758, %v240
    %770 = vrot.lane.b32.xlu0 %v768, 64
    %v771 = vpop.permute.xlu0 %770
    %v773 = vmul.f32 %v767, %v771
    %775 = vrot.lane.b32.xlu0 %v773, 64
    %v776 = vpop.permute.xlu0 %775
    %v778 = vadd.f32 %v688, %v776
    %v779 = vtanh.pop %v778
    %v780 = vsub.f32 1.0, %v767
    %782 = vrot.lane.b32.xlu0 %v779, 96
    %v783 = vpop.permute.xlu0 %782
    %v785 = vmul.f32 %v780, %v783
    %v786 = vmul.f32 %v767, %v682
    %v787 = vadd.f32 %v785, %v786
    %789 = vrot.lane.b32.xlu0 %v787, 96
    %v790 = vpop.permute.xlu0 %789
    %792 = vst.msk [vmem:[#allocation3 + $0xa] sm:$0x3] %vm266, %v790
    %v793 = vld [vmem:[#allocation2 + $0xc] sm:$0x3]
    %v794 = vsel %vm153, %v790, 0
    %796 = vmatprep.subr.mxu0 0.0
    %797 = vmatpush1.msra.mxu0 %v147
    %798 = vmatprep.subr.mxu0 0.0
    %799 = vmatpush1.msra.mxu0 %v148
    %800 = vmatprep.subr.mxu0 0.0
    %801 = vmatpush1.msra.mxu0 %v149
    %802 = vmatprep.subr.mxu0 0.0
    %803 = vmatpush1.msra.mxu0 %v150
    %804 = vmatprep.subr.mxu0 0.0
    %805 = vmatpush1.msra.mxu0 0.0
    %806 = vmatprep.subr.mxu0 0.0
    %807 = vmatpush1.msra.mxu0 0.0
    %808 = vmatprep.subr.mxu0 0.0
    %809 = vmatpush1.msra.mxu0 0.0
    %810 = vmatprep.subr.mxu0 0.0
    %811 = vmatpush1.msra.mxu0 0.0
    %812 = vmatprep.subr.mxu0 0.0
    %813 = vmatpush1.msra.mxu0 0.0
    %814 = vmatprep.subr.mxu0 0.0
    %815 = vmatpush1.msra.mxu0 0.0
    %816 = vmatprep.subr.mxu0 0.0
    %817 = vmatpush1.msra.mxu0 0.0
    %818 = vmatprep.subr.mxu0 0.0
    %819 = vmatpush1.msra.mxu0 0.0
    %820 = vmatprep.subr.mxu0 0.0
    %821 = vmatpush1.msra.mxu0 0.0
    %822 = vmatprep.subr.mxu0 0.0
    %823 = vmatpush1.msra.mxu0 0.0
    %824 = vmatprep.subr.mxu0 0.0
    %825 = vmatpush1.msra.mxu0 0.0
    %826 = vmatprep.subr.mxu0 0.0
    %827 = vmatpush1.msra.mxu0 0.0
    %828 = vmatprep.subr.mxu0 0.0
    %829 = vmatpush1.msra.mxu0 0.0
    %830 = vmatprep.subr.mxu0 0.0
    %831 = vmatpush1.msra.mxu0 0.0
    %832 = vmatprep.subr.mxu0 0.0
    %833 = vmatpush1.msra.mxu0 0.0
    %834 = vmatprep.subr.mxu0 0.0
    %835 = vmatpush1.msra.mxu0 0.0
    %836 = vmatprep.subr.mxu0 0.0
    %837 = vmatpush1.msra.mxu0 0.0
    %838 = vmatprep.subr.mxu0 0.0
    %839 = vmatpush1.msra.mxu0 0.0
    %840 = vmatprep.subr.mxu0 0.0
    %841 = vmatpush1.msra.mxu0 0.0
    %842 = vmatprep.subr.mxu0 0.0
    %843 = vmatpush1.msra.mxu0 0.0
    %844 = vmatprep.subr.mxu0 0.0
    %845 = vmatpush1.msra.mxu0 0.0
    %846 = vmatprep.subr.mxu0 0.0
    %847 = vmatpush1.msra.mxu0 0.0
    %848 = vmatprep.subr.mxu0 0.0
    %849 = vmatpush1.msra.mxu0 0.0
    %850 = vmatprep.subr.mxu0 0.0
    %851 = vmatpush1.msra.mxu0 0.0
    %852 = vmatprep.subr.mxu0 0.0
    %853 = vmatpush1.msra.mxu0 0.0
    %854 = vmatprep.subr.mxu0 0.0
    %855 = vmatpush1.msra.mxu0 0.0
    %856 = vmatprep.subr.mxu0 0.0
    %857 = vmatpush1.msra.mxu0 0.0
    %858 = vmatprep.subr.mxu0 0.0
    %859 = vmatpush1.msra.mxu0 0.0
    %860 = vmatprep.mubr.f32.mxu0 0.0
    %861 = vmatmul.mubr.f32.gmra.mrb[0].mxu0 %v794
    %v862 = vpop.f32.mrb[0].mxu0
    %v863 = vadd.f32 0.0, %v862
    %v864 = vpop.f32.mrb[0].mxu0
    %865 = vdwg.mxu0
    %v866 = vadd.f32 %v793, %v863
    %v867 = vxor.u32 %v866, 2147483648
    %v868 = vmul.f32 %v867, 1.442695
    %v869 = vpow.pop %v868
    %v870 = vadd.f32 %v869, 1.0
    %v871 = vrcp.pop %v870
    %v872 = vmul.f32 1.0, %v871
    %v873 = vadd.f32 %v863, %v240
    %875 = vrot.lane.b32.xlu0 %v873, 64
    %v876 = vpop.permute.xlu0 %875
    %v878 = vmul.f32 %v872, %v876
    %880 = vrot.lane.b32.xlu0 %v878, 64
    %v881 = vpop.permute.xlu0 %880
    %v883 = vadd.f32 %v793, %v881
    %v884 = vtanh.pop %v883
    %v885 = vsub.f32 1.0, %v872
    %887 = vrot.lane.b32.xlu0 %v884, 96
    %v888 = vpop.permute.xlu0 %887
    %v890 = vmul.f32 %v885, %v888
    %v891 = vmul.f32 %v872, %v787
    %v892 = vadd.f32 %v890, %v891
    %894 = vrot.lane.b32.xlu0 %v892, 96
    %v895 = vpop.permute.xlu0 %894
    %897 = vst.msk [vmem:[#allocation3 + $0xc] sm:$0x3] %vm266, %v895
    %v898 = vld [vmem:[#allocation2 + $0xe] sm:$0x3]
    %v899 = vsel %vm153, %v895, 0
    %901 = vmatprep.subr.mxu0 0.0
    %902 = vmatpush1.msra.mxu0 %v147
    %903 = vmatprep.subr.mxu0 0.0
    %904 = vmatpush1.msra.mxu0 %v148
    %905 = vmatprep.subr.mxu0 0.0
    %906 = vmatpush1.msra.mxu0 %v149
    %907 = vmatprep.subr.mxu0 0.0
    %908 = vmatpush1.msra.mxu0 %v150
    %909 = vmatprep.subr.mxu0 0.0
    %910 = vmatpush1.msra.mxu0 0.0
    %911 = vmatprep.subr.mxu0 0.0
    %912 = vmatpush1.msra.mxu0 0.0
    %913 = vmatprep.subr.mxu0 0.0
    %914 = vmatpush1.msra.mxu0 0.0
    %915 = vmatprep.subr.mxu0 0.0
    %916 = vmatpush1.msra.mxu0 0.0
    %917 = vmatprep.subr.mxu0 0.0
    %918 = vmatpush1.msra.mxu0 0.0
    %919 = vmatprep.subr.mxu0 0.0
    %920 = vmatpush1.msra.mxu0 0.0
    %921 = vmatprep.subr.mxu0 0.0
    %922 = vmatpush1.msra.mxu0 0.0
    %923 = vmatprep.subr.mxu0 0.0
    %924 = vmatpush1.msra.mxu0 0.0
    %925 = vmatprep.subr.mxu0 0.0
    %926 = vmatpush1.msra.mxu0 0.0
    %927 = vmatprep.subr.mxu0 0.0
    %928 = vmatpush1.msra.mxu0 0.0
    %929 = vmatprep.subr.mxu0 0.0
    %930 = vmatpush1.msra.mxu0 0.0
    %931 = vmatprep.subr.mxu0 0.0
    %932 = vmatpush1.msra.mxu0 0.0
    %933 = vmatprep.subr.mxu0 0.0
    %934 = vmatpush1.msra.mxu0 0.0
    %935 = vmatprep.subr.mxu0 0.0
    %936 = vmatpush1.msra.mxu0 0.0
    %937 = vmatprep.subr.mxu0 0.0
    %938 = vmatpush1.msra.mxu0 0.0
    %939 = vmatprep.subr.mxu0 0.0
    %940 = vmatpush1.msra.mxu0 0.0
    %941 = vmatprep.subr.mxu0 0.0
    %942 = vmatpush1.msra.mxu0 0.0
    %943 = vmatprep.subr.mxu0 0.0
    %944 = vmatpush1.msra.mxu0 0.0
    %945 = vmatprep.subr.mxu0 0.0
    %946 = vmatpush1.msra.mxu0 0.0
    %947 = vmatprep.subr.mxu0 0.0
    %948 = vmatpush1.msra.mxu0 0.0
    %949 = vmatprep.subr.mxu0 0.0
    %950 = vmatpush1.msra.mxu0 0.0
    %951 = vmatprep.subr.mxu0 0.0
    %952 = vmatpush1.msra.mxu0 0.0
    %953 = vmatprep.subr.mxu0 0.0
    %954 = vmatpush1.msra.mxu0 0.0
    %955 = vmatprep.subr.mxu0 0.0
    %956 = vmatpush1.msra.mxu0 0.0
    %957 = vmatprep.subr.mxu0 0.0
    %958 = vmatpush1.msra.mxu0 0.0
    %959 = vmatprep.subr.mxu0 0.0
    %960 = vmatpush1.msra.mxu0 0.0
    %961 = vmatprep.subr.mxu0 0.0
    %962 = vmatpush1.msra.mxu0 0.0
    %963 = vmatprep.subr.mxu0 0.0
    %964 = vmatpush1.msra.mxu0 0.0
    %965 = vmatprep.mubr.f32.mxu0 0.0
    %966 = vmatmul.mubr.f32.gmra.mrb[0].mxu0 %v899
    %v967 = vpop.f32.mrb[0].mxu0
    %v968 = vadd.f32 0.0, %v967
    %v969 = vpop.f32.mrb[0].mxu0
    %970 = vdwg.mxu0
    %v971 = vadd.f32 %v898, %v968
    %v972 = vxor.u32 %v971, 2147483648
    %v973 = vmul.f32 %v972, 1.442695
    %v974 = vpow.pop %v973
    %v975 = vadd.f32 %v974, 1.0
    %v976 = vrcp.pop %v975
    %v977 = vmul.f32 1.0, %v976
    %v978 = vadd.f32 %v968, %v240
    %980 = vrot.lane.b32.xlu0 %v978, 64
    %v981 = vpop.permute.xlu0 %980
    %v983 = vmul.f32 %v977, %v981
    %985 = vrot.lane.b32.xlu0 %v983, 64
    %v986 = vpop.permute.xlu0 %985
    %v988 = vadd.f32 %v898, %v986
    %v989 = vtanh.pop %v988
    %v990 = vsub.f32 1.0, %v977
    %992 = vrot.lane.b32.xlu0 %v989, 96
    %v993 = vpop.permute.xlu0 %992
    %v995 = vmul.f32 %v990, %v993
    %v996 = vmul.f32 %v977, %v892
    %v997 = vadd.f32 %v995, %v996
    %999 = vrot.lane.b32.xlu0 %v997, 96
    %v1000 = vpop.permute.xlu0 %999
    %1002 = vst.msk [vmem:[#allocation3 + $0xe] sm:$0x3] %vm266, %v1000
    %v1003 = vld [vmem:[#allocation3] sm:$0xff]
    %v1004 = vld [vmem:[#allocation3 + $0x8] sm:$0xff]
    %v1005 = vld [vmem:[%s5] sm:$0xff]
    %v1006 = vld [vmem:[%s5 + $0x8] sm:$0xff]
    %v1007 = vld [vmem:[%s5 + $0x10] sm:$0xff]
    %v1008 = vld [vmem:[%s5 + $0x18] sm:$0xff]
    %v1009 = vld [vmem:[%s7] sm:$0x1]
    %v1011 = vlaneseq
    %v1012 = vshrl.u32 %v1011, 7
    %v1013 = vsub.s32 0, %v1012
    %v1014 = vrot.slane %v1009, %v1013
    %v1017 = vsel %vm153, %v1003, 0
    %v1020 = vsel %vm153, %v1004, 0
    %1022 = vmatprep.subr.mxu0 0.0
    %1023 = vmatpush1.msra.mxu0 %v1005
    %1024 = vmatprep.subr.mxu0 0.0
    %1025 = vmatpush1.msra.mxu0 %v1006
    %1026 = vmatprep.subr.mxu0 0.0
    %1027 = vmatpush1.msra.mxu0 %v1007
    %1028 = vmatprep.subr.mxu0 0.0
    %1029 = vmatpush1.msra.mxu0 %v1008
    %1030 = vmatprep.subr.mxu0 0.0
    %1031 = vmatpush1.msra.mxu0 0.0
    %1032 = vmatprep.subr.mxu0 0.0
    %1033 = vmatpush1.msra.mxu0 0.0
    %1034 = vmatprep.subr.mxu0 0.0
    %1035 = vmatpush1.msra.mxu0 0.0
    %1036 = vmatprep.subr.mxu0 0.0
    %1037 = vmatpush1.msra.mxu0 0.0
    %1038 = vmatprep.subr.mxu0 0.0
    %1039 = vmatpush1.msra.mxu0 0.0
    %1040 = vmatprep.subr.mxu0 0.0
    %1041 = vmatpush1.msra.mxu0 0.0
    %1042 = vmatprep.subr.mxu0 0.0
    %1043 = vmatpush1.msra.mxu0 0.0
    %1044 = vmatprep.subr.mxu0 0.0
    %1045 = vmatpush1.msra.mxu0 0.0
    %1046 = vmatprep.subr.mxu0 0.0
    %1047 = vmatpush1.msra.mxu0 0.0
    %1048 = vmatprep.subr.mxu0 0.0
    %1049 = vmatpush1.msra.mxu0 0.0
    %1050 = vmatprep.subr.mxu0 0.0
    %1051 = vmatpush1.msra.mxu0 0.0
    %1052 = vmatprep.subr.mxu0 0.0
    %1053 = vmatpush1.msra.mxu0 0.0
    %1054 = vmatprep.subr.mxu0 0.0
    %1055 = vmatpush1.msra.mxu0 0.0
    %1056 = vmatprep.subr.mxu0 0.0
    %1057 = vmatpush1.msra.mxu0 0.0
    %1058 = vmatprep.subr.mxu0 0.0
    %1059 = vmatpush1.msra.mxu0 0.0
    %1060 = vmatprep.subr.mxu0 0.0
    %1061 = vmatpush1.msra.mxu0 0.0
    %1062 = vmatprep.subr.mxu0 0.0
    %1063 = vmatpush1.msra.mxu0 0.0
    %1064 = vmatprep.subr.mxu0 0.0
    %1065 = vmatpush1.msra.mxu0 0.0
    %1066 = vmatprep.subr.mxu0 0.0
    %1067 = vmatpush1.msra.mxu0 0.0
    %1068 = vmatprep.subr.mxu0 0.0
    %1069 = vmatpush1.msra.mxu0 0.0
    %1070 = vmatprep.subr.mxu0 0.0
    %1071 = vmatpush1.msra.mxu0 0.0
    %1072 = vmatprep.subr.mxu0 0.0
    %1073 = vmatpush1.msra.mxu0 0.0
    %1074 = vmatprep.subr.mxu0 0.0
    %1075 = vmatpush1.msra.mxu0 0.0
    %1076 = vmatprep.subr.mxu0 0.0
    %1077 = vmatpush1.msra.mxu0 0.0
    %1078 = vmatprep.subr.mxu0 0.0
    %1079 = vmatpush1.msra.mxu0 0.0
    %1080 = vmatprep.subr.mxu0 0.0
    %1081 = vmatpush1.msra.mxu0 0.0
    %1082 = vmatprep.subr.mxu0 0.0
    %1083 = vmatpush1.msra.mxu0 0.0
    %1084 = vmatprep.subr.mxu0 0.0
    %1085 = vmatpush1.msra.mxu0 0.0
    %1086 = vmatprep.mubr.f32.mxu0 0.0
    %1087 = vmatmul.mubr.f32.gmra.mrb[0].mxu0 %v1017
    %v1088 = vpop.f32.mrb[0].mxu0
    %v1089 = vadd.f32 %v1014, %v1088
    %v1090 = vpop.f32.mrb[0].mxu0
    %1091 = vmatprep.mubr.f32.mxu0 0.0
    %1092 = vmatmul.mubr.f32.gmra.mrb[0].mxu0 %v1020
    %v1093 = vpop.f32.mrb[0].mxu0
    %v1094 = vadd.f32 %v1014, %v1093
    %v1095 = vpop.f32.mrb[0].mxu0
    %1096 = vdwg.mxu0
    %1097 = vst.msk [vmem:[#allocation2] sm:$0xff] %vm144, %v1089
    %1098 = vst.msk [vmem:[#allocation2 + $0x8] sm:$0xff] %vm144, %v1094
    %v1099 = vld [vmem:[%s6] sm:$0xff]
    %v1100 = vld [vmem:[%s6 + $0x8] sm:$0xff]
    %v1101 = vld [vmem:[%s6 + $0x10] sm:$0xff]
    %v1102 = vld [vmem:[%s6 + $0x18] sm:$0xff]
    %v1103 = vld [vmem:[%s8] sm:$0x1]
    %v1104 = vld [vmem:[#allocation2] sm:$0x3]
    %1105 = vmatprep.subr.mxu0 0.0
    %1106 = vmatpush1.msra.mxu0 %v1099
    %1107 = vmatprep.subr.mxu0 0.0
    %1108 = vmatpush1.msra.mxu0 %v1100
    %1109 = vmatprep.subr.mxu0 0.0
    %1110 = vmatpush1.msra.mxu0 %v1101
    %1111 = vmatprep.subr.mxu0 0.0
    %1112 = vmatpush1.msra.mxu0 %v1102
    %1113 = vmatprep.subr.mxu0 0.0
    %1114 = vmatpush1.msra.mxu0 0.0
    %1115 = vmatprep.subr.mxu0 0.0
    %1116 = vmatpush1.msra.mxu0 0.0
    %1117 = vmatprep.subr.mxu0 0.0
    %1118 = vmatpush1.msra.mxu0 0.0
    %1119 = vmatprep.subr.mxu0 0.0
    %1120 = vmatpush1.msra.mxu0 0.0
    %1121 = vmatprep.subr.mxu0 0.0
    %1122 = vmatpush1.msra.mxu0 0.0
    %1123 = vmatprep.subr.mxu0 0.0
    %1124 = vmatpush1.msra.mxu0 0.0
    %1125 = vmatprep.subr.mxu0 0.0
    %1126 = vmatpush1.msra.mxu0 0.0
    %1127 = vmatprep.subr.mxu0 0.0
    %1128 = vmatpush1.msra.mxu0 0.0
    %1129 = vmatprep.subr.mxu0 0.0
    %1130 = vmatpush1.msra.mxu0 0.0
    %1131 = vmatprep.subr.mxu0 0.0
    %1132 = vmatpush1.msra.mxu0 0.0
    %1133 = vmatprep.subr.mxu0 0.0
    %1134 = vmatpush1.msra.mxu0 0.0
    %1135 = vmatprep.subr.mxu0 0.0
    %1136 = vmatpush1.msra.mxu0 0.0
    %1137 = vmatprep.subr.mxu0 0.0
    %1138 = vmatpush1.msra.mxu0 0.0
    %1139 = vmatprep.subr.mxu0 0.0
    %1140 = vmatpush1.msra.mxu0 0.0
    %1141 = vmatprep.subr.mxu0 0.0
    %1142 = vmatpush1.msra.mxu0 0.0
    %1143 = vmatprep.subr.mxu0 0.0
    %1144 = vmatpush1.msra.mxu0 0.0
    %1145 = vmatprep.subr.mxu0 0.0
    %1146 = vmatpush1.msra.mxu0 0.0
    %1147 = vmatprep.subr.mxu0 0.0
    %1148 = vmatpush1.msra.mxu0 0.0
    %1149 = vmatprep.subr.mxu0 0.0
    %1150 = vmatpush1.msra.mxu0 0.0
    %1151 = vmatprep.subr.mxu0 0.0
    %1152 = vmatpush1.msra.mxu0 0.0
    %1153 = vmatprep.subr.mxu0 0.0
    %1154 = vmatpush1.msra.mxu0 0.0
    %1155 = vmatprep.subr.mxu0 0.0
    %1156 = vmatpush1.msra.mxu0 0.0
    %1157 = vmatprep.subr.mxu0 0.0
    %1158 = vmatpush1.msra.mxu0 0.0
    %1159 = vmatprep.subr.mxu0 0.0
    %1160 = vmatpush1.msra.mxu0 0.0
    %1161 = vmatprep.subr.mxu0 0.0
    %1162 = vmatpush1.msra.mxu0 0.0
    %1163 = vmatprep.subr.mxu0 0.0
    %1164 = vmatpush1.msra.mxu0 0.0
    %1165 = vmatprep.subr.mxu0 0.0
    %1166 = vmatpush1.msra.mxu0 0.0
    %1167 = vmatprep.subr.mxu0 0.0
    %1168 = vmatpush1.msra.mxu0 0.0
    %1169 = vmatprep.mubr.f32.mxu0 0.0
    %1170 = vmatmul.mubr.f32.gmra.mrb[0].mxu0 %v155
    %v1171 = vpop.f32.mrb[0].mxu0
    %v1172 = vadd.f32 0.0, %v1171
    %v1173 = vpop.f32.mrb[0].mxu0
    %1174 = vdwg.mxu0
    %v1175 = vadd.f32 %v1104, %v1172
    %v1176 = vxor.u32 %v1175, 2147483648
    %v1177 = vmul.f32 %v1176, 1.442695
    %v1178 = vpow.pop %v1177
    %v1179 = vadd.f32 %v1178, 1.0
    %v1180 = vrcp.pop %v1179
    %v1181 = vmul.f32 1.0, %v1180
    %v1183 = vlaneseq
    %v1184 = vshrl.u32 %v1183, 7
    %v1185 = vsub.s32 0, %v1184
    %v1186 = vrot.slane %v1103, %v1185
    %1187 = vrot.lane.b32.xlu0 %v1186, 64
    %v1188 = vpop.permute.xlu0 %1187
    %v1190 = vadd.f32 %v1172, %v1188
    %1192 = vrot.lane.b32.xlu0 %v1190, 64
    %v1193 = vpop.permute.xlu0 %1192
    %v1195 = vmul.f32 %v1181, %v1193
    %1197 = vrot.lane.b32.xlu0 %v1195, 64
    %v1198 = vpop.permute.xlu0 %1197
    %v1200 = vadd.f32 %v1104, %v1198
    %v1201 = vtanh.pop %v1200
    %v1202 = vsub.f32 1.0, %v1181
    %1204 = vrot.lane.b32.xlu0 %v1201, 96
    %v1205 = vpop.permute.xlu0 %1204
    %v1207 = vmul.f32 %v1202, %v1205
    %v1208 = vmul.f32 %v1181, 0.0
    %v1209 = vadd.f32 %v1207, %v1208
    %v1210 = vld [vmem:[#allocation2 + $0x2] sm:$0x3]
    %1212 = vrot.lane.b32.xlu0 %v1209, 96
    %v1213 = vpop.permute.xlu0 %1212
    %v1214 = vsel %vm153, %v1213, 0
    %1216 = vmatprep.subr.mxu0 0.0
    %1217 = vmatpush1.msra.mxu0 %v1099
    %1218 = vmatprep.subr.mxu0 0.0
    %1219 = vmatpush1.msra.mxu0 %v1100
    %1220 = vmatprep.subr.mxu0 0.0
    %1221 = vmatpush1.msra.mxu0 %v1101
    %1222 = vmatprep.subr.mxu0 0.0
    %1223 = vmatpush1.msra.mxu0 %v1102
    %1224 = vmatprep.subr.mxu0 0.0
    %1225 = vmatpush1.msra.mxu0 0.0
    %1226 = vmatprep.subr.mxu0 0.0
    %1227 = vmatpush1.msra.mxu0 0.0
    %1228 = vmatprep.subr.mxu0 0.0
    %1229 = vmatpush1.msra.mxu0 0.0
    %1230 = vmatprep.subr.mxu0 0.0
    %1231 = vmatpush1.msra.mxu0 0.0
    %1232 = vmatprep.subr.mxu0 0.0
    %1233 = vmatpush1.msra.mxu0 0.0
    %1234 = vmatprep.subr.mxu0 0.0
    %1235 = vmatpush1.msra.mxu0 0.0
    %1236 = vmatprep.subr.mxu0 0.0
    %1237 = vmatpush1.msra.mxu0 0.0
    %1238 = vmatprep.subr.mxu0 0.0
    %1239 = vmatpush1.msra.mxu0 0.0
    %1240 = vmatprep.subr.mxu0 0.0
    %1241 = vmatpush1.msra.mxu0 0.0
    %1242 = vmatprep.subr.mxu0 0.0
    %1243 = vmatpush1.msra.mxu0 0.0
    %1244 = vmatprep.subr.mxu0 0.0
    %1245 = vmatpush1.msra.mxu0 0.0
    %1246 = vmatprep.subr.mxu0 0.0
    %1247 = vmatpush1.msra.mxu0 0.0
    %1248 = vmatprep.subr.mxu0 0.0
    %1249 = vmatpush1.msra.mxu0 0.0
    %1250 = vmatprep.subr.mxu0 0.0
    %1251 = vmatpush1.msra.mxu0 0.0
    %1252 = vmatprep.subr.mxu0 0.0
    %1253 = vmatpush1.msra.mxu0 0.0
    %1254 = vmatprep.subr.mxu0 0.0
    %1255 = vmatpush1.msra.mxu0 0.0
    %1256 = vmatprep.subr.mxu0 0.0
    %1257 = vmatpush1.msra.mxu0 0.0
    %1258 = vmatprep.subr.mxu0 0.0
    %1259 = vmatpush1.msra.mxu0 0.0
    %1260 = vmatprep.subr.mxu0 0.0
    %1261 = vmatpush1.msra.mxu0 0.0
    %1262 = vmatprep.subr.mxu0 0.0
    %1263 = vmatpush1.msra.mxu0 0.0
    %1264 = vmatprep.subr.mxu0 0.0
    %1265 = vmatpush1.msra.mxu0 0.0
    %1266 = vmatprep.subr.mxu0 0.0
    %1267 = vmatpush1.msra.mxu0 0.0
    %1268 = vmatprep.subr.mxu0 0.0
    %1269 = vmatpush1.msra.mxu0 0.0
    %1270 = vmatprep.subr.mxu0 0.0
    %1271 = vmatpush1.msra.mxu0 0.0
    %1272 = vmatprep.subr.mxu0 0.0
    %1273 = vmatpush1.msra.mxu0 0.0
    %1274 = vmatprep.subr.mxu0 0.0
    %1275 = vmatpush1.msra.mxu0 0.0
    %1276 = vmatprep.subr.mxu0 0.0
    %1277 = vmatpush1.msra.mxu0 0.0
    %1278 = vmatprep.subr.mxu0 0.0
    %1279 = vmatpush1.msra.mxu0 0.0
    %1280 = vmatprep.mubr.f32.mxu0 0.0
    %1281 = vmatmul.mubr.f32.gmra.mrb[0].mxu0 %v1214
    %v1282 = vpop.f32.mrb[0].mxu0
    %v1283 = vadd.f32 0.0, %v1282
    %v1284 = vpop.f32.mrb[0].mxu0
    %1285 = vdwg.mxu0
    %v1286 = vadd.f32 %v1210, %v1283
    %v1287 = vxor.u32 %v1286, 2147483648
    %v1288 = vmul.f32 %v1287, 1.442695
    %v1289 = vpow.pop %v1288
    %v1290 = vadd.f32 %v1289, 1.0
    %v1291 = vrcp.pop %v1290
    %v1292 = vmul.f32 1.0, %v1291
    %v1293 = vadd.f32 %v1283, %v1188
    %1295 = vrot.lane.b32.xlu0 %v1293, 64
    %v1296 = vpop.permute.xlu0 %1295
    %v1298 = vmul.f32 %v1292, %v1296
    %1300 = vrot.lane.b32.xlu0 %v1298, 64
    %v1301 = vpop.permute.xlu0 %1300
    %v1303 = vadd.f32 %v1210, %v1301
    %v1304 = vtanh.pop %v1303
    %v1305 = vsub.f32 1.0, %v1292
    %1307 = vrot.lane.b32.xlu0 %v1304, 96
    %v1308 = vpop.permute.xlu0 %1307
    %v1310 = vmul.f32 %v1305, %v1308
    %v1311 = vmul.f32 %v1292, %v1209
    %v1312 = vadd.f32 %v1310, %v1311
    %v1313 = vld [vmem:[#allocation2 + $0x4] sm:$0x3]
    %1315 = vrot.lane.b32.xlu0 %v1312, 96
    %v1316 = vpop.permute.xlu0 %1315
    %v1317 = vsel %vm153, %v1316, 0
    %1319 = vmatprep.subr.mxu0 0.0
    %1320 = vmatpush1.msra.mxu0 %v1099
    %1321 = vmatprep.subr.mxu0 0.0
    %1322 = vmatpush1.msra.mxu0 %v1100
    %1323 = vmatprep.subr.mxu0 0.0
    %1324 = vmatpush1.msra.mxu0 %v1101
    %1325 = vmatprep.subr.mxu0 0.0
    %1326 = vmatpush1.msra.mxu0 %v1102
    %1327 = vmatprep.subr.mxu0 0.0
    %1328 = vmatpush1.msra.mxu0 0.0
    %1329 = vmatprep.subr.mxu0 0.0
    %1330 = vmatpush1.msra.mxu0 0.0
    %1331 = vmatprep.subr.mxu0 0.0
    %1332 = vmatpush1.msra.mxu0 0.0
    %1333 = vmatprep.subr.mxu0 0.0
    %1334 = vmatpush1.msra.mxu0 0.0
    %1335 = vmatprep.subr.mxu0 0.0
    %1336 = vmatpush1.msra.mxu0 0.0
    %1337 = vmatprep.subr.mxu0 0.0
    %1338 = vmatpush1.msra.mxu0 0.0
    %1339 = vmatprep.subr.mxu0 0.0
    %1340 = vmatpush1.msra.mxu0 0.0
    %1341 = vmatprep.subr.mxu0 0.0
    %1342 = vmatpush1.msra.mxu0 0.0
    %1343 = vmatprep.subr.mxu0 0.0
    %1344 = vmatpush1.msra.mxu0 0.0
    %1345 = vmatprep.subr.mxu0 0.0
    %1346 = vmatpush1.msra.mxu0 0.0
    %1347 = vmatprep.subr.mxu0 0.0
    %1348 = vmatpush1.msra.mxu0 0.0
    %1349 = vmatprep.subr.mxu0 0.0
    %1350 = vmatpush1.msra.mxu0 0.0
    %1351 = vmatprep.subr.mxu0 0.0
    %1352 = vmatpush1.msra.mxu0 0.0
    %1353 = vmatprep.subr.mxu0 0.0
    %1354 = vmatpush1.msra.mxu0 0.0
    %1355 = vmatprep.subr.mxu0 0.0
    %1356 = vmatpush1.msra.mxu0 0.0
    %1357 = vmatprep.subr.mxu0 0.0
    %1358 = vmatpush1.msra.mxu0 0.0
    %1359 = vmatprep.subr.mxu0 0.0
    %1360 = vmatpush1.msra.mxu0 0.0
    %1361 = vmatprep.subr.mxu0 0.0
    %1362 = vmatpush1.msra.mxu0 0.0
    %1363 = vmatprep.subr.mxu0 0.0
    %1364 = vmatpush1.msra.mxu0 0.0
    %1365 = vmatprep.subr.mxu0 0.0
    %1366 = vmatpush1.msra.mxu0 0.0
    %1367 = vmatprep.subr.mxu0 0.0
    %1368 = vmatpush1.msra.mxu0 0.0
    %1369 = vmatprep.subr.mxu0 0.0
    %1370 = vmatpush1.msra.mxu0 0.0
    %1371 = vmatprep.subr.mxu0 0.0
    %1372 = vmatpush1.msra.mxu0 0.0
    %1373 = vmatprep.subr.mxu0 0.0
    %1374 = vmatpush1.msra.mxu0 0.0
    %1375 = vmatprep.subr.mxu0 0.0
    %1376 = vmatpush1.msra.mxu0 0.0
    %1377 = vmatprep.subr.mxu0 0.0
    %1378 = vmatpush1.msra.mxu0 0.0
    %1379 = vmatprep.subr.mxu0 0.0
    %1380 = vmatpush1.msra.mxu0 0.0
    %1381 = vmatprep.subr.mxu0 0.0
    %1382 = vmatpush1.msra.mxu0 0.0
    %1383 = vmatprep.mubr.f32.mxu0 0.0
    %1384 = vmatmul.mubr.f32.gmra.mrb[0].mxu0 %v1317
    %v1385 = vpop.f32.mrb[0].mxu0
    %v1386 = vadd.f32 0.0, %v1385
    %v1387 = vpop.f32.mrb[0].mxu0
    %1388 = vdwg.mxu0
    %v1389 = vadd.f32 %v1313, %v1386
    %v1390 = vxor.u32 %v1389, 2147483648
    %v1391 = vmul.f32 %v1390, 1.442695
    %v1392 = vpow.pop %v1391
    %v1393 = vadd.f32 %v1392, 1.0
    %v1394 = vrcp.pop %v1393
    %v1395 = vmul.f32 1.0, %v1394
    %v1396 = vadd.f32 %v1386, %v1188
    %1398 = vrot.lane.b32.xlu0 %v1396, 64
    %v1399 = vpop.permute.xlu0 %1398
    %v1401 = vmul.f32 %v1395, %v1399
    %1403 = vrot.lane.b32.xlu0 %v1401, 64
    %v1404 = vpop.permute.xlu0 %1403
    %v1406 = vadd.f32 %v1313, %v1404
    %v1407 = vtanh.pop %v1406
    %v1408 = vsub.f32 1.0, %v1395
    %1410 = vrot.lane.b32.xlu0 %v1407, 96
    %v1411 = vpop.permute.xlu0 %1410
    %v1413 = vmul.f32 %v1408, %v1411
    %v1414 = vmul.f32 %v1395, %v1312
    %v1415 = vadd.f32 %v1413, %v1414
    %v1416 = vld [vmem:[#allocation2 + $0x6] sm:$0x3]
    %1418 = vrot.lane.b32.xlu0 %v1415, 96
    %v1419 = vpop.permute.xlu0 %1418
    %v1420 = vsel %vm153, %v1419, 0
    %1422 = vmatprep.subr.mxu0 0.0
    %1423 = vmatpush1.msra.mxu0 %v1099
    %1424 = vmatprep.subr.mxu0 0.0
    %1425 = vmatpush1.msra.mxu0 %v1100
    %1426 = vmatprep.subr.mxu0 0.0
    %1427 = vmatpush1.msra.mxu0 %v1101
    %1428 = vmatprep.subr.mxu0 0.0
    %1429 = vmatpush1.msra.mxu0 %v1102
    %1430 = vmatprep.subr.mxu0 0.0
    %1431 = vmatpush1.msra.mxu0 0.0
    %1432 = vmatprep.subr.mxu0 0.0
    %1433 = vmatpush1.msra.mxu0 0.0
    %1434 = vmatprep.subr.mxu0 0.0
    %1435 = vmatpush1.msra.mxu0 0.0
    %1436 = vmatprep.subr.mxu0 0.0
    %1437 = vmatpush1.msra.mxu0 0.0
    %1438 = vmatprep.subr.mxu0 0.0
    %1439 = vmatpush1.msra.mxu0 0.0
    %1440 = vmatprep.subr.mxu0 0.0
    %1441 = vmatpush1.msra.mxu0 0.0
    %1442 = vmatprep.subr.mxu0 0.0
    %1443 = vmatpush1.msra.mxu0 0.0
    %1444 = vmatprep.subr.mxu0 0.0
    %1445 = vmatpush1.msra.mxu0 0.0
    %1446 = vmatprep.subr.mxu0 0.0
    %1447 = vmatpush1.msra.mxu0 0.0
    %1448 = vmatprep.subr.mxu0 0.0
    %1449 = vmatpush1.msra.mxu0 0.0
    %1450 = vmatprep.subr.mxu0 0.0
    %1451 = vmatpush1.msra.mxu0 0.0
    %1452 = vmatprep.subr.mxu0 0.0
    %1453 = vmatpush1.msra.mxu0 0.0
    %1454 = vmatprep.subr.mxu0 0.0
    %1455 = vmatpush1.msra.mxu0 0.0
    %1456 = vmatprep.subr.mxu0 0.0
    %1457 = vmatpush1.msra.mxu0 0.0
    %1458 = vmatprep.subr.mxu0 0.0
    %1459 = vmatpush1.msra.mxu0 0.0
    %1460 = vmatprep.subr.mxu0 0.0
    %1461 = vmatpush1.msra.mxu0 0.0
    %1462 = vmatprep.subr.mxu0 0.0
    %1463 = vmatpush1.msra.mxu0 0.0
    %1464 = vmatprep.subr.mxu0 0.0
    %1465 = vmatpush1.msra.mxu0 0.0
    %1466 = vmatprep.subr.mxu0 0.0
    %1467 = vmatpush1.msra.mxu0 0.0
    %1468 = vmatprep.subr.mxu0 0.0
    %1469 = vmatpush1.msra.mxu0 0.0
    %1470 = vmatprep.subr.mxu0 0.0
    %1471 = vmatpush1.msra.mxu0 0.0
    %1472 = vmatprep.subr.mxu0 0.0
    %1473 = vmatpush1.msra.mxu0 0.0
    %1474 = vmatprep.subr.mxu0 0.0
    %1475 = vmatpush1.msra.mxu0 0.0
    %1476 = vmatprep.subr.mxu0 0.0
    %1477 = vmatpush1.msra.mxu0 0.0
    %1478 = vmatprep.subr.mxu0 0.0
    %1479 = vmatpush1.msra.mxu0 0.0
    %1480 = vmatprep.subr.mxu0 0.0
    %1481 = vmatpush1.msra.mxu0 0.0
    %1482 = vmatprep.subr.mxu0 0.0
    %1483 = vmatpush1.msra.mxu0 0.0
    %1484 = vmatprep.subr.mxu0 0.0
    %1485 = vmatpush1.msra.mxu0 0.0
    %1486 = vmatprep.mubr.f32.mxu0 0.0
    %1487 = vmatmul.mubr.f32.gmra.mrb[0].mxu0 %v1420
    %v1488 = vpop.f32.mrb[0].mxu0
    %v1489 = vadd.f32 0.0, %v1488
    %v1490 = vpop.f32.mrb[0].mxu0
    %1491 = vdwg.mxu0
    %v1492 = vadd.f32 %v1416, %v1489
    %v1493 = vxor.u32 %v1492, 2147483648
    %v1494 = vmul.f32 %v1493, 1.442695
    %v1495 = vpow.pop %v1494
    %v1496 = vadd.f32 %v1495, 1.0
    %v1497 = vrcp.pop %v1496
    %v1498 = vmul.f32 1.0, %v1497
    %v1499 = vadd.f32 %v1489, %v1188
    %1501 = vrot.lane.b32.xlu0 %v1499, 64
    %v1502 = vpop.permute.xlu0 %1501
    %v1504 = vmul.f32 %v1498, %v1502
    %1506 = vrot.lane.b32.xlu0 %v1504, 64
    %v1507 = vpop.permute.xlu0 %1506
    %v1509 = vadd.f32 %v1416, %v1507
    %v1510 = vtanh.pop %v1509
    %v1511 = vsub.f32 1.0, %v1498
    %1513 = vrot.lane.b32.xlu0 %v1510, 96
    %v1514 = vpop.permute.xlu0 %1513
    %v1516 = vmul.f32 %v1511, %v1514
    %v1517 = vmul.f32 %v1498, %v1415
    %v1518 = vadd.f32 %v1516, %v1517
    %v1519 = vld [vmem:[#allocation2 + $0x8] sm:$0x3]
    %1521 = vrot.lane.b32.xlu0 %v1518, 96
    %v1522 = vpop.permute.xlu0 %1521
    %v1523 = vsel %vm153, %v1522, 0
    %1525 = vmatprep.subr.mxu0 0.0
    %1526 = vmatpush1.msra.mxu0 %v1099
    %1527 = vmatprep.subr.mxu0 0.0
    %1528 = vmatpush1.msra.mxu0 %v1100
    %1529 = vmatprep.subr.mxu0 0.0
    %1530 = vmatpush1.msra.mxu0 %v1101
    %1531 = vmatprep.subr.mxu0 0.0
    %1532 = vmatpush1.msra.mxu0 %v1102
    %1533 = vmatprep.subr.mxu0 0.0
    %1534 = vmatpush1.msra.mxu0 0.0
    %1535 = vmatprep.subr.mxu0 0.0
    %1536 = vmatpush1.msra.mxu0 0.0
    %1537 = vmatprep.subr.mxu0 0.0
    %1538 = vmatpush1.msra.mxu0 0.0
    %1539 = vmatprep.subr.mxu0 0.0
    %1540 = vmatpush1.msra.mxu0 0.0
    %1541 = vmatprep.subr.mxu0 0.0
    %1542 = vmatpush1.msra.mxu0 0.0
    %1543 = vmatprep.subr.mxu0 0.0
    %1544 = vmatpush1.msra.mxu0 0.0
    %1545 = vmatprep.subr.mxu0 0.0
    %1546 = vmatpush1.msra.mxu0 0.0
    %1547 = vmatprep.subr.mxu0 0.0
    %1548 = vmatpush1.msra.mxu0 0.0
    %1549 = vmatprep.subr.mxu0 0.0
    %1550 = vmatpush1.msra.mxu0 0.0
    %1551 = vmatprep.subr.mxu0 0.0
    %1552 = vmatpush1.msra.mxu0 0.0
    %1553 = vmatprep.subr.mxu0 0.0
    %1554 = vmatpush1.msra.mxu0 0.0
    %1555 = vmatprep.subr.mxu0 0.0
    %1556 = vmatpush1.msra.mxu0 0.0
    %1557 = vmatprep.subr.mxu0 0.0
    %1558 = vmatpush1.msra.mxu0 0.0
    %1559 = vmatprep.subr.mxu0 0.0
    %1560 = vmatpush1.msra.mxu0 0.0
    %1561 = vmatprep.subr.mxu0 0.0
    %1562 = vmatpush1.msra.mxu0 0.0
    %1563 = vmatprep.subr.mxu0 0.0
    %1564 = vmatpush1.msra.mxu0 0.0
    %1565 = vmatprep.subr.mxu0 0.0
    %1566 = vmatpush1.msra.mxu0 0.0
    %1567 = vmatprep.subr.mxu0 0.0
    %1568 = vmatpush1.msra.mxu0 0.0
    %1569 = vmatprep.subr.mxu0 0.0
    %1570 = vmatpush1.msra.mxu0 0.0
    %1571 = vmatprep.subr.mxu0 0.0
    %1572 = vmatpush1.msra.mxu0 0.0
    %1573 = vmatprep.subr.mxu0 0.0
    %1574 = vmatpush1.msra.mxu0 0.0
    %1575 = vmatprep.subr.mxu0 0.0
    %1576 = vmatpush1.msra.mxu0 0.0
    %1577 = vmatprep.subr.mxu0 0.0
    %1578 = vmatpush1.msra.mxu0 0.0
    %1579 = vmatprep.subr.mxu0 0.0
    %1580 = vmatpush1.msra.mxu0 0.0
    %1581 = vmatprep.subr.mxu0 0.0
    %1582 = vmatpush1.msra.mxu0 0.0
    %1583 = vmatprep.subr.mxu0 0.0
    %1584 = vmatpush1.msra.mxu0 0.0
    %1585 = vmatprep.subr.mxu0 0.0
    %1586 = vmatpush1.msra.mxu0 0.0
    %1587 = vmatprep.subr.mxu0 0.0
    %1588 = vmatpush1.msra.mxu0 0.0
    %1589 = vmatprep.mubr.f32.mxu0 0.0
    %1590 = vmatmul.mubr.f32.gmra.mrb[0].mxu0 %v1523
    %v1591 = vpop.f32.mrb[0].mxu0
    %v1592 = vadd.f32 0.0, %v1591
    %v1593 = vpop.f32.mrb[0].mxu0
    %1594 = vdwg.mxu0
    %v1595 = vadd.f32 %v1519, %v1592
    %v1596 = vxor.u32 %v1595, 2147483648
    %v1597 = vmul.f32 %v1596, 1.442695
    %v1598 = vpow.pop %v1597
    %v1599 = vadd.f32 %v1598, 1.0
    %v1600 = vrcp.pop %v1599
    %v1601 = vmul.f32 1.0, %v1600
    %v1602 = vadd.f32 %v1592, %v1188
    %1604 = vrot.lane.b32.xlu0 %v1602, 64
    %v1605 = vpop.permute.xlu0 %1604
    %v1607 = vmul.f32 %v1601, %v1605
    %1609 = vrot.lane.b32.xlu0 %v1607, 64
    %v1610 = vpop.permute.xlu0 %1609
    %v1612 = vadd.f32 %v1519, %v1610
    %v1613 = vtanh.pop %v1612
    %v1614 = vsub.f32 1.0, %v1601
    %1616 = vrot.lane.b32.xlu0 %v1613, 96
    %v1617 = vpop.permute.xlu0 %1616
    %v1619 = vmul.f32 %v1614, %v1617
    %v1620 = vmul.f32 %v1601, %v1518
    %v1621 = vadd.f32 %v1619, %v1620
    %v1622 = vld [vmem:[#allocation2 + $0xa] sm:$0x3]
    %1624 = vrot.lane.b32.xlu0 %v1621, 96
    %v1625 = vpop.permute.xlu0 %1624
    %v1626 = vsel %vm153, %v1625, 0
    %1628 = vmatprep.subr.mxu0 0.0
    %1629 = vmatpush1.msra.mxu0 %v1099
    %1630 = vmatprep.subr.mxu0 0.0
    %1631 = vmatpush1.msra.mxu0 %v1100
    %1632 = vmatprep.subr.mxu0 0.0
    %1633 = vmatpush1.msra.mxu0 %v1101
    %1634 = vmatprep.subr.mxu0 0.0
    %1635 = vmatpush1.msra.mxu0 %v1102
    %1636 = vmatprep.subr.mxu0 0.0
    %1637 = vmatpush1.msra.mxu0 0.0
    %1638 = vmatprep.subr.mxu0 0.0
    %1639 = vmatpush1.msra.mxu0 0.0
    %1640 = vmatprep.subr.mxu0 0.0
    %1641 = vmatpush1.msra.mxu0 0.0
    %1642 = vmatprep.subr.mxu0 0.0
    %1643 = vmatpush1.msra.mxu0 0.0
    %1644 = vmatprep.subr.mxu0 0.0
    %1645 = vmatpush1.msra.mxu0 0.0
    %1646 = vmatprep.subr.mxu0 0.0
    %1647 = vmatpush1.msra.mxu0 0.0
    %1648 = vmatprep.subr.mxu0 0.0
    %1649 = vmatpush1.msra.mxu0 0.0
    %1650 = vmatprep.subr.mxu0 0.0
    %1651 = vmatpush1.msra.mxu0 0.0
    %1652 = vmatprep.subr.mxu0 0.0
    %1653 = vmatpush1.msra.mxu0 0.0
    %1654 = vmatprep.subr.mxu0 0.0
    %1655 = vmatpush1.msra.mxu0 0.0
    %1656 = vmatprep.subr.mxu0 0.0
    %1657 = vmatpush1.msra.mxu0 0.0
    %1658 = vmatprep.subr.mxu0 0.0
    %1659 = vmatpush1.msra.mxu0 0.0
    %1660 = vmatprep.subr.mxu0 0.0
    %1661 = vmatpush1.msra.mxu0 0.0
    %1662 = vmatprep.subr.mxu0 0.0
    %1663 = vmatpush1.msra.mxu0 0.0
    %1664 = vmatprep.subr.mxu0 0.0
    %1665 = vmatpush1.msra.mxu0 0.0
    %1666 = vmatprep.subr.mxu0 0.0
    %1667 = vmatpush1.msra.mxu0 0.0
    %1668 = vmatprep.subr.mxu0 0.0
    %1669 = vmatpush1.msra.mxu0 0.0
    %1670 = vmatprep.subr.mxu0 0.0
    %1671 = vmatpush1.msra.mxu0 0.0
    %1672 = vmatprep.subr.mxu0 0.0
    %1673 = vmatpush1.msra.mxu0 0.0
    %1674 = vmatprep.subr.mxu0 0.0
    %1675 = vmatpush1.msra.mxu0 0.0
    %1676 = vmatprep.subr.mxu0 0.0
    %1677 = vmatpush1.msra.mxu0 0.0
    %1678 = vmatprep.subr.mxu0 0.0
    %1679 = vmatpush1.msra.mxu0 0.0
    %1680 = vmatprep.subr.mxu0 0.0
    %1681 = vmatpush1.msra.mxu0 0.0
    %1682 = vmatprep.subr.mxu0 0.0
    %1683 = vmatpush1.msra.mxu0 0.0
    %1684 = vmatprep.subr.mxu0 0.0
    %1685 = vmatpush1.msra.mxu0 0.0
    %1686 = vmatprep.subr.mxu0 0.0
    %1687 = vmatpush1.msra.mxu0 0.0
    %1688 = vmatprep.subr.mxu0 0.0
    %1689 = vmatpush1.msra.mxu0 0.0
    %1690 = vmatprep.subr.mxu0 0.0
    %1691 = vmatpush1.msra.mxu0 0.0
    %1692 = vmatprep.mubr.f32.mxu0 0.0
    %1693 = vmatmul.mubr.f32.gmra.mrb[0].mxu0 %v1626
    %v1694 = vpop.f32.mrb[0].mxu0
    %v1695 = vadd.f32 0.0, %v1694
    %v1696 = vpop.f32.mrb[0].mxu0
    %1697 = vdwg.mxu0
    %v1698 = vadd.f32 %v1622, %v1695
    %v1699 = vxor.u32 %v1698, 2147483648
    %v1700 = vmul.f32 %v1699, 1.442695
    %v1701 = vpow.pop %v1700
    %v1702 = vadd.f32 %v1701, 1.0
    %v1703 = vrcp.pop %v1702
    %v1704 = vmul.f32 1.0, %v1703
    %v1705 = vadd.f32 %v1695, %v1188
    %1707 = vrot.lane.b32.xlu0 %v1705, 64
    %v1708 = vpop.permute.xlu0 %1707
    %v1710 = vmul.f32 %v1704, %v1708
    %1712 = vrot.lane.b32.xlu0 %v1710, 64
    %v1713 = vpop.permute.xlu0 %1712
    %v1715 = vadd.f32 %v1622, %v1713
    %v1716 = vtanh.pop %v1715
    %v1717 = vsub.f32 1.0, %v1704
    %1719 = vrot.lane.b32.xlu0 %v1716, 96
    %v1720 = vpop.permute.xlu0 %1719
    %v1722 = vmul.f32 %v1717, %v1720
    %v1723 = vmul.f32 %v1704, %v1621
    %v1724 = vadd.f32 %v1722, %v1723
    %v1725 = vld [vmem:[#allocation2 + $0xc] sm:$0x3]
    %1727 = vrot.lane.b32.xlu0 %v1724, 96
    %v1728 = vpop.permute.xlu0 %1727
    %v1729 = vsel %vm153, %v1728, 0
    %1731 = vmatprep.subr.mxu0 0.0
    %1732 = vmatpush1.msra.mxu0 %v1099
    %1733 = vmatprep.subr.mxu0 0.0
    %1734 = vmatpush1.msra.mxu0 %v1100
    %1735 = vmatprep.subr.mxu0 0.0
    %1736 = vmatpush1.msra.mxu0 %v1101
    %1737 = vmatprep.subr.mxu0 0.0
    %1738 = vmatpush1.msra.mxu0 %v1102
    %1739 = vmatprep.subr.mxu0 0.0
    %1740 = vmatpush1.msra.mxu0 0.0
    %1741 = vmatprep.subr.mxu0 0.0
    %1742 = vmatpush1.msra.mxu0 0.0
    %1743 = vmatprep.subr.mxu0 0.0
    %1744 = vmatpush1.msra.mxu0 0.0
    %1745 = vmatprep.subr.mxu0 0.0
    %1746 = vmatpush1.msra.mxu0 0.0
    %1747 = vmatprep.subr.mxu0 0.0
    %1748 = vmatpush1.msra.mxu0 0.0
    %1749 = vmatprep.subr.mxu0 0.0
    %1750 = vmatpush1.msra.mxu0 0.0
    %1751 = vmatprep.subr.mxu0 0.0
    %1752 = vmatpush1.msra.mxu0 0.0
    %1753 = vmatprep.subr.mxu0 0.0
    %1754 = vmatpush1.msra.mxu0 0.0
    %1755 = vmatprep.subr.mxu0 0.0
    %1756 = vmatpush1.msra.mxu0 0.0
    %1757 = vmatprep.subr.mxu0 0.0
    %1758 = vmatpush1.msra.mxu0 0.0
    %1759 = vmatprep.subr.mxu0 0.0
    %1760 = vmatpush1.msra.mxu0 0.0
    %1761 = vmatprep.subr.mxu0 0.0
    %1762 = vmatpush1.msra.mxu0 0.0
    %1763 = vmatprep.subr.mxu0 0.0
    %1764 = vmatpush1.msra.mxu0 0.0
    %1765 = vmatprep.subr.mxu0 0.0
    %1766 = vmatpush1.msra.mxu0 0.0
    %1767 = vmatprep.subr.mxu0 0.0
    %1768 = vmatpush1.msra.mxu0 0.0
    %1769 = vmatprep.subr.mxu0 0.0
    %1770 = vmatpush1.msra.mxu0 0.0
    %1771 = vmatprep.subr.mxu0 0.0
    %1772 = vmatpush1.msra.mxu0 0.0
    %1773 = vmatprep.subr.mxu0 0.0
    %1774 = vmatpush1.msra.mxu0 0.0
    %1775 = vmatprep.subr.mxu0 0.0
    %1776 = vmatpush1.msra.mxu0 0.0
    %1777 = vmatprep.subr.mxu0 0.0
    %1778 = vmatpush1.msra.mxu0 0.0
    %1779 = vmatprep.subr.mxu0 0.0
    %1780 = vmatpush1.msra.mxu0 0.0
    %1781 = vmatprep.subr.mxu0 0.0
    %1782 = vmatpush1.msra.mxu0 0.0
    %1783 = vmatprep.subr.mxu0 0.0
    %1784 = vmatpush1.msra.mxu0 0.0
    %1785 = vmatprep.subr.mxu0 0.0
    %1786 = vmatpush1.msra.mxu0 0.0
    %1787 = vmatprep.subr.mxu0 0.0
    %1788 = vmatpush1.msra.mxu0 0.0
    %1789 = vmatprep.subr.mxu0 0.0
    %1790 = vmatpush1.msra.mxu0 0.0
    %1791 = vmatprep.subr.mxu0 0.0
    %1792 = vmatpush1.msra.mxu0 0.0
    %1793 = vmatprep.subr.mxu0 0.0
    %1794 = vmatpush1.msra.mxu0 0.0
    %1795 = vmatprep.mubr.f32.mxu0 0.0
    %1796 = vmatmul.mubr.f32.gmra.mrb[0].mxu0 %v1729
    %v1797 = vpop.f32.mrb[0].mxu0
    %v1798 = vadd.f32 0.0, %v1797
    %v1799 = vpop.f32.mrb[0].mxu0
    %1800 = vdwg.mxu0
    %v1801 = vadd.f32 %v1725, %v1798
    %v1802 = vxor.u32 %v1801, 2147483648
    %v1803 = vmul.f32 %v1802, 1.442695
    %v1804 = vpow.pop %v1803
    %v1805 = vadd.f32 %v1804, 1.0
    %v1806 = vrcp.pop %v1805
    %v1807 = vmul.f32 1.0, %v1806
    %v1808 = vadd.f32 %v1798, %v1188
    %1810 = vrot.lane.b32.xlu0 %v1808, 64
    %v1811 = vpop.permute.xlu0 %1810
    %v1813 = vmul.f32 %v1807, %v1811
    %1815 = vrot.lane.b32.xlu0 %v1813, 64
    %v1816 = vpop.permute.xlu0 %1815
    %v1818 = vadd.f32 %v1725, %v1816
    %v1819 = vtanh.pop %v1818
    %v1820 = vsub.f32 1.0, %v1807
    %1822 = vrot.lane.b32.xlu0 %v1819, 96
    %v1823 = vpop.permute.xlu0 %1822
    %v1825 = vmul.f32 %v1820, %v1823
    %v1826 = vmul.f32 %v1807, %v1724
    %v1827 = vadd.f32 %v1825, %v1826
    %v1828 = vld [vmem:[#allocation2 + $0xe] sm:$0x3]
    %1830 = vrot.lane.b32.xlu0 %v1827, 96
    %v1831 = vpop.permute.xlu0 %1830
    %v1832 = vsel %vm153, %v1831, 0
    %1834 = vmatprep.subr.mxu0 0.0
    %1835 = vmatpush1.msra.mxu0 %v1099
    %1836 = vmatprep.subr.mxu0 0.0
    %1837 = vmatpush1.msra.mxu0 %v1100
    %1838 = vmatprep.subr.mxu0 0.0
    %1839 = vmatpush1.msra.mxu0 %v1101
    %1840 = vmatprep.subr.mxu0 0.0
    %1841 = vmatpush1.msra.mxu0 %v1102
    %1842 = vmatprep.subr.mxu0 0.0
    %1843 = vmatpush1.msra.mxu0 0.0
    %1844 = vmatprep.subr.mxu0 0.0
    %1845 = vmatpush1.msra.mxu0 0.0
    %1846 = vmatprep.subr.mxu0 0.0
    %1847 = vmatpush1.msra.mxu0 0.0
    %1848 = vmatprep.subr.mxu0 0.0
    %1849 = vmatpush1.msra.mxu0 0.0
    %1850 = vmatprep.subr.mxu0 0.0
    %1851 = vmatpush1.msra.mxu0 0.0
    %1852 = vmatprep.subr.mxu0 0.0
    %1853 = vmatpush1.msra.mxu0 0.0
    %1854 = vmatprep.subr.mxu0 0.0
    %1855 = vmatpush1.msra.mxu0 0.0
    %1856 = vmatprep.subr.mxu0 0.0
    %1857 = vmatpush1.msra.mxu0 0.0
    %1858 = vmatprep.subr.mxu0 0.0
    %1859 = vmatpush1.msra.mxu0 0.0
    %1860 = vmatprep.subr.mxu0 0.0
    %1861 = vmatpush1.msra.mxu0 0.0
    %1862 = vmatprep.subr.mxu0 0.0
    %1863 = vmatpush1.msra.mxu0 0.0
    %1864 = vmatprep.subr.mxu0 0.0
    %1865 = vmatpush1.msra.mxu0 0.0
    %1866 = vmatprep.subr.mxu0 0.0
    %1867 = vmatpush1.msra.mxu0 0.0
    %1868 = vmatprep.subr.mxu0 0.0
    %1869 = vmatpush1.msra.mxu0 0.0
    %1870 = vmatprep.subr.mxu0 0.0
    %1871 = vmatpush1.msra.mxu0 0.0
    %1872 = vmatprep.subr.mxu0 0.0
    %1873 = vmatpush1.msra.mxu0 0.0
    %1874 = vmatprep.subr.mxu0 0.0
    %1875 = vmatpush1.msra.mxu0 0.0
    %1876 = vmatprep.subr.mxu0 0.0
    %1877 = vmatpush1.msra.mxu0 0.0
    %1878 = vmatprep.subr.mxu0 0.0
    %1879 = vmatpush1.msra.mxu0 0.0
    %1880 = vmatprep.subr.mxu0 0.0
    %1881 = vmatpush1.msra.mxu0 0.0
    %1882 = vmatprep.subr.mxu0 0.0
    %1883 = vmatpush1.msra.mxu0 0.0
    %1884 = vmatprep.subr.mxu0 0.0
    %1885 = vmatpush1.msra.mxu0 0.0
    %1886 = vmatprep.subr.mxu0 0.0
    %1887 = vmatpush1.msra.mxu0 0.0
    %1888 = vmatprep.subr.mxu0 0.0
    %1889 = vmatpush1.msra.mxu0 0.0
    %1890 = vmatprep.subr.mxu0 0.0
    %1891 = vmatpush1.msra.mxu0 0.0
    %1892 = vmatprep.subr.mxu0 0.0
    %1893 = vmatpush1.msra.mxu0 0.0
    %1894 = vmatprep.subr.mxu0 0.0
    %1895 = vmatpush1.msra.mxu0 0.0
    %1896 = vmatprep.subr.mxu0 0.0
    %1897 = vmatpush1.msra.mxu0 0.0
    %1898 = vmatprep.mubr.f32.mxu0 0.0
    %1899 = vmatmul.mubr.f32.gmra.mrb[0].mxu0 %v1832
    %v1900 = vpop.f32.mrb[0].mxu0
    %v1901 = vadd.f32 0.0, %v1900
    %v1902 = vpop.f32.mrb[0].mxu0
    %1903 = vdwg.mxu0
    %v1904 = vadd.f32 %v1828, %v1901
    %v1905 = vxor.u32 %v1904, 2147483648
    %v1906 = vmul.f32 %v1905, 1.442695
    %v1907 = vpow.pop %v1906
    %v1908 = vadd.f32 %v1907, 1.0
    %v1909 = vrcp.pop %v1908
    %v1910 = vmul.f32 1.0, %v1909
    %v1911 = vadd.f32 %v1901, %v1188
    %1913 = vrot.lane.b32.xlu0 %v1911, 64
    %v1914 = vpop.permute.xlu0 %1913
    %v1916 = vmul.f32 %v1910, %v1914
    %1918 = vrot.lane.b32.xlu0 %v1916, 64
    %v1919 = vpop.permute.xlu0 %1918
    %v1921 = vadd.f32 %v1828, %v1919
    %v1922 = vtanh.pop %v1921
    %v1923 = vsub.f32 1.0, %v1910
    %1925 = vrot.lane.b32.xlu0 %v1922, 96
    %v1926 = vpop.permute.xlu0 %1925
    %v1928 = vmul.f32 %v1923, %v1926
    %v1929 = vmul.f32 %v1910, %v1827
    %v1930 = vadd.f32 %v1928, %v1929
    %v1931 = vld [vmem:[%s9] sm:$0xff]
    %v1932 = vld [vmem:[%s9 + $0x8] sm:$0xff]
    %v1933 = vld [vmem:[%s9 + $0x10] sm:$0xff]
    %v1934 = vld [vmem:[%s9 + $0x18] sm:$0xff]
    %v1935 = vld [vmem:[%s10] sm:$0x1]
    %v1937 = vlaneseq
    %v1938 = vshrl.u32 %v1937, 7
    %v1939 = vsub.s32 0, %v1938
    %v1940 = vrot.slane %v1935, %v1939
    %1943 = vrot.lane.b32.xlu0 %v1930, 96
    %v1944 = vpop.permute.xlu0 %1943
    %v1945 = vsel %vm153, %v1944, 0
    %1947 = vmatprep.subr.mxu0 0.0
    %1948 = vmatpush1.msra.mxu0 %v1931
    %1949 = vmatprep.subr.mxu0 0.0
    %1950 = vmatpush1.msra.mxu0 %v1932
    %1951 = vmatprep.subr.mxu0 0.0
    %1952 = vmatpush1.msra.mxu0 %v1933
    %1953 = vmatprep.subr.mxu0 0.0
    %1954 = vmatpush1.msra.mxu0 %v1934
    %1955 = vmatprep.subr.mxu0 0.0
    %1956 = vmatpush1.msra.mxu0 0.0
    %1957 = vmatprep.subr.mxu0 0.0
    %1958 = vmatpush1.msra.mxu0 0.0
    %1959 = vmatprep.subr.mxu0 0.0
    %1960 = vmatpush1.msra.mxu0 0.0
    %1961 = vmatprep.subr.mxu0 0.0
    %1962 = vmatpush1.msra.mxu0 0.0
    %1963 = vmatprep.subr.mxu0 0.0
    %1964 = vmatpush1.msra.mxu0 0.0
    %1965 = vmatprep.subr.mxu0 0.0
    %1966 = vmatpush1.msra.mxu0 0.0
    %1967 = vmatprep.subr.mxu0 0.0
    %1968 = vmatpush1.msra.mxu0 0.0
    %1969 = vmatprep.subr.mxu0 0.0
    %1970 = vmatpush1.msra.mxu0 0.0
    %1971 = vmatprep.subr.mxu0 0.0
    %1972 = vmatpush1.msra.mxu0 0.0
    %1973 = vmatprep.subr.mxu0 0.0
    %1974 = vmatpush1.msra.mxu0 0.0
    %1975 = vmatprep.subr.mxu0 0.0
    %1976 = vmatpush1.msra.mxu0 0.0
    %1977 = vmatprep.subr.mxu0 0.0
    %1978 = vmatpush1.msra.mxu0 0.0
    %1979 = vmatprep.subr.mxu0 0.0
    %1980 = vmatpush1.msra.mxu0 0.0
    %1981 = vmatprep.subr.mxu0 0.0
    %1982 = vmatpush1.msra.mxu0 0.0
    %1983 = vmatprep.subr.mxu0 0.0
    %1984 = vmatpush1.msra.mxu0 0.0
    %1985 = vmatprep.subr.mxu0 0.0
    %1986 = vmatpush1.msra.mxu0 0.0
    %1987 = vmatprep.subr.mxu0 0.0
    %1988 = vmatpush1.msra.mxu0 0.0
    %1989 = vmatprep.subr.mxu0 0.0
    %1990 = vmatpush1.msra.mxu0 0.0
    %1991 = vmatprep.subr.mxu0 0.0
    %1992 = vmatpush1.msra.mxu0 0.0
    %1993 = vmatprep.subr.mxu0 0.0
    %1994 = vmatpush1.msra.mxu0 0.0
    %1995 = vmatprep.subr.mxu0 0.0
    %1996 = vmatpush1.msra.mxu0 0.0
    %1997 = vmatprep.subr.mxu0 0.0
    %1998 = vmatpush1.msra.mxu0 0.0
    %1999 = vmatprep.subr.mxu0 0.0
    %2000 = vmatpush1.msra.mxu0 0.0
    %2001 = vmatprep.subr.mxu0 0.0
    %2002 = vmatpush1.msra.mxu0 0.0
    %2003 = vmatprep.subr.mxu0 0.0
    %2004 = vmatpush1.msra.mxu0 0.0
    %2005 = vmatprep.subr.mxu0 0.0
    %2006 = vmatpush1.msra.mxu0 0.0
    %2007 = vmatprep.subr.mxu0 0.0
    %2008 = vmatpush1.msra.mxu0 0.0
    %2009 = vmatprep.subr.mxu0 0.0
    %2010 = vmatpush1.msra.mxu0 0.0
    %2011 = vmatprep.mubr.f32.mxu0 0.0
    %2012 = vmatmul.mubr.f32.gmra.mrb[0].mxu0 %v1945
    %v2013 = vpop.f32.mrb[0].mxu0
    %v2014 = vadd.f32 %v1940, %v2013
    %v2015 = vpop.f32.mrb[0].mxu0
    %2016 = vdwg.mxu0
    %v2017 = vmax.f32 %v2014, 0.0
    %v2018 = vld [vmem:[%s11] sm:$0xff]
    %v2019 = vld [vmem:[%s11 + $0x8] sm:$0xff]
    %v2020 = vld [vmem:[%s11 + $0x10] sm:$0xff]
    %v2021 = vld [vmem:[%s11 + $0x18] sm:$0xff]
    %v2022 = vld [vmem:[%s11 + $0x20] sm:$0xff]
    %v2023 = vld [vmem:[%s11 + $0x28] sm:$0xff]
    %v2024 = vld [vmem:[%s11 + $0x30] sm:$0xff]
    %v2025 = vld [vmem:[%s11 + $0x38] sm:$0xff]
    %v2026 = vld [vmem:[%s12] sm:$0x1]
    %v2028 = vlaneseq
    %v2029 = vshrl.u32 %v2028, 7
    %v2030 = vsub.s32 0, %v2029
    %v2031 = vrot.slane %v2026, %v2030
    %vm2033 = vcmask 523264
    %v2035 = vsel %vm2033, %v2017, 0
    %2037 = vmatprep.subr.mxu0 0.0
    %2038 = vmatpush1.msra.mxu0 %v2018
    %2039 = vmatprep.subr.mxu0 0.0
    %2040 = vmatpush1.msra.mxu0 %v2019
    %2041 = vmatprep.subr.mxu0 0.0
    %2042 = vmatpush1.msra.mxu0 %v2020
    %2043 = vmatprep.subr.mxu0 0.0
    %2044 = vmatpush1.msra.mxu0 %v2021
    %2045 = vmatprep.subr.mxu0 0.0
    %2046 = vmatpush1.msra.mxu0 %v2022
    %2047 = vmatprep.subr.mxu0 0.0
    %2048 = vmatpush1.msra.mxu0 %v2023
    %2049 = vmatprep.subr.mxu0 0.0
    %2050 = vmatpush1.msra.mxu0 %v2024
    %2051 = vmatprep.subr.mxu0 0.0
    %2052 = vmatpush1.msra.mxu0 %v2025
    %2053 = vmatprep.subr.mxu0 0.0
    %2054 = vmatpush1.msra.mxu0 0.0
    %2055 = vmatprep.subr.mxu0 0.0
    %2056 = vmatpush1.msra.mxu0 0.0
    %2057 = vmatprep.subr.mxu0 0.0
    %2058 = vmatpush1.msra.mxu0 0.0
    %2059 = vmatprep.subr.mxu0 0.0
    %2060 = vmatpush1.msra.mxu0 0.0
    %2061 = vmatprep.subr.mxu0 0.0
    %2062 = vmatpush1.msra.mxu0 0.0
    %2063 = vmatprep.subr.mxu0 0.0
    %2064 = vmatpush1.msra.mxu0 0.0
    %2065 = vmatprep.subr.mxu0 0.0
    %2066 = vmatpush1.msra.mxu0 0.0
    %2067 = vmatprep.subr.mxu0 0.0
    %2068 = vmatpush1.msra.mxu0 0.0
    %2069 = vmatprep.subr.mxu0 0.0
    %2070 = vmatpush1.msra.mxu0 0.0
    %2071 = vmatprep.subr.mxu0 0.0
    %2072 = vmatpush1.msra.mxu0 0.0
    %2073 = vmatprep.subr.mxu0 0.0
    %2074 = vmatpush1.msra.mxu0 0.0
    %2075 = vmatprep.subr.mxu0 0.0
    %2076 = vmatpush1.msra.mxu0 0.0
    %2077 = vmatprep.subr.mxu0 0.0
    %2078 = vmatpush1.msra.mxu0 0.0
    %2079 = vmatprep.subr.mxu0 0.0
    %2080 = vmatpush1.msra.mxu0 0.0
    %2081 = vmatprep.subr.mxu0 0.0
    %2082 = vmatpush1.msra.mxu0 0.0
    %2083 = vmatprep.subr.mxu0 0.0
    %2084 = vmatpush1.msra.mxu0 0.0
    %2085 = vmatprep.subr.mxu0 0.0
    %2086 = vmatpush1.msra.mxu0 0.0
    %2087 = vmatprep.subr.mxu0 0.0
    %2088 = vmatpush1.msra.mxu0 0.0
    %2089 = vmatprep.subr.mxu0 0.0
    %2090 = vmatpush1.msra.mxu0 0.0
    %2091 = vmatprep.subr.mxu0 0.0
    %2092 = vmatpush1.msra.mxu0 0.0
    %2093 = vmatprep.subr.mxu0 0.0
    %2094 = vmatpush1.msra.mxu0 0.0
    %2095 = vmatprep.subr.mxu0 0.0
    %2096 = vmatpush1.msra.mxu0 0.0
    %2097 = vmatprep.subr.mxu0 0.0
    %2098 = vmatpush1.msra.mxu0 0.0
    %2099 = vmatprep.subr.mxu0 0.0
    %2100 = vmatpush1.msra.mxu0 0.0
    %2101 = vmatprep.mubr.f32.mxu0 0.0
    %2102 = vmatmul.mubr.f32.gmra.mrb[0].mxu0 %v2035
    %v2103 = vpop.f32.mrb[0].mxu0
    %v2104 = vadd.f32 %v2031, %v2103
    %v2105 = vpop.f32.mrb[0].mxu0
    %2106 = vdwg.mxu0
    %v2107 = vmax.f32 %v2104, 0.0
    %v2108 = vld [vmem:[%s13] sm:$0xff]
    %v2109 = vld [vmem:[%s13 + $0x8] sm:$0xff]
    %v2110 = vld [vmem:[%s13 + $0x10] sm:$0xff]
    %v2111 = vld [vmem:[%s13 + $0x18] sm:$0xff]
    %v2112 = vld [vmem:[%s14] sm:$0x1]
    %v2114 = vlaneseq
    %v2115 = vshrl.u32 %v2114, 7
    %v2116 = vsub.s32 0, %v2115
    %v2117 = vrot.slane %v2112, %v2116
    %v2120 = vsel %vm153, %v2107, 0
    %2122 = vmatprep.subr.mxu0 0.0
    %2123 = vmatpush1.msra.mxu0 %v2108
    %2124 = vmatprep.subr.mxu0 0.0
    %2125 = vmatpush1.msra.mxu0 %v2109
    %2126 = vmatprep.subr.mxu0 0.0
    %2127 = vmatpush1.msra.mxu0 %v2110
    %2128 = vmatprep.subr.mxu0 0.0
    %2129 = vmatpush1.msra.mxu0 %v2111
    %2130 = vmatprep.subr.mxu0 0.0
    %2131 = vmatpush1.msra.mxu0 0.0
    %2132 = vmatprep.subr.mxu0 0.0
    %2133 = vmatpush1.msra.mxu0 0.0
    %2134 = vmatprep.subr.mxu0 0.0
    %2135 = vmatpush1.msra.mxu0 0.0
    %2136 = vmatprep.subr.mxu0 0.0
    %2137 = vmatpush1.msra.mxu0 0.0
    %2138 = vmatprep.subr.mxu0 0.0
    %2139 = vmatpush1.msra.mxu0 0.0
    %2140 = vmatprep.subr.mxu0 0.0
    %2141 = vmatpush1.msra.mxu0 0.0
    %2142 = vmatprep.subr.mxu0 0.0
    %2143 = vmatpush1.msra.mxu0 0.0
    %2144 = vmatprep.subr.mxu0 0.0
    %2145 = vmatpush1.msra.mxu0 0.0
    %2146 = vmatprep.subr.mxu0 0.0
    %2147 = vmatpush1.msra.mxu0 0.0
    %2148 = vmatprep.subr.mxu0 0.0
    %2149 = vmatpush1.msra.mxu0 0.0
    %2150 = vmatprep.subr.mxu0 0.0
    %2151 = vmatpush1.msra.mxu0 0.0
    %2152 = vmatprep.subr.mxu0 0.0
    %2153 = vmatpush1.msra.mxu0 0.0
    %2154 = vmatprep.subr.mxu0 0.0
    %2155 = vmatpush1.msra.mxu0 0.0
    %2156 = vmatprep.subr.mxu0 0.0
    %2157 = vmatpush1.msra.mxu0 0.0
    %2158 = vmatprep.subr.mxu0 0.0
    %2159 = vmatpush1.msra.mxu0 0.0
    %2160 = vmatprep.subr.mxu0 0.0
    %2161 = vmatpush1.msra.mxu0 0.0
    %2162 = vmatprep.subr.mxu0 0.0
    %2163 = vmatpush1.msra.mxu0 0.0
    %2164 = vmatprep.subr.mxu0 0.0
    %2165 = vmatpush1.msra.mxu0 0.0
    %2166 = vmatprep.subr.mxu0 0.0
    %2167 = vmatpush1.msra.mxu0 0.0
    %2168 = vmatprep.subr.mxu0 0.0
    %2169 = vmatpush1.msra.mxu0 0.0
    %2170 = vmatprep.subr.mxu0 0.0
    %2171 = vmatpush1.msra.mxu0 0.0
    %2172 = vmatprep.subr.mxu0 0.0
    %2173 = vmatpush1.msra.mxu0 0.0
    %2174 = vmatprep.subr.mxu0 0.0
    %2175 = vmatpush1.msra.mxu0 0.0
    %2176 = vmatprep.subr.mxu0 0.0
    %2177 = vmatpush1.msra.mxu0 0.0
    %2178 = vmatprep.subr.mxu0 0.0
    %2179 = vmatpush1.msra.mxu0 0.0
    %2180 = vmatprep.subr.mxu0 0.0
    %2181 = vmatpush1.msra.mxu0 0.0
    %2182 = vmatprep.subr.mxu0 0.0
    %2183 = vmatpush1.msra.mxu0 0.0
    %2184 = vmatprep.subr.mxu0 0.0
    %2185 = vmatpush1.msra.mxu0 0.0
    %2186 = vmatprep.mubr.f32.mxu0 0.0
    %2187 = vmatmul.mubr.f32.gmra.mrb[0].mxu0 %v2120
    %v2188 = vpop.f32.mrb[0].mxu0
    %v2189 = vadd.f32 %v2117, %v2188
    %v2190 = vpop.f32.mrb[0].mxu0
    %2191 = vdwg.mxu0
    %vm2192 = vcmask 25600
    %2193 = vst.msk [vmem:[#allocation4] sm:$0x3] %vm2192, %v2189
    // Predicated region
    $region62: #{gru_net_forward.1} parent=1 // pred_check
      _
    $region63: #{gru_net_forward.1} parent=1 // pred_check_branch
      %2195 = sbr.rel (0) target = $region65
    $region64: #{gru_net_forward.1} parent=1 // pred_region
      %s2197 = ssub.s32 32, 32
      %2198 = vsyncadd [#allocation5], %s2197
      %s2200 = sshll.u32 [#allocation4], 4
      %s2201 = int_to_ptr.vmem [resolvable:$true] %s2200
      %2203 = dma.vmem_to_hbm [thread:$0]  %s2201, 32, %s15, [#allocation5]
    $region65: #{gru_net_forward.1} parent=1 // pred_fallthru
      _
    // Predicated region
    $region66: #{gru_net_forward.1} parent=1 // pred_check
      _
    $region67: #{gru_net_forward.1} parent=1 // pred_check_branch
      %2205 = sbr.rel (0) target = $region69
    $region68: #{gru_net_forward.1} parent=1 // pred_region
      %2206 = dma.done [#allocation5], 32
    $region69: #{gru_net_forward.1} parent=1 // pred_fallthru
      _
    %2207 = vsyncpa [#allocation5], 1

</llo_original>
